<compile_context>
chip_gen: v7x
topology: tpu7x:2x2x1
jax: 0.10.0
libtpu: 0.0.40
codegen_flags: <defaults>
</compile_context>

<pallas_src>
import functools

import jax
import jax.numpy as jnp
from jax import lax
from jax.experimental import pallas as pl
from jax.experimental.pallas import tpu as pltpu

EPS = 1e-5
LANES = 128


def _round_up(x, m):
    return (x + m - 1) // m * m


def _conv_stats_kernel(x_ref, w_ref, m_ref, y_ref, s_ref, *, kh, kw, wp, tm):
    """Pass 1: shifted-matmul conv + masked per-channel sum / sum-of-squares.

    x_ref: (1, tm + halo, Cin)   overlapping slab of the flattened padded input
    w_ref: (kh*kw, Cin, Cout_p)  flattened, lane-padded conv weights
    m_ref: (1, tm, 1)            1.0 for valid output positions, 0.0 otherwise
    y_ref: (1, tm, Cout_p)       conv output tile (pre-BN)
    s_ref: (1, 2, Cout_p)        per-tile [sum, sum-of-squares] over valid rows
    """
    x = x_ref[0]                                     # (tm + halo, Cin)
    cout_p = y_ref.shape[2]

    acc = jnp.zeros((tm, cout_p), dtype=jnp.float32)
    for di in range(kh):
        for dj in range(kw):
            s = di * wp + dj                          # static shift in flat rows
            acc = acc + jnp.dot(x[s:s + tm, :], w_ref[di * kw + dj],
                                preferred_element_type=jnp.float32)

    y_ref[0] = acc

    m = m_ref[0]                                      # (tm, 1)
    ym = acc * m                                      # masked conv output
    s1 = jnp.sum(ym, axis=0, keepdims=True)           # (1, Cout_p)
    s2 = jnp.sum(ym * acc, axis=0, keepdims=True)      # (1, Cout_p)  (= sum y^2)
    s_ref[0] = jnp.concatenate([s1, s2], axis=0)       # (2, Cout_p)


def _bn_relu_kernel(y_ref, scale_ref, shift_ref, o_ref):
    """Pass 2: folded BatchNorm (y*scale + shift) + ReLU on lane-dense tiles."""
    y = y_ref[0]                                      # (tm, Cout_p)
    o_ref[0] = jnp.maximum(y * scale_ref[...] + shift_ref[...], 0.0)


def conv_block(x_nchw, conv_w, conv_b, gamma, beta, *, padding, block_rows=1024):
    """Fused Conv2d(stride=1) + BatchNorm2d(training batch stats) + ReLU.

    x_nchw: (N, Cin, H, W) f32;  conv_w: (Cout, Cin, kh, kw) f32 (PyTorch layout)
    conv_b, gamma, beta: (Cout,).  Returns (N, Cout, Ho, Wo) with
    Ho = H + 2*padding - kh + 1, Wo = W + 2*padding - kw + 1.
    """
    del conv_b  # exactly cancelled by the BN mean subtraction (same output)
    # TODO(synk): stride != 1 / dilation / groups of nn.Conv2d are not implemented.

    N, Cin, H, W = x_nchw.shape
    Cout, cin2, kh, kw = conv_w.shape
    assert cin2 == Cin
    ph = pw = int(padding)

    Hp, Wp = H + 2 * ph, W + 2 * pw
    Ho, Wo = Hp - kh + 1, Wp - kw + 1
    Cout_p = _round_up(Cout, LANES)
    halo = (kh - 1) * Wp + (kw - 1)

    Mflat = N * Hp * Wp                               # flattened padded positions
    tm = _round_up(min(block_rows, Mflat), 8)
    T = pl.cdiv(Mflat, tm)

    # --- wrapper glue (plain JAX): layout + slab/mask/weight prep -------------
    x_nhwc = jnp.transpose(x_nchw, (0, 2, 3, 1)).astype(jnp.float32)
    xp = jnp.pad(x_nhwc, ((0, 0), (ph, ph), (pw, pw), (0, 0)))
    xf = xp.reshape(Mflat, Cin)
    xf = jnp.pad(xf, ((0, T * tm + halo - Mflat), (0, 0)))

    # Overlapping row slabs: slab t covers flattened rows [t*tm, t*tm + tm + halo).
    if T == 1:
        x_slabs = xf[None]                            # (1, tm + halo, Cin)
    else:
        row_idx = jnp.arange(T)[:, None] * tm + jnp.arange(tm + halo)[None, :]
        x_slabs = jnp.take(xf, row_idx, axis=0)       # (T, tm + halo, Cin)

    # Validity mask over flattened padded output positions.
    g = jnp.arange(T * tm)
    r = g % (Hp * Wp)
    valid = (g < Mflat) & ((r // Wp) < Ho) & ((r % Wp) < Wo)
    mask = valid.astype(jnp.float32).reshape(T, tm, 1)

    # Weights: (Cout, Cin, kh, kw) -> (kh*kw, Cin, Cout_p), lane-padded with 0.
    w = jnp.transpose(conv_w, (2, 3, 1, 0)).reshape(kh * kw, Cin, Cout)
    w = jnp.pad(w.astype(jnp.float32), ((0, 0), (0, 0), (0, Cout_p - Cout)))

    cparams = pltpu.CompilerParams(
        dimension_semantics=("parallel",),
        vmem_limit_bytes=64 * 1024 * 1024,
    )

    # --- pass 1: conv + partial BN stats ---------------------------------------
    kern1 = functools.partial(_conv_stats_kernel, kh=kh, kw=kw, wp=Wp, tm=tm)
    y_conv, stats = pl.pallas_call(
        kern1,
        grid=(T,),
        in_specs=[
            pl.BlockSpec((1, tm + halo, Cin), lambda t: (t, 0, 0)),
            pl.BlockSpec((kh * kw, Cin, Cout_p), lambda t: (0, 0, 0)),
            pl.BlockSpec((1, tm, 1), lambda t: (t, 0, 0)),
        ],
        out_specs=(
            pl.BlockSpec((1, tm, Cout_p), lambda t: (t, 0, 0)),
            pl.BlockSpec((1, 2, Cout_p), lambda t: (t, 0, 0)),
        ),
        out_shape=(
            jax.ShapeDtypeStruct((T, tm, Cout_p), jnp.float32),
            jax.ShapeDtypeStruct((T, 2, Cout_p), jnp.float32),
        ),
        compiler_params=cparams,
    )(x_slabs, w, mask)

    # --- tiny cross-tile reduction + BN fold (scale/shift), plain JAX ----------
    count = float(N * Ho * Wo)
    tot = jnp.sum(stats, axis=0)                      # (2, Cout_p)
    mean = tot[0] / count
    var = jnp.maximum(tot[1] / count - mean * mean, 0.0)
    gamma_p = jnp.pad(gamma.astype(jnp.float32), (0, Cout_p - Cout))
    beta_p = jnp.pad(beta.astype(jnp.float32), (0, Cout_p - Cout))
    scale_v = gamma_p * lax.rsqrt(var + EPS)
    shift_v = beta_p - mean * scale_v
    scale = scale_v.reshape(1, Cout_p)
    shift = shift_v.reshape(1, Cout_p)

    # --- pass 2: normalize + ReLU ----------------------------------------------
    out_flat = pl.pallas_call(
        _bn_relu_kernel,
        grid=(T,),
        in_specs=[
            pl.BlockSpec((1, tm, Cout_p), lambda t: (t, 0, 0)),
            pl.BlockSpec((1, Cout_p), lambda t: (0, 0)),
            pl.BlockSpec((1, Cout_p), lambda t: (0, 0)),
        ],
        out_specs=pl.BlockSpec((1, tm, Cout_p), lambda t: (t, 0, 0)),
        out_shape=jax.ShapeDtypeStruct((T, tm, Cout_p), jnp.float32),
        compiler_params=cparams,
    )(y_conv, scale, shift)

    # Un-flatten: drop padded rows / padded channels / padded spatial borders.
    out = out_flat.reshape(T * tm, Cout_p)[:Mflat].reshape(N, Hp, Wp, Cout_p)
    out = out[:, :Ho, :Wo, :Cout]
    return jnp.transpose(out, (0, 3, 1, 2))


def _reference(x_nchw, conv_w, conv_b, gamma, beta, *, padding):
    """Plain-JAX reference (conv with bias -> BN train -> ReLU)."""
    y = lax.conv_general_dilated(
        x_nchw, conv_w, window_strides=(1, 1),
        padding=[(padding, padding), (padding, padding)],
        dimension_numbers=("NCHW", "OIHW", "NCHW"))
    y = y + conv_b[None, :, None, None]
    mean = jnp.mean(y, axis=(0, 2, 3), keepdims=True)
    var = jnp.mean((y - mean) ** 2, axis=(0, 2, 3), keepdims=True)
    y = (y - mean) * lax.rsqrt(var + EPS)
    y = y * gamma[None, :, None, None] + beta[None, :, None, None]
    return jnp.maximum(y, 0.0)


if __name__ == "__main__":
    # ConvBlock(in_channels=4, out_channels=8, kernel_size=3, padding=1),
    # input (2, 4, 16, 16) NCHW.
    N, Cin, H, W = 2, 4, 16, 16
    Cout, K, PAD = 8, 3, 1

    key = jax.random.PRNGKey(0)
    k_x, k_w, k_b, k_g, k_be = jax.random.split(key, 5)

    x = jax.random.normal(k_x, (N, Cin, H, W), dtype=jnp.float32)
    conv_w = 0.1 * jax.random.normal(k_w, (Cout, Cin, K, K), dtype=jnp.float32)
    conv_b = 0.1 * jax.random.normal(k_b, (Cout,), dtype=jnp.float32)
    gamma = 1.0 + 0.1 * jax.random.normal(k_g, (Cout,), dtype=jnp.float32)
    beta = 0.1 * jax.random.normal(k_be, (Cout,), dtype=jnp.float32)

    # block_rows=256 -> 3 row tiles, exercising the tiled grid + tail masking.
    out = conv_block(x, conv_w, conv_b, gamma, beta, padding=PAD, block_rows=256)
    out = jax.block_until_ready(out)

    ref = _reference(x, conv_w, conv_b, gamma, beta, padding=PAD)
    assert out.shape == (N, Cout, H, W)
    assert jnp.allclose(out, ref, atol=1e-4, rtol=1e-4), "mismatch vs reference"

    print("KERNEL_OK")
</pallas_src>

<mosaic_0001>
module attributes {stable_mosaic.version = 11 : i64} {
  func.func @_conv_stats_kernel(%arg0: i32, %arg1: memref<1x294x4xf32, #tpu.memory_space<vmem>>, %arg2: memref<9x4x128xf32, #tpu.memory_space<vmem>>, %arg3: memref<1x256x1xf32, #tpu.memory_space<vmem>>, %arg4: memref<1x256x128xf32, #tpu.memory_space<vmem>>, %arg5: memref<1x2x128xf32, #tpu.memory_space<vmem>>) attributes {dimension_semantics = [#tpu.dimension_semantics<parallel>], iteration_bounds = array<i64: 3>, scalar_prefetch = 0 : i64, scratch_operands = 0 : i64, tpu.core_type = #tpu.core_type<tc>, window_params = [{transform_indices = @transform_0, window_bounds = array<i64: 1, 294, 4>}, {pipeline_mode = #tpu.pipeline_mode<synchronous>, transform_indices = @transform_1, window_bounds = array<i64: 9, 4, 128>}, {transform_indices = @transform_2, window_bounds = array<i64: 1, 256, 1>}, {transform_indices = @transform_3, window_bounds = array<i64: 1, 256, 128>}, {transform_indices = @transform_4, window_bounds = array<i64: 1, 2, 128>}]} {
    %c0 = arith.constant 0 : index
    %c0_0 = arith.constant 0 : index
    %c0_1 = arith.constant 0 : index
    %0 = vector.load %arg1[%c0, %c0_0, %c0_1] : memref<1x294x4xf32, #tpu.memory_space<vmem>>, vector<1x294x4xf32>
    %1 = vector.shape_cast %0 : vector<1x294x4xf32> to vector<294x4xf32>
    %cst = arith.constant 0.000000e+00 : f32
    %2 = vector.broadcast %cst : f32 to vector<256x128xf32>
    %3 = vector.extract_strided_slice %1 {offsets = [0, 0], sizes = [256, 4], strides = [1, 1]} : vector<294x4xf32> to vector<256x4xf32>
    %c0_2 = arith.constant 0 : index
    %c0_3 = arith.constant 0 : index
    %c0_4 = arith.constant 0 : index
    %4 = vector.load %arg2[%c0_2, %c0_3, %c0_4] : memref<9x4x128xf32, #tpu.memory_space<vmem>>, vector<1x4x128xf32>
    %5 = vector.shape_cast %4 : vector<1x4x128xf32> to vector<4x128xf32>
    %cst_5 = arith.constant dense<0.000000e+00> : vector<256x128xf32>
    %6 = tpu.matmul %3, %5, %cst_5 {dimension_numbers = #tpu.dot_dimension_numbers<[1], [0], [0], [1], [0, 0, 1, 1], [], []>} : vector<256x4xf32>, vector<4x128xf32>, vector<256x128xf32> -> vector<256x128xf32>
    %7 = arith.addf %2, %6 : vector<256x128xf32>
    %8 = vector.extract_strided_slice %1 {offsets = [1, 0], sizes = [256, 4], strides = [1, 1]} : vector<294x4xf32> to vector<256x4xf32>
    %c1 = arith.constant 1 : index
    %c0_6 = arith.constant 0 : index
    %c0_7 = arith.constant 0 : index
    %9 = vector.load %arg2[%c1, %c0_6, %c0_7] : memref<9x4x128xf32, #tpu.memory_space<vmem>>, vector<1x4x128xf32>
    %10 = vector.shape_cast %9 : vector<1x4x128xf32> to vector<4x128xf32>
    %cst_8 = arith.constant dense<0.000000e+00> : vector<256x128xf32>
    %11 = tpu.matmul %8, %10, %cst_8 {dimension_numbers = #tpu.dot_dimension_numbers<[1], [0], [0], [1], [0, 0, 1, 1], [], []>} : vector<256x4xf32>, vector<4x128xf32>, vector<256x128xf32> -> vector<256x128xf32>
    %12 = arith.addf %7, %11 : vector<256x128xf32>
    %13 = vector.extract_strided_slice %1 {offsets = [2, 0], sizes = [256, 4], strides = [1, 1]} : vector<294x4xf32> to vector<256x4xf32>
    %c2 = arith.constant 2 : index
    %c0_9 = arith.constant 0 : index
    %c0_10 = arith.constant 0 : index
    %14 = vector.load %arg2[%c2, %c0_9, %c0_10] : memref<9x4x128xf32, #tpu.memory_space<vmem>>, vector<1x4x128xf32>
    %15 = vector.shape_cast %14 : vector<1x4x128xf32> to vector<4x128xf32>
    %cst_11 = arith.constant dense<0.000000e+00> : vector<256x128xf32>
    %16 = tpu.matmul %13, %15, %cst_11 {dimension_numbers = #tpu.dot_dimension_numbers<[1], [0], [0], [1], [0, 0, 1, 1], [], []>} : vector<256x4xf32>, vector<4x128xf32>, vector<256x128xf32> -> vector<256x128xf32>
    %17 = arith.addf %12, %16 : vector<256x128xf32>
    %18 = vector.extract_strided_slice %1 {offsets = [18, 0], sizes = [256, 4], strides = [1, 1]} : vector<294x4xf32> to vector<256x4xf32>
    %c3 = arith.constant 3 : index
    %c0_12 = arith.constant 0 : index
    %c0_13 = arith.constant 0 : index
    %19 = vector.load %arg2[%c3, %c0_12, %c0_13] : memref<9x4x128xf32, #tpu.memory_space<vmem>>, vector<1x4x128xf32>
    %20 = vector.shape_cast %19 : vector<1x4x128xf32> to vector<4x128xf32>
    %cst_14 = arith.constant dense<0.000000e+00> : vector<256x128xf32>
    %21 = tpu.matmul %18, %20, %cst_14 {dimension_numbers = #tpu.dot_dimension_numbers<[1], [0], [0], [1], [0, 0, 1, 1], [], []>} : vector<256x4xf32>, vector<4x128xf32>, vector<256x128xf32> -> vector<256x128xf32>
    %22 = arith.addf %17, %21 : vector<256x128xf32>
    %23 = vector.extract_strided_slice %1 {offsets = [19, 0], sizes = [256, 4], strides = [1, 1]} : vector<294x4xf32> to vector<256x4xf32>
    %c4 = arith.constant 4 : index
    %c0_15 = arith.constant 0 : index
    %c0_16 = arith.constant 0 : index
    %24 = vector.load %arg2[%c4, %c0_15, %c0_16] : memref<9x4x128xf32, #tpu.memory_space<vmem>>, vector<1x4x128xf32>
    %25 = vector.shape_cast %24 : vector<1x4x128xf32> to vector<4x128xf32>
    %cst_17 = arith.constant dense<0.000000e+00> : vector<256x128xf32>
    %26 = tpu.matmul %23, %25, %cst_17 {dimension_numbers = #tpu.dot_dimension_numbers<[1], [0], [0], [1], [0, 0, 1, 1], [], []>} : vector<256x4xf32>, vector<4x128xf32>, vector<256x128xf32> -> vector<256x128xf32>
    %27 = arith.addf %22, %26 : vector<256x128xf32>
    %28 = vector.extract_strided_slice %1 {offsets = [20, 0], sizes = [256, 4], strides = [1, 1]} : vector<294x4xf32> to vector<256x4xf32>
    %c5 = arith.constant 5 : index
    %c0_18 = arith.constant 0 : index
    %c0_19 = arith.constant 0 : index
    %29 = vector.load %arg2[%c5, %c0_18, %c0_19] : memref<9x4x128xf32, #tpu.memory_space<vmem>>, vector<1x4x128xf32>
    %30 = vector.shape_cast %29 : vector<1x4x128xf32> to vector<4x128xf32>
    %cst_20 = arith.constant dense<0.000000e+00> : vector<256x128xf32>
    %31 = tpu.matmul %28, %30, %cst_20 {dimension_numbers = #tpu.dot_dimension_numbers<[1], [0], [0], [1], [0, 0, 1, 1], [], []>} : vector<256x4xf32>, vector<4x128xf32>, vector<256x128xf32> -> vector<256x128xf32>
    %32 = arith.addf %27, %31 : vector<256x128xf32>
    %33 = vector.extract_strided_slice %1 {offsets = [36, 0], sizes = [256, 4], strides = [1, 1]} : vector<294x4xf32> to vector<256x4xf32>
    %c6 = arith.constant 6 : index
    %c0_21 = arith.constant 0 : index
    %c0_22 = arith.constant 0 : index
    %34 = vector.load %arg2[%c6, %c0_21, %c0_22] : memref<9x4x128xf32, #tpu.memory_space<vmem>>, vector<1x4x128xf32>
    %35 = vector.shape_cast %34 : vector<1x4x128xf32> to vector<4x128xf32>
    %cst_23 = arith.constant dense<0.000000e+00> : vector<256x128xf32>
    %36 = tpu.matmul %33, %35, %cst_23 {dimension_numbers = #tpu.dot_dimension_numbers<[1], [0], [0], [1], [0, 0, 1, 1], [], []>} : vector<256x4xf32>, vector<4x128xf32>, vector<256x128xf32> -> vector<256x128xf32>
    %37 = arith.addf %32, %36 : vector<256x128xf32>
    %38 = vector.extract_strided_slice %1 {offsets = [37, 0], sizes = [256, 4], strides = [1, 1]} : vector<294x4xf32> to vector<256x4xf32>
    %c7 = arith.constant 7 : index
    %c0_24 = arith.constant 0 : index
    %c0_25 = arith.constant 0 : index
    %39 = vector.load %arg2[%c7, %c0_24, %c0_25] : memref<9x4x128xf32, #tpu.memory_space<vmem>>, vector<1x4x128xf32>
    %40 = vector.shape_cast %39 : vector<1x4x128xf32> to vector<4x128xf32>
    %cst_26 = arith.constant dense<0.000000e+00> : vector<256x128xf32>
    %41 = tpu.matmul %38, %40, %cst_26 {dimension_numbers = #tpu.dot_dimension_numbers<[1], [0], [0], [1], [0, 0, 1, 1], [], []>} : vector<256x4xf32>, vector<4x128xf32>, vector<256x128xf32> -> vector<256x128xf32>
    %42 = arith.addf %37, %41 : vector<256x128xf32>
    %43 = vector.extract_strided_slice %1 {offsets = [38, 0], sizes = [256, 4], strides = [1, 1]} : vector<294x4xf32> to vector<256x4xf32>
    %c8 = arith.constant 8 : index
    %c0_27 = arith.constant 0 : index
    %c0_28 = arith.constant 0 : index
    %44 = vector.load %arg2[%c8, %c0_27, %c0_28] : memref<9x4x128xf32, #tpu.memory_space<vmem>>, vector<1x4x128xf32>
    %45 = vector.shape_cast %44 : vector<1x4x128xf32> to vector<4x128xf32>
    %cst_29 = arith.constant dense<0.000000e+00> : vector<256x128xf32>
    %46 = tpu.matmul %43, %45, %cst_29 {dimension_numbers = #tpu.dot_dimension_numbers<[1], [0], [0], [1], [0, 0, 1, 1], [], []>} : vector<256x4xf32>, vector<4x128xf32>, vector<256x128xf32> -> vector<256x128xf32>
    %47 = arith.addf %42, %46 : vector<256x128xf32>
    %c0_30 = arith.constant 0 : index
    %c0_31 = arith.constant 0 : index
    %c0_32 = arith.constant 0 : index
    %48 = vector.load %arg4[%c0_30, %c0_31, %c0_32] : memref<1x256x128xf32, #tpu.memory_space<vmem>>, vector<1x256x128xf32>
    %49 = vector.shape_cast %48 : vector<1x256x128xf32> to vector<256x128xf32>
    %50 = vector.shape_cast %47 : vector<256x128xf32> to vector<1x256x128xf32>
    tpu.vector_store %arg4[%c0_30, %c0_31, %c0_32], %50 {strides = array<i32>} : memref<1x256x128xf32, #tpu.memory_space<vmem>>, vector<1x256x128xf32>,
    %c0_33 = arith.constant 0 : index
    %c0_34 = arith.constant 0 : index
    %c0_35 = arith.constant 0 : index
    %51 = vector.load %arg3[%c0_33, %c0_34, %c0_35] : memref<1x256x1xf32, #tpu.memory_space<vmem>>, vector<1x256x1xf32>
    %52 = vector.shape_cast %51 : vector<1x256x1xf32> to vector<256x1xf32>
    %53 = vector.broadcast %52 : vector<256x1xf32> to vector<256x128xf32>
    %54 = arith.mulf %47, %53 : vector<256x128xf32>
    %cst_36 = arith.constant dense<0.000000e+00> : vector<128xf32>
    %55 = vector.multi_reduction <add>, %54, %cst_36 [0] : vector<256x128xf32> to vector<128xf32>
    %56 = vector.shape_cast %55 : vector<128xf32> to vector<1x128xf32>
    %57 = arith.mulf %54, %47 : vector<256x128xf32>
    %cst_37 = arith.constant dense<0.000000e+00> : vector<128xf32>
    %58 = vector.multi_reduction <add>, %57, %cst_37 [0] : vector<256x128xf32> to vector<128xf32>
    %59 = vector.shape_cast %58 : vector<128xf32> to vector<1x128xf32>
    %60 = tpu.concatenate %56, %59 in 0 : vector<1x128xf32>, vector<1x128xf32> -> vector<2x128xf32>
    %c0_38 = arith.constant 0 : index
    %c0_39 = arith.constant 0 : index
    %c0_40 = arith.constant 0 : index
    %61 = vector.load %arg5[%c0_38, %c0_39, %c0_40] : memref<1x2x128xf32, #tpu.memory_space<vmem>>, vector<1x2x128xf32>
    %62 = vector.shape_cast %61 : vector<1x2x128xf32> to vector<2x128xf32>
    %63 = vector.shape_cast %60 : vector<2x128xf32> to vector<1x2x128xf32>
    tpu.vector_store %arg5[%c0_38, %c0_39, %c0_40], %63 {strides = array<i32>} : memref<1x2x128xf32, #tpu.memory_space<vmem>>, vector<1x2x128xf32>,
    return
  }
  func.func @transform_0(%arg0: i32) -> (i32, i32, i32) {
    %c0_i32 = arith.constant 0 : i32
    %c0_i32_0 = arith.constant 0 : i32
    %c0_i32_1 = arith.constant 0 : i32
    return %arg0, %c0_i32, %c0_i32_0 : i32, i32, i32
  }
  func.func @transform_1(%arg0: i32) -> (i32, i32, i32) {
    %c0_i32 = arith.constant 0 : i32
    %c0_i32_0 = arith.constant 0 : i32
    %c0_i32_1 = arith.constant 0 : i32
    %c0_i32_2 = arith.constant 0 : i32
    return %c0_i32, %c0_i32_0, %c0_i32_1 : i32, i32, i32
  }
  func.func @transform_2(%arg0: i32) -> (i32, i32, i32) {
    %c0_i32 = arith.constant 0 : i32
    %c0_i32_0 = arith.constant 0 : i32
    %c0_i32_1 = arith.constant 0 : i32
    return %arg0, %c0_i32, %c0_i32_0 : i32, i32, i32
  }
  func.func @transform_3(%arg0: i32) -> (i32, i32, i32) {
    %c0_i32 = arith.constant 0 : i32
    %c0_i32_0 = arith.constant 0 : i32
    %c0_i32_1 = arith.constant 0 : i32
    return %arg0, %c0_i32, %c0_i32_0 : i32, i32, i32
  }
  func.func @transform_4(%arg0: i32) -> (i32, i32, i32) {
    %c0_i32 = arith.constant 0 : i32
    %c0_i32_0 = arith.constant 0 : i32
    %c0_i32_1 = arith.constant 0 : i32
    return %arg0, %c0_i32, %c0_i32_0 : i32, i32, i32
  }
}

</mosaic_0001>

<llo_original>
// kernel: tpu_custom_call.1
$region0: #{tpu_custom_call.1}
  #allocation0 [shape = 'u32[]', space=smem, size = 0x4, offset = 0x4, fixed_abs, tag = 'smem constant byte address 0x4 - core index']
  #allocation1 [shape = 'u32[144,128]{1,0:T(1,128)}', space=vmem, size = 0x12000, scoped, tag = 'internal scratch']
  %s0 = inlined_call_operand.hbm [shape: f32[3,294,4], index: 0, kind: input, shape index: {}]
  %s1 = inlined_call_operand.hbm [shape: f32[9,4,128], index: 1, kind: input, shape index: {}]
  %s2 = inlined_call_operand.hbm [shape: f32[3,256,1], index: 2, kind: input, shape index: {}]
  %s3 = inlined_call_operand.hbm [shape: f32[3,256,128], index: 3, kind: output, shape index: {0}]
  %s4 = inlined_call_operand.hbm [shape: f32[3,2,128], index: 4, kind: output, shape index: {1}]
  %5 = xla_tuple %s3, %s4
  %s6 = sld [smem:[#allocation0]]
  $region65: #{tpu_custom_call.1} parent=0
    _
  %s8 = ssub.s32 1, %s6
  %s9 = scalar_select 0, %s8, %s6
  $region1: #{tpu_custom_call.1} parent=0
    #allocation2 [shape = 'u8[303104]{0}', space=vmem, size = 0x4a000, scoped, tag = 'input window, operand 0']
    #allocation3 [shape = 's32[2]{0}', space=sflag, size = 0x8, scoped, tag = 'scoped memory for tpu_custom_call.1']
    #allocation4 [shape = 's32[2]{0}', space=sflag, size = 0x8, scoped, tag = 'scoped memory for tpu_custom_call.1']
    #allocation5 [shape = 'u8[18432]{0}', space=vmem, size = 0x4800, scoped, tag = 'input window, operand 1, single buffered']
    #allocation6 [shape = 's32[1]{0}', space=sflag, size = 0x4, scoped, tag = 'scoped memory for tpu_custom_call.1']
    #allocation7 [shape = 'u8[262144]{0}', space=vmem, size = 0x40000, scoped, tag = 'input window, operand 2']
    #allocation8 [shape = 'u8[262144]{0}', space=vmem, size = 0x40000, scoped, tag = 'output window, operand 0']
    #allocation9 [shape = 'u8[2048]{0}', space=vmem, size = 0x800, scoped, tag = 'output window, operand 1']
    #allocation10 [shape = 's32[2]{0}', space=sflag, size = 0x8, scoped, tag = 'scoped memory for tpu_custom_call.1']
    %10 = vsyncpa [#allocation3], 0
    %s11 = scalar_lea.sflag [#allocation3], 1
    %12 = vsyncpa %s11, 0
    %13 = vsyncpa [#allocation6], 0
    %14 = vsyncpa [#allocation4], 0
    %s15 = scalar_lea.sflag [#allocation4], 1
    %16 = vsyncpa %s15, 0
    %17 = vsyncpa [#allocation10], 0
    %s18 = scalar_lea.sflag [#allocation10], 1
    %19 = vsyncpa %s18, 0
    loop: start=0, step=1, limit=5
    $region2: #{tpu_custom_call.1} parent=1 // loop_pre_header
      _
    $region3: #{tpu_custom_call.1} parent=1 // loop_header
      %s21 = sphi 0, %s25
      %p22 = scmp.ge.s32.totalorder %s21, 5
      %s31 = sphi 0, %s33
      %s34 = sphi 0, %s31
      %s35 = sphi 0, %s34
      %s51 = sphi 0, %s35
      %s55 = sphi 0, %s55
      %s57 = sphi 0, %s55
      %s58 = sphi 0, %s57
      %s72 = sphi 0, %s58
      %s78 = sphi 0, %s80
      %s81 = sphi 0, %s78
      %s82 = sphi 0, %s81
      %s98 = sphi 0, %s82
      %s104 = sphi 0, %s106
      %s107 = sphi 0, %s104
      %s108 = sphi 0, %s107
      %s124 = sphi 0, %s108
      %s130 = sphi 0, %s132
      %s133 = sphi 0, %s130
      %s134 = sphi 0, %s133
      %s150 = sphi 0, %s134
    $region4: #{tpu_custom_call.1} parent=1 // loop_header_branch
      %24 = sbr.rel (%p22) target = $region8
    $region5: #{tpu_custom_call.1} parent=1 // loop_body
      %s26 = ssub.s32 %s21, 1
      %s27 = ssub.s32 %s21, 2
      %s28 = sadd.s32 %s21, 1
      %s29 = ssub.s32 %s21, %s28
      %p30 = scmp.eq.s32.totalorder %s29, 0
      %s32 = sadd.s32 %s31, 1
      %s33 = scalar_select %p30, %s31, %s32
      %p36 = pneg %p30
      %p37 = scmp.eq.s32.totalorder %s21, 2
      %p38 = por %p36, %p37
      %p39 = scmp.ne.s32.totalorder %s31, %s34
      %p40 = scmp.eq.s32.totalorder %s21, 0
      %p41 = por %p39, %p40
      %p42 = scmp.ne.s32.totalorder %s31, %s34
      %p43 = scmp.eq.s32.totalorder %s26, 2
      %p44 = por %p42, %p43
      %p45 = scmp.ne.s32.totalorder %s34, %s35
      %p46 = scmp.eq.s32.totalorder %s26, 0
      %p47 = por %p45, %p46
      %p48 = scmp.ne.s32.totalorder %s34, %s35
      %p49 = scmp.eq.s32.totalorder %s27, 2
      %p50 = por %p48, %p49
      %p52 = scmp.ne.s32.totalorder %s35, %s51
      %p53 = scmp.eq.s32.totalorder %s27, 0
      %p54 = por %p52, %p53
      %s56 = sadd.s32 %s55, 1
      %p59 = scmp.eq.s32.totalorder %s21, 2
      %p60 = scmp.ne.s32.totalorder %s55, %s57
      %p61 = scmp.eq.s32.totalorder %s21, 0
      %p62 = por %p60, %p61
      %p63 = scmp.ne.s32.totalorder %s55, %s57
      %p64 = scmp.eq.s32.totalorder %s26, 2
      %p65 = por %p63, %p64
      %p66 = scmp.ne.s32.totalorder %s57, %s58
      %p67 = scmp.eq.s32.totalorder %s26, 0
      %p68 = por %p66, %p67
      %p69 = scmp.ne.s32.totalorder %s57, %s58
      %p70 = scmp.eq.s32.totalorder %s27, 2
      %p71 = por %p69, %p70
      %p73 = scmp.ne.s32.totalorder %s58, %s72
      %p74 = scmp.eq.s32.totalorder %s27, 0
      %p75 = por %p73, %p74
      %s76 = ssub.s32 %s21, %s28
      %p77 = scmp.eq.s32.totalorder %s76, 0
      %s79 = sadd.s32 %s78, 1
      %s80 = scalar_select %p77, %s78, %s79
      %p83 = pneg %p77
      %p84 = scmp.eq.s32.totalorder %s21, 2
      %p85 = por %p83, %p84
      %p86 = scmp.ne.s32.totalorder %s78, %s81
      %p87 = scmp.eq.s32.totalorder %s21, 0
      %p88 = por %p86, %p87
      %p89 = scmp.ne.s32.totalorder %s78, %s81
      %p90 = scmp.eq.s32.totalorder %s26, 2
      %p91 = por %p89, %p90
      %p92 = scmp.ne.s32.totalorder %s81, %s82
      %p93 = scmp.eq.s32.totalorder %s26, 0
      %p94 = por %p92, %p93
      %p95 = scmp.ne.s32.totalorder %s81, %s82
      %p96 = scmp.eq.s32.totalorder %s27, 2
      %p97 = por %p95, %p96
      %p99 = scmp.ne.s32.totalorder %s82, %s98
      %p100 = scmp.eq.s32.totalorder %s27, 0
      %p101 = por %p99, %p100
      %s102 = ssub.s32 %s21, %s28
      %p103 = scmp.eq.s32.totalorder %s102, 0
      %s105 = sadd.s32 %s104, 1
      %s106 = scalar_select %p103, %s104, %s105
      %p109 = pneg %p103
      %p110 = scmp.eq.s32.totalorder %s21, 2
      %p111 = por %p109, %p110
      %p112 = scmp.ne.s32.totalorder %s104, %s107
      %p113 = scmp.eq.s32.totalorder %s21, 0
      %p114 = por %p112, %p113
      %p115 = scmp.ne.s32.totalorder %s104, %s107
      %p116 = scmp.eq.s32.totalorder %s26, 2
      %p117 = por %p115, %p116
      %p118 = scmp.ne.s32.totalorder %s107, %s108
      %p119 = scmp.eq.s32.totalorder %s26, 0
      %p120 = por %p118, %p119
      %p121 = scmp.ne.s32.totalorder %s107, %s108
      %p122 = scmp.eq.s32.totalorder %s27, 2
      %p123 = por %p121, %p122
      %p125 = scmp.ne.s32.totalorder %s108, %s124
      %p126 = scmp.eq.s32.totalorder %s27, 0
      %p127 = por %p125, %p126
      %s128 = ssub.s32 %s21, %s28
      %p129 = scmp.eq.s32.totalorder %s128, 0
      %s131 = sadd.s32 %s130, 1
      %s132 = scalar_select %p129, %s130, %s131
      %p135 = pneg %p129
      %p136 = scmp.eq.s32.totalorder %s21, 2
      %p137 = por %p135, %p136
      %p138 = scmp.ne.s32.totalorder %s130, %s133
      %p139 = scmp.eq.s32.totalorder %s21, 0
      %p140 = por %p138, %p139
      %p141 = scmp.ne.s32.totalorder %s130, %s133
      %p142 = scmp.eq.s32.totalorder %s26, 2
      %p143 = por %p141, %p142
      %p144 = scmp.ne.s32.totalorder %s133, %s134
      %p145 = scmp.eq.s32.totalorder %s26, 0
      %p146 = por %p144, %p145
      %p147 = scmp.ne.s32.totalorder %s133, %s134
      %p148 = scmp.eq.s32.totalorder %s27, 2
      %p149 = por %p147, %p148
      %p151 = scmp.ne.s32.totalorder %s134, %s150
      %p152 = scmp.eq.s32.totalorder %s27, 0
      %p153 = por %p151, %p152
      %p154 = scmp.le.s32.totalorder 1, %s21
      %p155 = scmp.lt.s32.totalorder %s21, 4
      %p156 = pnand %p154, %p155
      %p157 = pneg %p156
      // Predicated region
      $region9: #{tpu_custom_call.1} parent=5 // pred_check
        _
      $region10: #{tpu_custom_call.1} parent=5 // pred_check_branch
        %159 = sbr.rel (%p156) target = $region12
      $region11: #{tpu_custom_call.1} parent=5 // pred_region
        %s160 = ssub.s32 %s21, 1
        // Predicated region
        $region13: #{tpu_custom_call.1} parent=11 // pred_check
          %p161 = pneg %p68
        $region14: #{tpu_custom_call.1} parent=11 // pred_check_branch
          %163 = sbr.rel (%p161) target = $region16
        $region15: #{tpu_custom_call.1} parent=11 // pred_region
          %s165 = ssub.s32 576, 576
          %166 = vsyncadd [#allocation6], %s165
          %s167 = sshll.u32 [#allocation5], 4
          %s168 = int_to_ptr.vmem [resolvable:$true] %s167
          %173 = dma.hbm_to_vmem [thread:$0]  %s1, 576, %s168, [#allocation6], 64, 64, 4
        $region16: #{tpu_custom_call.1} parent=11 // pred_fallthru
          _
      $region12: #{tpu_custom_call.1} parent=5 // pred_fallthru
        _
      %p174 = scmp.lt.s32.totalorder %s21, 3
      // Predicated region
      $region17: #{tpu_custom_call.1} parent=5 // pred_check
        %p175 = pneg %p174
      $region18: #{tpu_custom_call.1} parent=5 // pred_check_branch
        %177 = sbr.rel (%p175) target = $region20
      $region19: #{tpu_custom_call.1} parent=5 // pred_region
        // Predicated region
        $region21: #{tpu_custom_call.1} parent=19 // pred_check
          %p178 = pneg %p41
        $region22: #{tpu_custom_call.1} parent=19 // pred_check_branch
          %180 = sbr.rel (%p178) target = $region24
        $region23: #{tpu_custom_call.1} parent=19 // pred_region
          %s181 = sand.u32 %s21, 1
          %s182 = scalar_lea.sflag [#allocation3], %s181
          %s183 = sand.u32 %s31, 1
          %s184 = smul.addr %s183, 296
          %s185 = scalar_lea.vmem [#allocation2], %s184
          %s187 = ssub.s32 4736, 4736
          %188 = vsyncadd %s182, %s187
          %s189 = smul.addr %s21, 37
          %s190 = smul.addr %s189, 128
          %s191 = scalar_lea.hbm %s0, %s190
          %s192 = sshll.u32 %s185, 4
          %s193 = int_to_ptr.vmem [resolvable:$true] %s192
          %198 = dma.hbm_to_vmem [thread:$0]  %s191, 4736, %s193, %s182, 128, 128, 8
        $region24: #{tpu_custom_call.1} parent=19 // pred_fallthru
          _
        // Predicated region
        $region25: #{tpu_custom_call.1} parent=19 // pred_check
          %p199 = pneg %p88
        $region26: #{tpu_custom_call.1} parent=19 // pred_check_branch
          %201 = sbr.rel (%p199) target = $region28
        $region27: #{tpu_custom_call.1} parent=19 // pred_region
          %s202 = sand.u32 %s21, 1
          %s203 = scalar_lea.sflag [#allocation3], %s202
          %s204 = sand.u32 %s78, 1
          %s205 = smul.addr %s204, 256
          %s206 = scalar_lea.vmem [#allocation7], %s205
          %s208 = ssub.s32 4096, 4096
          %209 = vsyncadd %s203, %s208
          %s210 = smul.addr %s21, 32
          %s211 = smul.addr %s210, 128
          %s212 = scalar_lea.hbm %s2, %s211
          %s213 = sshll.u32 %s206, 4
          %s214 = int_to_ptr.vmem [resolvable:$true] %s213
          %219 = dma.hbm_to_vmem [thread:$0]  %s212, 4096, %s214, %s203, 128, 128, 8
        $region28: #{tpu_custom_call.1} parent=19 // pred_fallthru
          _
      $region20: #{tpu_custom_call.1} parent=5 // pred_fallthru
        _
      %p220 = scmp.le.s32.totalorder 1, %s21
      %p221 = scmp.lt.s32.totalorder %s21, 4
      %p222 = pnand %p220, %p221
      %p223 = pneg %p222
      // Predicated region
      $region29: #{tpu_custom_call.1} parent=5 // pred_check
        _
      $region30: #{tpu_custom_call.1} parent=5 // pred_check_branch
        %225 = sbr.rel (%p222) target = $region32
      $region31: #{tpu_custom_call.1} parent=5 // pred_region
        %s226 = ssub.s32 %s21, 1
        %s227 = sand.u32 %s26, 1
        %s228 = scalar_lea.sflag [#allocation3], %s227
        %s229 = sand.u32 %s34, 1
        %s230 = smul.addr %s229, 296
        %s231 = scalar_lea.vmem [#allocation2], %s230
        // Predicated region
        $region33: #{tpu_custom_call.1} parent=31 // pred_check
          %p232 = pneg %p47
        $region34: #{tpu_custom_call.1} parent=31 // pred_check_branch
          %234 = sbr.rel (%p232) target = $region36
        $region35: #{tpu_custom_call.1} parent=31 // pred_region
          %235 = dma.done %s228, 4736
        $region36: #{tpu_custom_call.1} parent=31 // pred_fallthru
          _
        // Predicated region
        $region37: #{tpu_custom_call.1} parent=31 // pred_check
          %p236 = pneg %p68
        $region38: #{tpu_custom_call.1} parent=31 // pred_check_branch
          %238 = sbr.rel (%p236) target = $region40
        $region39: #{tpu_custom_call.1} parent=31 // pred_region
          %239 = dma.done [#allocation6], 576
        $region40: #{tpu_custom_call.1} parent=31 // pred_fallthru
          _
        %s240 = sand.u32 %s26, 1
        %s241 = scalar_lea.sflag [#allocation3], %s240
        %s242 = sand.u32 %s81, 1
        %s243 = smul.addr %s242, 256
        %s244 = scalar_lea.vmem [#allocation7], %s243
        // Predicated region
        $region41: #{tpu_custom_call.1} parent=31 // pred_check
          %p245 = pneg %p94
        $region42: #{tpu_custom_call.1} parent=31 // pred_check_branch
          %247 = sbr.rel (%p245) target = $region44
        $region43: #{tpu_custom_call.1} parent=31 // pred_region
          %248 = dma.done %s241, 4096
        $region44: #{tpu_custom_call.1} parent=31 // pred_fallthru
          _
        %s249 = sand.u32 %s26, 1
        %s250 = scalar_lea.sflag [#allocation3], %s249
        %s251 = sand.u32 %s34, 1
        %s252 = smul.addr %s251, 296
        %s253 = scalar_lea.vmem [#allocation2], %s252
        %p254 = pneg %p47
        %p255 = pneg %p44
        %p256 = pneg %p68
        %p257 = pneg %p65
        %s258 = sand.u32 %s26, 1
        %s259 = scalar_lea.sflag [#allocation3], %s258
        %s260 = sand.u32 %s81, 1
        %s261 = smul.addr %s260, 256
        %s262 = scalar_lea.vmem [#allocation7], %s261
        %p263 = pneg %p94
        %p264 = pneg %p91
        %p265 = pneg %p120
        %p266 = pneg %p117
        %s267 = sand.u32 %s107, 1
        %s268 = scalar_lea.sflag [#allocation4], %s267
        %s269 = sand.u32 %s107, 1
        %s270 = smul.addr %s269, 256
        %s271 = scalar_lea.vmem [#allocation8], %s270
        %p272 = pneg %p146
        %p273 = pneg %p143
        %s274 = sand.u32 %s133, 1
        %s275 = scalar_lea.sflag [#allocation10], %s274
        %s276 = sand.u32 %s133, 1
        %s277 = smul.addr %s276, 2
        %s278 = scalar_lea.vmem [#allocation9], %s277
        %v279 = vld [vmem:[%s231] sm:$0xff]
        %v280 = vld [vmem:[%s231 + $0x8] sm:$0xff]
        %v281 = vld [vmem:[%s231 + $0x10] sm:$0xff]
        %v282 = vld [vmem:[%s231 + $0x18] sm:$0xff]
        %v283 = vld [vmem:[%s231 + $0x20] sm:$0xff]
        %v284 = vld [vmem:[%s231 + $0x28] sm:$0xff]
        %v285 = vld [vmem:[%s231 + $0x30] sm:$0xff]
        %v286 = vld [vmem:[%s231 + $0x38] sm:$0xff]
        %v287 = vld [vmem:[%s231 + $0x40] sm:$0xff]
        %v288 = vld [vmem:[%s231 + $0x48] sm:$0xff]
        %v289 = vld [vmem:[%s231 + $0x50] sm:$0xff]
        %v290 = vld [vmem:[%s231 + $0x58] sm:$0xff]
        %v291 = vld [vmem:[%s231 + $0x60] sm:$0xff]
        %v292 = vld [vmem:[%s231 + $0x68] sm:$0xff]
        %v293 = vld [vmem:[%s231 + $0x70] sm:$0xff]
        %v294 = vld [vmem:[%s231 + $0x78] sm:$0xff]
        %v295 = vld [vmem:[%s231 + $0x80] sm:$0xff]
        %v296 = vld [vmem:[%s231 + $0x88] sm:$0xff]
        %v297 = vld [vmem:[%s231 + $0x90] sm:$0xff]
        %v298 = vld [vmem:[%s231 + $0x98] sm:$0xff]
        %v299 = vld [vmem:[%s231 + $0xa0] sm:$0xff]
        %v300 = vld [vmem:[%s231 + $0xa8] sm:$0xff]
        %v301 = vld [vmem:[%s231 + $0xb0] sm:$0xff]
        %v302 = vld [vmem:[%s231 + $0xb8] sm:$0xff]
        %v303 = vld [vmem:[%s231 + $0xc0] sm:$0xff]
        %v304 = vld [vmem:[%s231 + $0xc8] sm:$0xff]
        %v305 = vld [vmem:[%s231 + $0xd0] sm:$0xff]
        %v306 = vld [vmem:[%s231 + $0xd8] sm:$0xff]
        %v307 = vld [vmem:[%s231 + $0xe0] sm:$0xff]
        %v308 = vld [vmem:[%s231 + $0xe8] sm:$0xff]
        %v309 = vld [vmem:[%s231 + $0xf0] sm:$0xff]
        %v310 = vld [vmem:[%s231 + $0xf8] sm:$0xff]
        %v311 = vld [vmem:[%s231 + $0x100] sm:$0xff]
        %v312 = vld [vmem:[%s231 + $0x108] sm:$0xff]
        %v313 = vld [vmem:[%s231 + $0x110] sm:$0xff]
        %v314 = vld [vmem:[%s231 + $0x118] sm:$0xff]
        %v315 = vld [vmem:[%s231 + $0x120] sm:$0x3f]
        %v316 = vld [vmem:[#allocation5] sm:$0xf]
        %s317 = scalar_lea.vmem [#allocation5], 4
        %v318 = vld [vmem:[%s317] sm:$0xf]
        %vm352 = vcmask 1046528
        %v353 = vrot.slane %v279, 1
        %v354 = vrot.slane %v280, 1
        %v355 = vsel %vm352, %v353, %v354
        %v356 = vrot.slane %v281, 1
        %v357 = vsel %vm352, %v354, %v356
        %v358 = vrot.slane %v282, 1
        %v359 = vsel %vm352, %v356, %v358
        %v360 = vrot.slane %v283, 1
        %v361 = vsel %vm352, %v358, %v360
        %v362 = vrot.slane %v284, 1
        %v363 = vsel %vm352, %v360, %v362
        %v364 = vrot.slane %v285, 1
        %v365 = vsel %vm352, %v362, %v364
        %v366 = vrot.slane %v286, 1
        %v367 = vsel %vm352, %v364, %v366
        %v368 = vrot.slane %v287, 1
        %v369 = vsel %vm352, %v366, %v368
        %v370 = vrot.slane %v288, 1
        %v371 = vsel %vm352, %v368, %v370
        %v372 = vrot.slane %v289, 1
        %v373 = vsel %vm352, %v370, %v372
        %v374 = vrot.slane %v290, 1
        %v375 = vsel %vm352, %v372, %v374
        %v376 = vrot.slane %v291, 1
        %v377 = vsel %vm352, %v374, %v376
        %v378 = vrot.slane %v292, 1
        %v379 = vsel %vm352, %v376, %v378
        %v380 = vrot.slane %v293, 1
        %v381 = vsel %vm352, %v378, %v380
        %v382 = vrot.slane %v294, 1
        %v383 = vsel %vm352, %v380, %v382
        %v384 = vrot.slane %v295, 1
        %v385 = vsel %vm352, %v382, %v384
        %v386 = vrot.slane %v296, 1
        %v387 = vsel %vm352, %v384, %v386
        %v388 = vrot.slane %v297, 1
        %v389 = vsel %vm352, %v386, %v388
        %v390 = vrot.slane %v298, 1
        %v391 = vsel %vm352, %v388, %v390
        %v392 = vrot.slane %v299, 1
        %v393 = vsel %vm352, %v390, %v392
        %v394 = vrot.slane %v300, 1
        %v395 = vsel %vm352, %v392, %v394
        %v396 = vrot.slane %v301, 1
        %v397 = vsel %vm352, %v394, %v396
        %v398 = vrot.slane %v302, 1
        %v399 = vsel %vm352, %v396, %v398
        %v400 = vrot.slane %v303, 1
        %v401 = vsel %vm352, %v398, %v400
        %v402 = vrot.slane %v304, 1
        %v403 = vsel %vm352, %v400, %v402
        %v404 = vrot.slane %v305, 1
        %v405 = vsel %vm352, %v402, %v404
        %v406 = vrot.slane %v306, 1
        %v407 = vsel %vm352, %v404, %v406
        %v408 = vrot.slane %v307, 1
        %v409 = vsel %vm352, %v406, %v408
        %v410 = vrot.slane %v308, 1
        %v411 = vsel %vm352, %v408, %v410
        %v412 = vrot.slane %v309, 1
        %v413 = vsel %vm352, %v410, %v412
        %v414 = vrot.slane %v310, 1
        %v415 = vsel %vm352, %v412, %v414
        %v416 = vrot.slane %v311, 1
        %v417 = vsel %vm352, %v414, %v416
        %vm418 = vcmask 31744
        %v419 = vsel %vm418, %v355, 0
        %v421 = vsel %vm418, %v357, 0
        %v423 = vsel %vm418, %v359, 0
        %v425 = vsel %vm418, %v361, 0
        %v427 = vsel %vm418, %v363, 0
        %v429 = vsel %vm418, %v365, 0
        %v431 = vsel %vm418, %v367, 0
        %v433 = vsel %vm418, %v369, 0
        %v435 = vsel %vm418, %v371, 0
        %v437 = vsel %vm418, %v373, 0
        %v439 = vsel %vm418, %v375, 0
        %v441 = vsel %vm418, %v377, 0
        %v443 = vsel %vm418, %v379, 0
        %v445 = vsel %vm418, %v381, 0
        %v447 = vsel %vm418, %v383, 0
        %v449 = vsel %vm418, %v385, 0
        %v451 = vsel %vm418, %v387, 0
        %v453 = vsel %vm418, %v389, 0
        %v455 = vsel %vm418, %v391, 0
        %v457 = vsel %vm418, %v393, 0
        %v459 = vsel %vm418, %v395, 0
        %v461 = vsel %vm418, %v397, 0
        %v463 = vsel %vm418, %v399, 0
        %v465 = vsel %vm418, %v401, 0
        %v467 = vsel %vm418, %v403, 0
        %v469 = vsel %vm418, %v405, 0
        %v471 = vsel %vm418, %v407, 0
        %v473 = vsel %vm418, %v409, 0
        %v475 = vsel %vm418, %v411, 0
        %v477 = vsel %vm418, %v413, 0
        %v479 = vsel %vm418, %v415, 0
        %v481 = vsel %vm418, %v417, 0
        %vm483 = vcmask 1043456
        %v485 = vsel %vm483, %v318, 0
        %487 = vmatprep.subr.mxu0 0.0
        %488 = vmatpush1.msra.mxu0 %v485
        %489 = vmatprep.subr.mxu0 0.0
        %490 = vmatpush1.msra.mxu0 0.0
        %491 = vmatprep.subr.mxu0 0.0
        %492 = vmatpush1.msra.mxu0 0.0
        %493 = vmatprep.subr.mxu0 0.0
        %494 = vmatpush1.msra.mxu0 0.0
        %495 = vmatprep.subr.mxu0 0.0
        %496 = vmatpush1.msra.mxu0 0.0
        %497 = vmatprep.subr.mxu0 0.0
        %498 = vmatpush1.msra.mxu0 0.0
        %499 = vmatprep.subr.mxu0 0.0
        %500 = vmatpush1.msra.mxu0 0.0
        %501 = vmatprep.subr.mxu0 0.0
        %502 = vmatpush1.msra.mxu0 0.0
        %503 = vmatprep.subr.mxu0 0.0
        %504 = vmatpush1.msra.mxu0 0.0
        %505 = vmatprep.subr.mxu0 0.0
        %506 = vmatpush1.msra.mxu0 0.0
        %507 = vmatprep.subr.mxu0 0.0
        %508 = vmatpush1.msra.mxu0 0.0
        %509 = vmatprep.subr.mxu0 0.0
        %510 = vmatpush1.msra.mxu0 0.0
        %511 = vmatprep.subr.mxu0 0.0
        %512 = vmatpush1.msra.mxu0 0.0
        %513 = vmatprep.subr.mxu0 0.0
        %514 = vmatpush1.msra.mxu0 0.0
        %515 = vmatprep.subr.mxu0 0.0
        %516 = vmatpush1.msra.mxu0 0.0
        %517 = vmatprep.subr.mxu0 0.0
        %518 = vmatpush1.msra.mxu0 0.0
        %519 = vmatprep.subr.mxu0 0.0
        %520 = vmatpush1.msra.mxu0 0.0
        %521 = vmatprep.subr.mxu0 0.0
        %522 = vmatpush1.msra.mxu0 0.0
        %523 = vmatprep.subr.mxu0 0.0
        %524 = vmatpush1.msra.mxu0 0.0
        %525 = vmatprep.subr.mxu0 0.0
        %526 = vmatpush1.msra.mxu0 0.0
        %527 = vmatprep.subr.mxu0 0.0
        %528 = vmatpush1.msra.mxu0 0.0
        %529 = vmatprep.subr.mxu0 0.0
        %530 = vmatpush1.msra.mxu0 0.0
        %531 = vmatprep.subr.mxu0 0.0
        %532 = vmatpush1.msra.mxu0 0.0
        %533 = vmatprep.subr.mxu0 0.0
        %534 = vmatpush1.msra.mxu0 0.0
        %535 = vmatprep.subr.mxu0 0.0
        %536 = vmatpush1.msra.mxu0 0.0
        %537 = vmatprep.subr.mxu0 0.0
        %538 = vmatpush1.msra.mxu0 0.0
        %539 = vmatprep.subr.mxu0 0.0
        %540 = vmatpush1.msra.mxu0 0.0
        %541 = vmatprep.subr.mxu0 0.0
        %542 = vmatpush1.msra.mxu0 0.0
        %543 = vmatprep.subr.mxu0 0.0
        %544 = vmatpush1.msra.mxu0 0.0
        %545 = vmatprep.subr.mxu0 0.0
        %546 = vmatpush1.msra.mxu0 0.0
        %547 = vmatprep.subr.mxu0 0.0
        %548 = vmatpush1.msra.mxu0 0.0
        %549 = vmatprep.subr.mxu0 0.0
        %550 = vmatpush1.msra.mxu0 0.0
        %551 = vmatprep.mubr.f32.mxu0 0.0
        %552 = vmatmul.mubr.f32.gmra.mrb[0].mxu0 %v419
        %v553 = vpop.f32.mrb[0].mxu0
        %v554 = vadd.f32 0.0, %v553
        %v555 = vpop.f32.mrb[0].mxu0
        %556 = vmatprep.mubr.f32.mxu0 0.0
        %557 = vmatmul.mubr.f32.gmra.mrb[0].mxu0 %v421
        %v558 = vpop.f32.mrb[0].mxu0
        %v559 = vadd.f32 0.0, %v558
        %v560 = vpop.f32.mrb[0].mxu0
        %561 = vmatprep.mubr.f32.mxu0 0.0
        %562 = vmatmul.mubr.f32.gmra.mrb[0].mxu0 %v423
        %v563 = vpop.f32.mrb[0].mxu0
        %v564 = vadd.f32 0.0, %v563
        %v565 = vpop.f32.mrb[0].mxu0
        %566 = vmatprep.mubr.f32.mxu0 0.0
        %567 = vmatmul.mubr.f32.gmra.mrb[0].mxu0 %v425
        %v568 = vpop.f32.mrb[0].mxu0
        %v569 = vadd.f32 0.0, %v568
        %v570 = vpop.f32.mrb[0].mxu0
        %571 = vmatprep.mubr.f32.mxu0 0.0
        %572 = vmatmul.mubr.f32.gmra.mrb[0].mxu0 %v427
        %v573 = vpop.f32.mrb[0].mxu0
        %v574 = vadd.f32 0.0, %v573
        %v575 = vpop.f32.mrb[0].mxu0
        %576 = vmatprep.mubr.f32.mxu0 0.0
        %577 = vmatmul.mubr.f32.gmra.mrb[0].mxu0 %v429
        %v578 = vpop.f32.mrb[0].mxu0
        %v579 = vadd.f32 0.0, %v578
        %v580 = vpop.f32.mrb[0].mxu0
        %581 = vmatprep.mubr.f32.mxu0 0.0
        %582 = vmatmul.mubr.f32.gmra.mrb[0].mxu0 %v431
        %v583 = vpop.f32.mrb[0].mxu0
        %v584 = vadd.f32 0.0, %v583
        %v585 = vpop.f32.mrb[0].mxu0
        %586 = vmatprep.mubr.f32.mxu0 0.0
        %587 = vmatmul.mubr.f32.gmra.mrb[0].mxu0 %v433
        %v588 = vpop.f32.mrb[0].mxu0
        %v589 = vadd.f32 0.0, %v588
        %v590 = vpop.f32.mrb[0].mxu0
        %591 = vmatprep.mubr.f32.mxu0 0.0
        %592 = vmatmul.mubr.f32.gmra.mrb[0].mxu0 %v435
        %v593 = vpop.f32.mrb[0].mxu0
        %v594 = vadd.f32 0.0, %v593
        %v595 = vpop.f32.mrb[0].mxu0
        %596 = vmatprep.mubr.f32.mxu0 0.0
        %597 = vmatmul.mubr.f32.gmra.mrb[0].mxu0 %v437
        %v598 = vpop.f32.mrb[0].mxu0
        %v599 = vadd.f32 0.0, %v598
        %v600 = vpop.f32.mrb[0].mxu0
        %601 = vmatprep.mubr.f32.mxu0 0.0
        %602 = vmatmul.mubr.f32.gmra.mrb[0].mxu0 %v439
        %v603 = vpop.f32.mrb[0].mxu0
        %v604 = vadd.f32 0.0, %v603
        %v605 = vpop.f32.mrb[0].mxu0
        %606 = vmatprep.mubr.f32.mxu0 0.0
        %607 = vmatmul.mubr.f32.gmra.mrb[0].mxu0 %v441
        %v608 = vpop.f32.mrb[0].mxu0
        %v609 = vadd.f32 0.0, %v608
        %v610 = vpop.f32.mrb[0].mxu0
        %611 = vmatprep.mubr.f32.mxu0 0.0
        %612 = vmatmul.mubr.f32.gmra.mrb[0].mxu0 %v443
        %v613 = vpop.f32.mrb[0].mxu0
        %v614 = vadd.f32 0.0, %v613
        %v615 = vpop.f32.mrb[0].mxu0
        %616 = vmatprep.mubr.f32.mxu0 0.0
        %617 = vmatmul.mubr.f32.gmra.mrb[0].mxu0 %v445
        %v618 = vpop.f32.mrb[0].mxu0
        %v619 = vadd.f32 0.0, %v618
        %v620 = vpop.f32.mrb[0].mxu0
        %621 = vmatprep.mubr.f32.mxu0 0.0
        %622 = vmatmul.mubr.f32.gmra.mrb[0].mxu0 %v447
        %v623 = vpop.f32.mrb[0].mxu0
        %v624 = vadd.f32 0.0, %v623
        %v625 = vpop.f32.mrb[0].mxu0
        %626 = vmatprep.mubr.f32.mxu0 0.0
        %627 = vmatmul.mubr.f32.gmra.mrb[0].mxu0 %v449
        %v628 = vpop.f32.mrb[0].mxu0
        %v629 = vadd.f32 0.0, %v628
        %v630 = vpop.f32.mrb[0].mxu0
        %631 = vmatprep.mubr.f32.mxu0 0.0
        %632 = vmatmul.mubr.f32.gmra.mrb[0].mxu0 %v451
        %v633 = vpop.f32.mrb[0].mxu0
        %v634 = vadd.f32 0.0, %v633
        %v635 = vpop.f32.mrb[0].mxu0
        %636 = vmatprep.mubr.f32.mxu0 0.0
        %637 = vmatmul.mubr.f32.gmra.mrb[0].mxu0 %v453
        %v638 = vpop.f32.mrb[0].mxu0
        %v639 = vadd.f32 0.0, %v638
        %v640 = vpop.f32.mrb[0].mxu0
        %641 = vmatprep.mubr.f32.mxu0 0.0
        %642 = vmatmul.mubr.f32.gmra.mrb[0].mxu0 %v455
        %v643 = vpop.f32.mrb[0].mxu0
        %v644 = vadd.f32 0.0, %v643
        %v645 = vpop.f32.mrb[0].mxu0
        %646 = vmatprep.mubr.f32.mxu0 0.0
        %647 = vmatmul.mubr.f32.gmra.mrb[0].mxu0 %v457
        %v648 = vpop.f32.mrb[0].mxu0
        %v649 = vadd.f32 0.0, %v648
        %v650 = vpop.f32.mrb[0].mxu0
        %651 = vmatprep.mubr.f32.mxu0 0.0
        %652 = vmatmul.mubr.f32.gmra.mrb[0].mxu0 %v459
        %v653 = vpop.f32.mrb[0].mxu0
        %v654 = vadd.f32 0.0, %v653
        %v655 = vpop.f32.mrb[0].mxu0
        %656 = vmatprep.mubr.f32.mxu0 0.0
        %657 = vmatmul.mubr.f32.gmra.mrb[0].mxu0 %v461
        %v658 = vpop.f32.mrb[0].mxu0
        %v659 = vadd.f32 0.0, %v658
        %v660 = vpop.f32.mrb[0].mxu0
        %661 = vmatprep.mubr.f32.mxu0 0.0
        %662 = vmatmul.mubr.f32.gmra.mrb[0].mxu0 %v463
        %v663 = vpop.f32.mrb[0].mxu0
        %v664 = vadd.f32 0.0, %v663
        %v665 = vpop.f32.mrb[0].mxu0
        %666 = vmatprep.mubr.f32.mxu0 0.0
        %667 = vmatmul.mubr.f32.gmra.mrb[0].mxu0 %v465
        %v668 = vpop.f32.mrb[0].mxu0
        %v669 = vadd.f32 0.0, %v668
        %v670 = vpop.f32.mrb[0].mxu0
        %671 = vmatprep.mubr.f32.mxu0 0.0
        %672 = vmatmul.mubr.f32.gmra.mrb[0].mxu0 %v467
        %v673 = vpop.f32.mrb[0].mxu0
        %v674 = vadd.f32 0.0, %v673
        %v675 = vpop.f32.mrb[0].mxu0
        %676 = vmatprep.mubr.f32.mxu0 0.0
        %677 = vmatmul.mubr.f32.gmra.mrb[0].mxu0 %v469
        %v678 = vpop.f32.mrb[0].mxu0
        %v679 = vadd.f32 0.0, %v678
        %v680 = vpop.f32.mrb[0].mxu0
        %681 = vmatprep.mubr.f32.mxu0 0.0
        %682 = vmatmul.mubr.f32.gmra.mrb[0].mxu0 %v471
        %v683 = vpop.f32.mrb[0].mxu0
        %v684 = vadd.f32 0.0, %v683
        %v685 = vpop.f32.mrb[0].mxu0
        %686 = vmatprep.mubr.f32.mxu0 0.0
        %687 = vmatmul.mubr.f32.gmra.mrb[0].mxu0 %v473
        %v688 = vpop.f32.mrb[0].mxu0
        %v689 = vadd.f32 0.0, %v688
        %v690 = vpop.f32.mrb[0].mxu0
        %691 = vmatprep.mubr.f32.mxu0 0.0
        %692 = vmatmul.mubr.f32.gmra.mrb[0].mxu0 %v475
        %v693 = vpop.f32.mrb[0].mxu0
        %v694 = vadd.f32 0.0, %v693
        %v695 = vpop.f32.mrb[0].mxu0
        %696 = vmatprep.mubr.f32.mxu0 0.0
        %697 = vmatmul.mubr.f32.gmra.mrb[0].mxu0 %v477
        %v698 = vpop.f32.mrb[0].mxu0
        %v699 = vadd.f32 0.0, %v698
        %v700 = vpop.f32.mrb[0].mxu0
        %701 = vmatprep.mubr.f32.mxu0 0.0
        %702 = vmatmul.mubr.f32.gmra.mrb[0].mxu0 %v479
        %v703 = vpop.f32.mrb[0].mxu0
        %v704 = vadd.f32 0.0, %v703
        %v705 = vpop.f32.mrb[0].mxu0
        %706 = vmatprep.mubr.f32.mxu0 0.0
        %707 = vmatmul.mubr.f32.gmra.mrb[0].mxu0 %v481
        %v708 = vpop.f32.mrb[0].mxu0
        %v709 = vadd.f32 0.0, %v708
        %v710 = vpop.f32.mrb[0].mxu0
        %711 = vdwg.mxu0
        %v712 = vsel %vm418, %v279, 0
        %v714 = vsel %vm418, %v280, 0
        %v716 = vsel %vm418, %v281, 0
        %v718 = vsel %vm418, %v282, 0
        %v720 = vsel %vm418, %v283, 0
        %v722 = vsel %vm418, %v284, 0
        %v724 = vsel %vm418, %v285, 0
        %v726 = vsel %vm418, %v286, 0
        %v728 = vsel %vm418, %v287, 0
        %v730 = vsel %vm418, %v288, 0
        %v732 = vsel %vm418, %v289, 0
        %v734 = vsel %vm418, %v290, 0
        %v736 = vsel %vm418, %v291, 0
        %v738 = vsel %vm418, %v292, 0
        %v740 = vsel %vm418, %v293, 0
        %v742 = vsel %vm418, %v294, 0
        %v744 = vsel %vm418, %v295, 0
        %v746 = vsel %vm418, %v296, 0
        %v748 = vsel %vm418, %v297, 0
        %v750 = vsel %vm418, %v298, 0
        %v752 = vsel %vm418, %v299, 0
        %v754 = vsel %vm418, %v300, 0
        %v756 = vsel %vm418, %v301, 0
        %v758 = vsel %vm418, %v302, 0
        %v760 = vsel %vm418, %v303, 0
        %v762 = vsel %vm418, %v304, 0
        %v764 = vsel %vm418, %v305, 0
        %v766 = vsel %vm418, %v306, 0
        %v768 = vsel %vm418, %v307, 0
        %v770 = vsel %vm418, %v308, 0
        %v772 = vsel %vm418, %v309, 0
        %v774 = vsel %vm418, %v310, 0
        %v777 = vsel %vm483, %v316, 0
        %779 = vmatprep.subr.mxu0 0.0
        %780 = vmatpush1.msra.mxu0 %v777
        %781 = vmatprep.subr.mxu0 0.0
        %782 = vmatpush1.msra.mxu0 0.0
        %783 = vmatprep.subr.mxu0 0.0
        %784 = vmatpush1.msra.mxu0 0.0
        %785 = vmatprep.subr.mxu0 0.0
        %786 = vmatpush1.msra.mxu0 0.0
        %787 = vmatprep.subr.mxu0 0.0
        %788 = vmatpush1.msra.mxu0 0.0
        %789 = vmatprep.subr.mxu0 0.0
        %790 = vmatpush1.msra.mxu0 0.0
        %791 = vmatprep.subr.mxu0 0.0
        %792 = vmatpush1.msra.mxu0 0.0
        %793 = vmatprep.subr.mxu0 0.0
        %794 = vmatpush1.msra.mxu0 0.0
        %795 = vmatprep.subr.mxu0 0.0
        %796 = vmatpush1.msra.mxu0 0.0
        %797 = vmatprep.subr.mxu0 0.0
        %798 = vmatpush1.msra.mxu0 0.0
        %799 = vmatprep.subr.mxu0 0.0
        %800 = vmatpush1.msra.mxu0 0.0
        %801 = vmatprep.subr.mxu0 0.0
        %802 = vmatpush1.msra.mxu0 0.0
        %803 = vmatprep.subr.mxu0 0.0
        %804 = vmatpush1.msra.mxu0 0.0
        %805 = vmatprep.subr.mxu0 0.0
        %806 = vmatpush1.msra.mxu0 0.0
        %807 = vmatprep.subr.mxu0 0.0
        %808 = vmatpush1.msra.mxu0 0.0
        %809 = vmatprep.subr.mxu0 0.0
        %810 = vmatpush1.msra.mxu0 0.0
        %811 = vmatprep.subr.mxu0 0.0
        %812 = vmatpush1.msra.mxu0 0.0
        %813 = vmatprep.subr.mxu0 0.0
        %814 = vmatpush1.msra.mxu0 0.0
        %815 = vmatprep.subr.mxu0 0.0
        %816 = vmatpush1.msra.mxu0 0.0
        %817 = vmatprep.subr.mxu0 0.0
        %818 = vmatpush1.msra.mxu0 0.0
        %819 = vmatprep.subr.mxu0 0.0
        %820 = vmatpush1.msra.mxu0 0.0
        %821 = vmatprep.subr.mxu0 0.0
        %822 = vmatpush1.msra.mxu0 0.0
        %823 = vmatprep.subr.mxu0 0.0
        %824 = vmatpush1.msra.mxu0 0.0
        %825 = vmatprep.subr.mxu0 0.0
        %826 = vmatpush1.msra.mxu0 0.0
        %827 = vmatprep.subr.mxu0 0.0
        %828 = vmatpush1.msra.mxu0 0.0
        %829 = vmatprep.subr.mxu0 0.0
        %830 = vmatpush1.msra.mxu0 0.0
        %831 = vmatprep.subr.mxu0 0.0
        %832 = vmatpush1.msra.mxu0 0.0
        %833 = vmatprep.subr.mxu0 0.0
        %834 = vmatpush1.msra.mxu0 0.0
        %835 = vmatprep.subr.mxu0 0.0
        %836 = vmatpush1.msra.mxu0 0.0
        %837 = vmatprep.subr.mxu0 0.0
        %838 = vmatpush1.msra.mxu0 0.0
        %839 = vmatprep.subr.mxu0 0.0
        %840 = vmatpush1.msra.mxu0 0.0
        %841 = vmatprep.subr.mxu0 0.0
        %842 = vmatpush1.msra.mxu0 0.0
        %843 = vmatprep.mubr.f32.mxu0 0.0
        %844 = vmatmul.mubr.f32.gmra.mrb[0].mxu0 %v712
        %v845 = vpop.f32.mrb[0].mxu0
        %v846 = vadd.f32 %v554, %v845
        %v847 = vpop.f32.mrb[0].mxu0
        %848 = vmatprep.mubr.f32.mxu0 0.0
        %849 = vmatmul.mubr.f32.gmra.mrb[0].mxu0 %v714
        %v850 = vpop.f32.mrb[0].mxu0
        %v851 = vadd.f32 %v559, %v850
        %v852 = vpop.f32.mrb[0].mxu0
        %853 = vmatprep.mubr.f32.mxu0 0.0
        %854 = vmatmul.mubr.f32.gmra.mrb[0].mxu0 %v716
        %v855 = vpop.f32.mrb[0].mxu0
        %v856 = vadd.f32 %v564, %v855
        %v857 = vpop.f32.mrb[0].mxu0
        %858 = vmatprep.mubr.f32.mxu0 0.0
        %859 = vmatmul.mubr.f32.gmra.mrb[0].mxu0 %v718
        %v860 = vpop.f32.mrb[0].mxu0
        %v861 = vadd.f32 %v569, %v860
        %v862 = vpop.f32.mrb[0].mxu0
        %863 = vmatprep.mubr.f32.mxu0 0.0
        %864 = vmatmul.mubr.f32.gmra.mrb[0].mxu0 %v720
        %v865 = vpop.f32.mrb[0].mxu0
        %v866 = vadd.f32 %v574, %v865
        %v867 = vpop.f32.mrb[0].mxu0
        %868 = vmatprep.mubr.f32.mxu0 0.0
        %869 = vmatmul.mubr.f32.gmra.mrb[0].mxu0 %v722
        %v870 = vpop.f32.mrb[0].mxu0
        %v871 = vadd.f32 %v579, %v870
        %v872 = vpop.f32.mrb[0].mxu0
        %873 = vmatprep.mubr.f32.mxu0 0.0
        %874 = vmatmul.mubr.f32.gmra.mrb[0].mxu0 %v724
        %v875 = vpop.f32.mrb[0].mxu0
        %v876 = vadd.f32 %v584, %v875
        %v877 = vpop.f32.mrb[0].mxu0
        %878 = vmatprep.mubr.f32.mxu0 0.0
        %879 = vmatmul.mubr.f32.gmra.mrb[0].mxu0 %v726
        %v880 = vpop.f32.mrb[0].mxu0
        %v881 = vadd.f32 %v589, %v880
        %v882 = vpop.f32.mrb[0].mxu0
        %883 = vmatprep.mubr.f32.mxu0 0.0
        %884 = vmatmul.mubr.f32.gmra.mrb[0].mxu0 %v728
        %v885 = vpop.f32.mrb[0].mxu0
        %v886 = vadd.f32 %v594, %v885
        %v887 = vpop.f32.mrb[0].mxu0
        %888 = vmatprep.mubr.f32.mxu0 0.0
        %889 = vmatmul.mubr.f32.gmra.mrb[0].mxu0 %v730
        %v890 = vpop.f32.mrb[0].mxu0
        %v891 = vadd.f32 %v599, %v890
        %v892 = vpop.f32.mrb[0].mxu0
        %893 = vmatprep.mubr.f32.mxu0 0.0
        %894 = vmatmul.mubr.f32.gmra.mrb[0].mxu0 %v732
        %v895 = vpop.f32.mrb[0].mxu0
        %v896 = vadd.f32 %v604, %v895
        %v897 = vpop.f32.mrb[0].mxu0
        %898 = vmatprep.mubr.f32.mxu0 0.0
        %899 = vmatmul.mubr.f32.gmra.mrb[0].mxu0 %v734
        %v900 = vpop.f32.mrb[0].mxu0
        %v901 = vadd.f32 %v609, %v900
        %v902 = vpop.f32.mrb[0].mxu0
        %903 = vmatprep.mubr.f32.mxu0 0.0
        %904 = vmatmul.mubr.f32.gmra.mrb[0].mxu0 %v736
        %v905 = vpop.f32.mrb[0].mxu0
        %v906 = vadd.f32 %v614, %v905
        %v907 = vpop.f32.mrb[0].mxu0
        %908 = vmatprep.mubr.f32.mxu0 0.0
        %909 = vmatmul.mubr.f32.gmra.mrb[0].mxu0 %v738
        %v910 = vpop.f32.mrb[0].mxu0
        %v911 = vadd.f32 %v619, %v910
        %v912 = vpop.f32.mrb[0].mxu0
        %913 = vmatprep.mubr.f32.mxu0 0.0
        %914 = vmatmul.mubr.f32.gmra.mrb[0].mxu0 %v740
        %v915 = vpop.f32.mrb[0].mxu0
        %v916 = vadd.f32 %v624, %v915
        %v917 = vpop.f32.mrb[0].mxu0
        %918 = vmatprep.mubr.f32.mxu0 0.0
        %919 = vmatmul.mubr.f32.gmra.mrb[0].mxu0 %v742
        %v920 = vpop.f32.mrb[0].mxu0
        %v921 = vadd.f32 %v629, %v920
        %v922 = vpop.f32.mrb[0].mxu0
        %923 = vmatprep.mubr.f32.mxu0 0.0
        %924 = vmatmul.mubr.f32.gmra.mrb[0].mxu0 %v744
        %v925 = vpop.f32.mrb[0].mxu0
        %v926 = vadd.f32 %v634, %v925
        %v927 = vpop.f32.mrb[0].mxu0
        %928 = vmatprep.mubr.f32.mxu0 0.0
        %929 = vmatmul.mubr.f32.gmra.mrb[0].mxu0 %v746
        %v930 = vpop.f32.mrb[0].mxu0
        %v931 = vadd.f32 %v639, %v930
        %v932 = vpop.f32.mrb[0].mxu0
        %933 = vmatprep.mubr.f32.mxu0 0.0
        %934 = vmatmul.mubr.f32.gmra.mrb[0].mxu0 %v748
        %v935 = vpop.f32.mrb[0].mxu0
        %v936 = vadd.f32 %v644, %v935
        %v937 = vpop.f32.mrb[0].mxu0
        %938 = vmatprep.mubr.f32.mxu0 0.0
        %939 = vmatmul.mubr.f32.gmra.mrb[0].mxu0 %v750
        %v940 = vpop.f32.mrb[0].mxu0
        %v941 = vadd.f32 %v649, %v940
        %v942 = vpop.f32.mrb[0].mxu0
        %943 = vmatprep.mubr.f32.mxu0 0.0
        %944 = vmatmul.mubr.f32.gmra.mrb[0].mxu0 %v752
        %v945 = vpop.f32.mrb[0].mxu0
        %v946 = vadd.f32 %v654, %v945
        %v947 = vpop.f32.mrb[0].mxu0
        %948 = vmatprep.mubr.f32.mxu0 0.0
        %949 = vmatmul.mubr.f32.gmra.mrb[0].mxu0 %v754
        %v950 = vpop.f32.mrb[0].mxu0
        %v951 = vadd.f32 %v659, %v950
        %v952 = vpop.f32.mrb[0].mxu0
        %953 = vmatprep.mubr.f32.mxu0 0.0
        %954 = vmatmul.mubr.f32.gmra.mrb[0].mxu0 %v756
        %v955 = vpop.f32.mrb[0].mxu0
        %v956 = vadd.f32 %v664, %v955
        %v957 = vpop.f32.mrb[0].mxu0
        %958 = vmatprep.mubr.f32.mxu0 0.0
        %959 = vmatmul.mubr.f32.gmra.mrb[0].mxu0 %v758
        %v960 = vpop.f32.mrb[0].mxu0
        %v961 = vadd.f32 %v669, %v960
        %v962 = vpop.f32.mrb[0].mxu0
        %963 = vmatprep.mubr.f32.mxu0 0.0
        %964 = vmatmul.mubr.f32.gmra.mrb[0].mxu0 %v760
        %v965 = vpop.f32.mrb[0].mxu0
        %v966 = vadd.f32 %v674, %v965
        %v967 = vpop.f32.mrb[0].mxu0
        %968 = vmatprep.mubr.f32.mxu0 0.0
        %969 = vmatmul.mubr.f32.gmra.mrb[0].mxu0 %v762
        %v970 = vpop.f32.mrb[0].mxu0
        %v971 = vadd.f32 %v679, %v970
        %v972 = vpop.f32.mrb[0].mxu0
        %973 = vmatprep.mubr.f32.mxu0 0.0
        %974 = vmatmul.mubr.f32.gmra.mrb[0].mxu0 %v764
        %v975 = vpop.f32.mrb[0].mxu0
        %v976 = vadd.f32 %v684, %v975
        %v977 = vpop.f32.mrb[0].mxu0
        %978 = vmatprep.mubr.f32.mxu0 0.0
        %979 = vmatmul.mubr.f32.gmra.mrb[0].mxu0 %v766
        %v980 = vpop.f32.mrb[0].mxu0
        %v981 = vadd.f32 %v689, %v980
        %v982 = vpop.f32.mrb[0].mxu0
        %983 = vmatprep.mubr.f32.mxu0 0.0
        %984 = vmatmul.mubr.f32.gmra.mrb[0].mxu0 %v768
        %v985 = vpop.f32.mrb[0].mxu0
        %v986 = vadd.f32 %v694, %v985
        %v987 = vpop.f32.mrb[0].mxu0
        %988 = vmatprep.mubr.f32.mxu0 0.0
        %989 = vmatmul.mubr.f32.gmra.mrb[0].mxu0 %v770
        %v990 = vpop.f32.mrb[0].mxu0
        %v991 = vadd.f32 %v699, %v990
        %v992 = vpop.f32.mrb[0].mxu0
        %993 = vmatprep.mubr.f32.mxu0 0.0
        %994 = vmatmul.mubr.f32.gmra.mrb[0].mxu0 %v772
        %v995 = vpop.f32.mrb[0].mxu0
        %v996 = vadd.f32 %v704, %v995
        %v997 = vpop.f32.mrb[0].mxu0
        %998 = vmatprep.mubr.f32.mxu0 0.0
        %999 = vmatmul.mubr.f32.gmra.mrb[0].mxu0 %v774
        %v1000 = vpop.f32.mrb[0].mxu0
        %v1001 = vadd.f32 %v709, %v1000
        %v1002 = vpop.f32.mrb[0].mxu0
        %1003 = vdwg.mxu0
        %s1004 = scalar_lea.vmem [#allocation5], 8
        %v1005 = vld [vmem:[%s1004] sm:$0xf]
        %vm1006 = vcmask 1045504
        %v1007 = vrot.slane %v279, 2
        %v1008 = vrot.slane %v280, 2
        %v1009 = vsel %vm1006, %v1007, %v1008
        %v1010 = vrot.slane %v281, 2
        %v1011 = vsel %vm1006, %v1008, %v1010
        %v1012 = vrot.slane %v282, 2
        %v1013 = vsel %vm1006, %v1010, %v1012
        %v1014 = vrot.slane %v283, 2
        %v1015 = vsel %vm1006, %v1012, %v1014
        %v1016 = vrot.slane %v284, 2
        %v1017 = vsel %vm1006, %v1014, %v1016
        %v1018 = vrot.slane %v285, 2
        %v1019 = vsel %vm1006, %v1016, %v1018
        %v1020 = vrot.slane %v286, 2
        %v1021 = vsel %vm1006, %v1018, %v1020
        %v1022 = vrot.slane %v287, 2
        %v1023 = vsel %vm1006, %v1020, %v1022
        %v1024 = vrot.slane %v288, 2
        %v1025 = vsel %vm1006, %v1022, %v1024
        %v1026 = vrot.slane %v289, 2
        %v1027 = vsel %vm1006, %v1024, %v1026
        %v1028 = vrot.slane %v290, 2
        %v1029 = vsel %vm1006, %v1026, %v1028
        %v1030 = vrot.slane %v291, 2
        %v1031 = vsel %vm1006, %v1028, %v1030
        %v1032 = vrot.slane %v292, 2
        %v1033 = vsel %vm1006, %v1030, %v1032
        %v1034 = vrot.slane %v293, 2
        %v1035 = vsel %vm1006, %v1032, %v1034
        %v1036 = vrot.slane %v294, 2
        %v1037 = vsel %vm1006, %v1034, %v1036
        %v1038 = vrot.slane %v295, 2
        %v1039 = vsel %vm1006, %v1036, %v1038
        %v1040 = vrot.slane %v296, 2
        %v1041 = vsel %vm1006, %v1038, %v1040
        %v1042 = vrot.slane %v297, 2
        %v1043 = vsel %vm1006, %v1040, %v1042
        %v1044 = vrot.slane %v298, 2
        %v1045 = vsel %vm1006, %v1042, %v1044
        %v1046 = vrot.slane %v299, 2
        %v1047 = vsel %vm1006, %v1044, %v1046
        %v1048 = vrot.slane %v300, 2
        %v1049 = vsel %vm1006, %v1046, %v1048
        %v1050 = vrot.slane %v301, 2
        %v1051 = vsel %vm1006, %v1048, %v1050
        %v1052 = vrot.slane %v302, 2
        %v1053 = vsel %vm1006, %v1050, %v1052
        %v1054 = vrot.slane %v303, 2
        %v1055 = vsel %vm1006, %v1052, %v1054
        %v1056 = vrot.slane %v304, 2
        %v1057 = vsel %vm1006, %v1054, %v1056
        %v1058 = vrot.slane %v305, 2
        %v1059 = vsel %vm1006, %v1056, %v1058
        %v1060 = vrot.slane %v306, 2
        %v1061 = vsel %vm1006, %v1058, %v1060
        %v1062 = vrot.slane %v307, 2
        %v1063 = vsel %vm1006, %v1060, %v1062
        %v1064 = vrot.slane %v308, 2
        %v1065 = vsel %vm1006, %v1062, %v1064
        %v1066 = vrot.slane %v309, 2
        %v1067 = vsel %vm1006, %v1064, %v1066
        %v1068 = vrot.slane %v310, 2
        %v1069 = vsel %vm1006, %v1066, %v1068
        %v1070 = vrot.slane %v311, 2
        %v1071 = vsel %vm1006, %v1068, %v1070
        %v1072 = vsel %vm418, %v1009, 0
        %v1074 = vsel %vm418, %v1011, 0
        %v1076 = vsel %vm418, %v1013, 0
        %v1078 = vsel %vm418, %v1015, 0
        %v1080 = vsel %vm418, %v1017, 0
        %v1082 = vsel %vm418, %v1019, 0
        %v1084 = vsel %vm418, %v1021, 0
        %v1086 = vsel %vm418, %v1023, 0
        %v1088 = vsel %vm418, %v1025, 0
        %v1090 = vsel %vm418, %v1027, 0
        %v1092 = vsel %vm418, %v1029, 0
        %v1094 = vsel %vm418, %v1031, 0
        %v1096 = vsel %vm418, %v1033, 0
        %v1098 = vsel %vm418, %v1035, 0
        %v1100 = vsel %vm418, %v1037, 0
        %v1102 = vsel %vm418, %v1039, 0
        %v1104 = vsel %vm418, %v1041, 0
        %v1106 = vsel %vm418, %v1043, 0
        %v1108 = vsel %vm418, %v1045, 0
        %v1110 = vsel %vm418, %v1047, 0
        %v1112 = vsel %vm418, %v1049, 0
        %v1114 = vsel %vm418, %v1051, 0
        %v1116 = vsel %vm418, %v1053, 0
        %v1118 = vsel %vm418, %v1055, 0
        %v1120 = vsel %vm418, %v1057, 0
        %v1122 = vsel %vm418, %v1059, 0
        %v1124 = vsel %vm418, %v1061, 0
        %v1126 = vsel %vm418, %v1063, 0
        %v1128 = vsel %vm418, %v1065, 0
        %v1130 = vsel %vm418, %v1067, 0
        %v1132 = vsel %vm418, %v1069, 0
        %v1134 = vsel %vm418, %v1071, 0
        %v1137 = vsel %vm483, %v1005, 0
        %1139 = vmatprep.subr.mxu0 0.0
        %1140 = vmatpush1.msra.mxu0 %v1137
        %1141 = vmatprep.subr.mxu0 0.0
        %1142 = vmatpush1.msra.mxu0 0.0
        %1143 = vmatprep.subr.mxu0 0.0
        %1144 = vmatpush1.msra.mxu0 0.0
        %1145 = vmatprep.subr.mxu0 0.0
        %1146 = vmatpush1.msra.mxu0 0.0
        %1147 = vmatprep.subr.mxu0 0.0
        %1148 = vmatpush1.msra.mxu0 0.0
        %1149 = vmatprep.subr.mxu0 0.0
        %1150 = vmatpush1.msra.mxu0 0.0
        %1151 = vmatprep.subr.mxu0 0.0
        %1152 = vmatpush1.msra.mxu0 0.0
        %1153 = vmatprep.subr.mxu0 0.0
        %1154 = vmatpush1.msra.mxu0 0.0
        %1155 = vmatprep.subr.mxu0 0.0
        %1156 = vmatpush1.msra.mxu0 0.0
        %1157 = vmatprep.subr.mxu0 0.0
        %1158 = vmatpush1.msra.mxu0 0.0
        %1159 = vmatprep.subr.mxu0 0.0
        %1160 = vmatpush1.msra.mxu0 0.0
        %1161 = vmatprep.subr.mxu0 0.0
        %1162 = vmatpush1.msra.mxu0 0.0
        %1163 = vmatprep.subr.mxu0 0.0
        %1164 = vmatpush1.msra.mxu0 0.0
        %1165 = vmatprep.subr.mxu0 0.0
        %1166 = vmatpush1.msra.mxu0 0.0
        %1167 = vmatprep.subr.mxu0 0.0
        %1168 = vmatpush1.msra.mxu0 0.0
        %1169 = vmatprep.subr.mxu0 0.0
        %1170 = vmatpush1.msra.mxu0 0.0
        %1171 = vmatprep.subr.mxu0 0.0
        %1172 = vmatpush1.msra.mxu0 0.0
        %1173 = vmatprep.subr.mxu0 0.0
        %1174 = vmatpush1.msra.mxu0 0.0
        %1175 = vmatprep.subr.mxu0 0.0
        %1176 = vmatpush1.msra.mxu0 0.0
        %1177 = vmatprep.subr.mxu0 0.0
        %1178 = vmatpush1.msra.mxu0 0.0
        %1179 = vmatprep.subr.mxu0 0.0
        %1180 = vmatpush1.msra.mxu0 0.0
        %1181 = vmatprep.subr.mxu0 0.0
        %1182 = vmatpush1.msra.mxu0 0.0
        %1183 = vmatprep.subr.mxu0 0.0
        %1184 = vmatpush1.msra.mxu0 0.0
        %1185 = vmatprep.subr.mxu0 0.0
        %1186 = vmatpush1.msra.mxu0 0.0
        %1187 = vmatprep.subr.mxu0 0.0
        %1188 = vmatpush1.msra.mxu0 0.0
        %1189 = vmatprep.subr.mxu0 0.0
        %1190 = vmatpush1.msra.mxu0 0.0
        %1191 = vmatprep.subr.mxu0 0.0
        %1192 = vmatpush1.msra.mxu0 0.0
        %1193 = vmatprep.subr.mxu0 0.0
        %1194 = vmatpush1.msra.mxu0 0.0
        %1195 = vmatprep.subr.mxu0 0.0
        %1196 = vmatpush1.msra.mxu0 0.0
        %1197 = vmatprep.subr.mxu0 0.0
        %1198 = vmatpush1.msra.mxu0 0.0
        %1199 = vmatprep.subr.mxu0 0.0
        %1200 = vmatpush1.msra.mxu0 0.0
        %1201 = vmatprep.subr.mxu0 0.0
        %1202 = vmatpush1.msra.mxu0 0.0
        %1203 = vmatprep.mubr.f32.mxu0 0.0
        %1204 = vmatmul.mubr.f32.gmra.mrb[0].mxu0 %v1072
        %v1205 = vpop.f32.mrb[0].mxu0
        %v1206 = vadd.f32 0.0, %v1205
        %v1207 = vpop.f32.mrb[0].mxu0
        %1208 = vmatprep.mubr.f32.mxu0 0.0
        %1209 = vmatmul.mubr.f32.gmra.mrb[0].mxu0 %v1074
        %v1210 = vpop.f32.mrb[0].mxu0
        %v1211 = vadd.f32 0.0, %v1210
        %v1212 = vpop.f32.mrb[0].mxu0
        %1213 = vmatprep.mubr.f32.mxu0 0.0
        %1214 = vmatmul.mubr.f32.gmra.mrb[0].mxu0 %v1076
        %v1215 = vpop.f32.mrb[0].mxu0
        %v1216 = vadd.f32 0.0, %v1215
        %v1217 = vpop.f32.mrb[0].mxu0
        %1218 = vmatprep.mubr.f32.mxu0 0.0
        %1219 = vmatmul.mubr.f32.gmra.mrb[0].mxu0 %v1078
        %v1220 = vpop.f32.mrb[0].mxu0
        %v1221 = vadd.f32 0.0, %v1220
        %v1222 = vpop.f32.mrb[0].mxu0
        %1223 = vmatprep.mubr.f32.mxu0 0.0
        %1224 = vmatmul.mubr.f32.gmra.mrb[0].mxu0 %v1080
        %v1225 = vpop.f32.mrb[0].mxu0
        %v1226 = vadd.f32 0.0, %v1225
        %v1227 = vpop.f32.mrb[0].mxu0
        %1228 = vmatprep.mubr.f32.mxu0 0.0
        %1229 = vmatmul.mubr.f32.gmra.mrb[0].mxu0 %v1082
        %v1230 = vpop.f32.mrb[0].mxu0
        %v1231 = vadd.f32 0.0, %v1230
        %v1232 = vpop.f32.mrb[0].mxu0
        %1233 = vmatprep.mubr.f32.mxu0 0.0
        %1234 = vmatmul.mubr.f32.gmra.mrb[0].mxu0 %v1084
        %v1235 = vpop.f32.mrb[0].mxu0
        %v1236 = vadd.f32 0.0, %v1235
        %v1237 = vpop.f32.mrb[0].mxu0
        %1238 = vmatprep.mubr.f32.mxu0 0.0
        %1239 = vmatmul.mubr.f32.gmra.mrb[0].mxu0 %v1086
        %v1240 = vpop.f32.mrb[0].mxu0
        %v1241 = vadd.f32 0.0, %v1240
        %v1242 = vpop.f32.mrb[0].mxu0
        %1243 = vmatprep.mubr.f32.mxu0 0.0
        %1244 = vmatmul.mubr.f32.gmra.mrb[0].mxu0 %v1088
        %v1245 = vpop.f32.mrb[0].mxu0
        %v1246 = vadd.f32 0.0, %v1245
        %v1247 = vpop.f32.mrb[0].mxu0
        %1248 = vmatprep.mubr.f32.mxu0 0.0
        %1249 = vmatmul.mubr.f32.gmra.mrb[0].mxu0 %v1090
        %v1250 = vpop.f32.mrb[0].mxu0
        %v1251 = vadd.f32 0.0, %v1250
        %v1252 = vpop.f32.mrb[0].mxu0
        %1253 = vmatprep.mubr.f32.mxu0 0.0
        %1254 = vmatmul.mubr.f32.gmra.mrb[0].mxu0 %v1092
        %v1255 = vpop.f32.mrb[0].mxu0
        %v1256 = vadd.f32 0.0, %v1255
        %v1257 = vpop.f32.mrb[0].mxu0
        %1258 = vmatprep.mubr.f32.mxu0 0.0
        %1259 = vmatmul.mubr.f32.gmra.mrb[0].mxu0 %v1094
        %v1260 = vpop.f32.mrb[0].mxu0
        %v1261 = vadd.f32 0.0, %v1260
        %v1262 = vpop.f32.mrb[0].mxu0
        %1263 = vmatprep.mubr.f32.mxu0 0.0
        %1264 = vmatmul.mubr.f32.gmra.mrb[0].mxu0 %v1096
        %v1265 = vpop.f32.mrb[0].mxu0
        %v1266 = vadd.f32 0.0, %v1265
        %v1267 = vpop.f32.mrb[0].mxu0
        %1268 = vmatprep.mubr.f32.mxu0 0.0
        %1269 = vmatmul.mubr.f32.gmra.mrb[0].mxu0 %v1098
        %v1270 = vpop.f32.mrb[0].mxu0
        %v1271 = vadd.f32 0.0, %v1270
        %v1272 = vpop.f32.mrb[0].mxu0
        %1273 = vmatprep.mubr.f32.mxu0 0.0
        %1274 = vmatmul.mubr.f32.gmra.mrb[0].mxu0 %v1100
        %v1275 = vpop.f32.mrb[0].mxu0
        %v1276 = vadd.f32 0.0, %v1275
        %v1277 = vpop.f32.mrb[0].mxu0
        %1278 = vmatprep.mubr.f32.mxu0 0.0
        %1279 = vmatmul.mubr.f32.gmra.mrb[0].mxu0 %v1102
        %v1280 = vpop.f32.mrb[0].mxu0
        %v1281 = vadd.f32 0.0, %v1280
        %v1282 = vpop.f32.mrb[0].mxu0
        %1283 = vmatprep.mubr.f32.mxu0 0.0
        %1284 = vmatmul.mubr.f32.gmra.mrb[0].mxu0 %v1104
        %v1285 = vpop.f32.mrb[0].mxu0
        %v1286 = vadd.f32 0.0, %v1285
        %v1287 = vpop.f32.mrb[0].mxu0
        %1288 = vmatprep.mubr.f32.mxu0 0.0
        %1289 = vmatmul.mubr.f32.gmra.mrb[0].mxu0 %v1106
        %v1290 = vpop.f32.mrb[0].mxu0
        %v1291 = vadd.f32 0.0, %v1290
        %v1292 = vpop.f32.mrb[0].mxu0
        %1293 = vmatprep.mubr.f32.mxu0 0.0
        %1294 = vmatmul.mubr.f32.gmra.mrb[0].mxu0 %v1108
        %v1295 = vpop.f32.mrb[0].mxu0
        %v1296 = vadd.f32 0.0, %v1295
        %v1297 = vpop.f32.mrb[0].mxu0
        %1298 = vmatprep.mubr.f32.mxu0 0.0
        %1299 = vmatmul.mubr.f32.gmra.mrb[0].mxu0 %v1110
        %v1300 = vpop.f32.mrb[0].mxu0
        %v1301 = vadd.f32 0.0, %v1300
        %v1302 = vpop.f32.mrb[0].mxu0
        %1303 = vmatprep.mubr.f32.mxu0 0.0
        %1304 = vmatmul.mubr.f32.gmra.mrb[0].mxu0 %v1112
        %v1305 = vpop.f32.mrb[0].mxu0
        %v1306 = vadd.f32 0.0, %v1305
        %v1307 = vpop.f32.mrb[0].mxu0
        %1308 = vmatprep.mubr.f32.mxu0 0.0
        %1309 = vmatmul.mubr.f32.gmra.mrb[0].mxu0 %v1114
        %v1310 = vpop.f32.mrb[0].mxu0
        %v1311 = vadd.f32 0.0, %v1310
        %v1312 = vpop.f32.mrb[0].mxu0
        %1313 = vmatprep.mubr.f32.mxu0 0.0
        %1314 = vmatmul.mubr.f32.gmra.mrb[0].mxu0 %v1116
        %v1315 = vpop.f32.mrb[0].mxu0
        %v1316 = vadd.f32 0.0, %v1315
        %v1317 = vpop.f32.mrb[0].mxu0
        %1318 = vmatprep.mubr.f32.mxu0 0.0
        %1319 = vmatmul.mubr.f32.gmra.mrb[0].mxu0 %v1118
        %v1320 = vpop.f32.mrb[0].mxu0
        %v1321 = vadd.f32 0.0, %v1320
        %v1322 = vpop.f32.mrb[0].mxu0
        %1323 = vmatprep.mubr.f32.mxu0 0.0
        %1324 = vmatmul.mubr.f32.gmra.mrb[0].mxu0 %v1120
        %v1325 = vpop.f32.mrb[0].mxu0
        %v1326 = vadd.f32 0.0, %v1325
        %v1327 = vpop.f32.mrb[0].mxu0
        %1328 = vmatprep.mubr.f32.mxu0 0.0
        %1329 = vmatmul.mubr.f32.gmra.mrb[0].mxu0 %v1122
        %v1330 = vpop.f32.mrb[0].mxu0
        %v1331 = vadd.f32 0.0, %v1330
        %v1332 = vpop.f32.mrb[0].mxu0
        %1333 = vmatprep.mubr.f32.mxu0 0.0
        %1334 = vmatmul.mubr.f32.gmra.mrb[0].mxu0 %v1124
        %v1335 = vpop.f32.mrb[0].mxu0
        %v1336 = vadd.f32 0.0, %v1335
        %v1337 = vpop.f32.mrb[0].mxu0
        %1338 = vmatprep.mubr.f32.mxu0 0.0
        %1339 = vmatmul.mubr.f32.gmra.mrb[0].mxu0 %v1126
        %v1340 = vpop.f32.mrb[0].mxu0
        %v1341 = vadd.f32 0.0, %v1340
        %v1342 = vpop.f32.mrb[0].mxu0
        %1343 = vmatprep.mubr.f32.mxu0 0.0
        %1344 = vmatmul.mubr.f32.gmra.mrb[0].mxu0 %v1128
        %v1345 = vpop.f32.mrb[0].mxu0
        %v1346 = vadd.f32 0.0, %v1345
        %v1347 = vpop.f32.mrb[0].mxu0
        %1348 = vmatprep.mubr.f32.mxu0 0.0
        %1349 = vmatmul.mubr.f32.gmra.mrb[0].mxu0 %v1130
        %v1350 = vpop.f32.mrb[0].mxu0
        %v1351 = vadd.f32 0.0, %v1350
        %v1352 = vpop.f32.mrb[0].mxu0
        %1353 = vmatprep.mubr.f32.mxu0 0.0
        %1354 = vmatmul.mubr.f32.gmra.mrb[0].mxu0 %v1132
        %v1355 = vpop.f32.mrb[0].mxu0
        %v1356 = vadd.f32 0.0, %v1355
        %v1357 = vpop.f32.mrb[0].mxu0
        %1358 = vmatprep.mubr.f32.mxu0 0.0
        %1359 = vmatmul.mubr.f32.gmra.mrb[0].mxu0 %v1134
        %v1360 = vpop.f32.mrb[0].mxu0
        %v1361 = vadd.f32 0.0, %v1360
        %v1362 = vpop.f32.mrb[0].mxu0
        %1363 = vdwg.mxu0
        %v1364 = vadd.f32 %v846, %v1206
        %v1365 = vadd.f32 %v851, %v1211
        %v1366 = vadd.f32 %v856, %v1216
        %v1367 = vadd.f32 %v861, %v1221
        %v1368 = vadd.f32 %v866, %v1226
        %v1369 = vadd.f32 %v871, %v1231
        %v1370 = vadd.f32 %v876, %v1236
        %v1371 = vadd.f32 %v881, %v1241
        %v1372 = vadd.f32 %v886, %v1246
        %v1373 = vadd.f32 %v891, %v1251
        %v1374 = vadd.f32 %v896, %v1256
        %v1375 = vadd.f32 %v901, %v1261
        %v1376 = vadd.f32 %v906, %v1266
        %v1377 = vadd.f32 %v911, %v1271
        %v1378 = vadd.f32 %v916, %v1276
        %v1379 = vadd.f32 %v921, %v1281
        %v1380 = vadd.f32 %v926, %v1286
        %v1381 = vadd.f32 %v931, %v1291
        %v1382 = vadd.f32 %v936, %v1296
        %v1383 = vadd.f32 %v941, %v1301
        %v1384 = vadd.f32 %v946, %v1306
        %v1385 = vadd.f32 %v951, %v1311
        %v1386 = vadd.f32 %v956, %v1316
        %v1387 = vadd.f32 %v961, %v1321
        %v1388 = vadd.f32 %v966, %v1326
        %v1389 = vadd.f32 %v971, %v1331
        %v1390 = vadd.f32 %v976, %v1336
        %v1391 = vadd.f32 %v981, %v1341
        %v1392 = vadd.f32 %v986, %v1346
        %v1393 = vadd.f32 %v991, %v1351
        %v1394 = vadd.f32 %v996, %v1356
        %v1395 = vadd.f32 %v1001, %v1361
        %s1396 = scalar_lea.vmem [#allocation5], 12
        %v1397 = vld [vmem:[%s1396] sm:$0xf]
        %v1400 = vrot.slane %v312, 2
        %v1401 = vsel %vm1006, %v1070, %v1400
        %v1402 = vrot.slane %v313, 2
        %v1403 = vsel %vm1006, %v1400, %v1402
        %v1404 = vsel %vm418, %v1401, 0
        %v1406 = vsel %vm418, %v1403, 0
        %v1409 = vsel %vm483, %v1397, 0
        %1411 = vmatprep.subr.mxu0 0.0
        %1412 = vmatpush1.msra.mxu0 %v1409
        %1413 = vmatprep.subr.mxu0 0.0
        %1414 = vmatpush1.msra.mxu0 0.0
        %1415 = vmatprep.subr.mxu0 0.0
        %1416 = vmatpush1.msra.mxu0 0.0
        %1417 = vmatprep.subr.mxu0 0.0
        %1418 = vmatpush1.msra.mxu0 0.0
        %1419 = vmatprep.subr.mxu0 0.0
        %1420 = vmatpush1.msra.mxu0 0.0
        %1421 = vmatprep.subr.mxu0 0.0
        %1422 = vmatpush1.msra.mxu0 0.0
        %1423 = vmatprep.subr.mxu0 0.0
        %1424 = vmatpush1.msra.mxu0 0.0
        %1425 = vmatprep.subr.mxu0 0.0
        %1426 = vmatpush1.msra.mxu0 0.0
        %1427 = vmatprep.subr.mxu0 0.0
        %1428 = vmatpush1.msra.mxu0 0.0
        %1429 = vmatprep.subr.mxu0 0.0
        %1430 = vmatpush1.msra.mxu0 0.0
        %1431 = vmatprep.subr.mxu0 0.0
        %1432 = vmatpush1.msra.mxu0 0.0
        %1433 = vmatprep.subr.mxu0 0.0
        %1434 = vmatpush1.msra.mxu0 0.0
        %1435 = vmatprep.subr.mxu0 0.0
        %1436 = vmatpush1.msra.mxu0 0.0
        %1437 = vmatprep.subr.mxu0 0.0
        %1438 = vmatpush1.msra.mxu0 0.0
        %1439 = vmatprep.subr.mxu0 0.0
        %1440 = vmatpush1.msra.mxu0 0.0
        %1441 = vmatprep.subr.mxu0 0.0
        %1442 = vmatpush1.msra.mxu0 0.0
        %1443 = vmatprep.subr.mxu0 0.0
        %1444 = vmatpush1.msra.mxu0 0.0
        %1445 = vmatprep.subr.mxu0 0.0
        %1446 = vmatpush1.msra.mxu0 0.0
        %1447 = vmatprep.subr.mxu0 0.0
        %1448 = vmatpush1.msra.mxu0 0.0
        %1449 = vmatprep.subr.mxu0 0.0
        %1450 = vmatpush1.msra.mxu0 0.0
        %1451 = vmatprep.subr.mxu0 0.0
        %1452 = vmatpush1.msra.mxu0 0.0
        %1453 = vmatprep.subr.mxu0 0.0
        %1454 = vmatpush1.msra.mxu0 0.0
        %1455 = vmatprep.subr.mxu0 0.0
        %1456 = vmatpush1.msra.mxu0 0.0
        %1457 = vmatprep.subr.mxu0 0.0
        %1458 = vmatpush1.msra.mxu0 0.0
        %1459 = vmatprep.subr.mxu0 0.0
        %1460 = vmatpush1.msra.mxu0 0.0
        %1461 = vmatprep.subr.mxu0 0.0
        %1462 = vmatpush1.msra.mxu0 0.0
        %1463 = vmatprep.subr.mxu0 0.0
        %1464 = vmatpush1.msra.mxu0 0.0
        %1465 = vmatprep.subr.mxu0 0.0
        %1466 = vmatpush1.msra.mxu0 0.0
        %1467 = vmatprep.subr.mxu0 0.0
        %1468 = vmatpush1.msra.mxu0 0.0
        %1469 = vmatprep.subr.mxu0 0.0
        %1470 = vmatpush1.msra.mxu0 0.0
        %1471 = vmatprep.subr.mxu0 0.0
        %1472 = vmatpush1.msra.mxu0 0.0
        %1473 = vmatprep.subr.mxu0 0.0
        %1474 = vmatpush1.msra.mxu0 0.0
        %1475 = vmatprep.mubr.f32.mxu0 0.0
        %1476 = vmatmul.mubr.f32.gmra.mrb[0].mxu0 %v1076
        %v1477 = vpop.f32.mrb[0].mxu0
        %v1478 = vadd.f32 0.0, %v1477
        %v1479 = vpop.f32.mrb[0].mxu0
        %1480 = vmatprep.mubr.f32.mxu0 0.0
        %1481 = vmatmul.mubr.f32.gmra.mrb[0].mxu0 %v1078
        %v1482 = vpop.f32.mrb[0].mxu0
        %v1483 = vadd.f32 0.0, %v1482
        %v1484 = vpop.f32.mrb[0].mxu0
        %1485 = vmatprep.mubr.f32.mxu0 0.0
        %1486 = vmatmul.mubr.f32.gmra.mrb[0].mxu0 %v1080
        %v1487 = vpop.f32.mrb[0].mxu0
        %v1488 = vadd.f32 0.0, %v1487
        %v1489 = vpop.f32.mrb[0].mxu0
        %1490 = vmatprep.mubr.f32.mxu0 0.0
        %1491 = vmatmul.mubr.f32.gmra.mrb[0].mxu0 %v1082
        %v1492 = vpop.f32.mrb[0].mxu0
        %v1493 = vadd.f32 0.0, %v1492
        %v1494 = vpop.f32.mrb[0].mxu0
        %1495 = vmatprep.mubr.f32.mxu0 0.0
        %1496 = vmatmul.mubr.f32.gmra.mrb[0].mxu0 %v1084
        %v1497 = vpop.f32.mrb[0].mxu0
        %v1498 = vadd.f32 0.0, %v1497
        %v1499 = vpop.f32.mrb[0].mxu0
        %1500 = vmatprep.mubr.f32.mxu0 0.0
        %1501 = vmatmul.mubr.f32.gmra.mrb[0].mxu0 %v1086
        %v1502 = vpop.f32.mrb[0].mxu0
        %v1503 = vadd.f32 0.0, %v1502
        %v1504 = vpop.f32.mrb[0].mxu0
        %1505 = vmatprep.mubr.f32.mxu0 0.0
        %1506 = vmatmul.mubr.f32.gmra.mrb[0].mxu0 %v1088
        %v1507 = vpop.f32.mrb[0].mxu0
        %v1508 = vadd.f32 0.0, %v1507
        %v1509 = vpop.f32.mrb[0].mxu0
        %1510 = vmatprep.mubr.f32.mxu0 0.0
        %1511 = vmatmul.mubr.f32.gmra.mrb[0].mxu0 %v1090
        %v1512 = vpop.f32.mrb[0].mxu0
        %v1513 = vadd.f32 0.0, %v1512
        %v1514 = vpop.f32.mrb[0].mxu0
        %1515 = vmatprep.mubr.f32.mxu0 0.0
        %1516 = vmatmul.mubr.f32.gmra.mrb[0].mxu0 %v1092
        %v1517 = vpop.f32.mrb[0].mxu0
        %v1518 = vadd.f32 0.0, %v1517
        %v1519 = vpop.f32.mrb[0].mxu0
        %1520 = vmatprep.mubr.f32.mxu0 0.0
        %1521 = vmatmul.mubr.f32.gmra.mrb[0].mxu0 %v1094
        %v1522 = vpop.f32.mrb[0].mxu0
        %v1523 = vadd.f32 0.0, %v1522
        %v1524 = vpop.f32.mrb[0].mxu0
        %1525 = vmatprep.mubr.f32.mxu0 0.0
        %1526 = vmatmul.mubr.f32.gmra.mrb[0].mxu0 %v1096
        %v1527 = vpop.f32.mrb[0].mxu0
        %v1528 = vadd.f32 0.0, %v1527
        %v1529 = vpop.f32.mrb[0].mxu0
        %1530 = vmatprep.mubr.f32.mxu0 0.0
        %1531 = vmatmul.mubr.f32.gmra.mrb[0].mxu0 %v1098
        %v1532 = vpop.f32.mrb[0].mxu0
        %v1533 = vadd.f32 0.0, %v1532
        %v1534 = vpop.f32.mrb[0].mxu0
        %1535 = vmatprep.mubr.f32.mxu0 0.0
        %1536 = vmatmul.mubr.f32.gmra.mrb[0].mxu0 %v1100
        %v1537 = vpop.f32.mrb[0].mxu0
        %v1538 = vadd.f32 0.0, %v1537
        %v1539 = vpop.f32.mrb[0].mxu0
        %1540 = vmatprep.mubr.f32.mxu0 0.0
        %1541 = vmatmul.mubr.f32.gmra.mrb[0].mxu0 %v1102
        %v1542 = vpop.f32.mrb[0].mxu0
        %v1543 = vadd.f32 0.0, %v1542
        %v1544 = vpop.f32.mrb[0].mxu0
        %1545 = vmatprep.mubr.f32.mxu0 0.0
        %1546 = vmatmul.mubr.f32.gmra.mrb[0].mxu0 %v1104
        %v1547 = vpop.f32.mrb[0].mxu0
        %v1548 = vadd.f32 0.0, %v1547
        %v1549 = vpop.f32.mrb[0].mxu0
        %1550 = vmatprep.mubr.f32.mxu0 0.0
        %1551 = vmatmul.mubr.f32.gmra.mrb[0].mxu0 %v1106
        %v1552 = vpop.f32.mrb[0].mxu0
        %v1553 = vadd.f32 0.0, %v1552
        %v1554 = vpop.f32.mrb[0].mxu0
        %1555 = vmatprep.mubr.f32.mxu0 0.0
        %1556 = vmatmul.mubr.f32.gmra.mrb[0].mxu0 %v1108
        %v1557 = vpop.f32.mrb[0].mxu0
        %v1558 = vadd.f32 0.0, %v1557
        %v1559 = vpop.f32.mrb[0].mxu0
        %1560 = vmatprep.mubr.f32.mxu0 0.0
        %1561 = vmatmul.mubr.f32.gmra.mrb[0].mxu0 %v1110
        %v1562 = vpop.f32.mrb[0].mxu0
        %v1563 = vadd.f32 0.0, %v1562
        %v1564 = vpop.f32.mrb[0].mxu0
        %1565 = vmatprep.mubr.f32.mxu0 0.0
        %1566 = vmatmul.mubr.f32.gmra.mrb[0].mxu0 %v1112
        %v1567 = vpop.f32.mrb[0].mxu0
        %v1568 = vadd.f32 0.0, %v1567
        %v1569 = vpop.f32.mrb[0].mxu0
        %1570 = vmatprep.mubr.f32.mxu0 0.0
        %1571 = vmatmul.mubr.f32.gmra.mrb[0].mxu0 %v1114
        %v1572 = vpop.f32.mrb[0].mxu0
        %v1573 = vadd.f32 0.0, %v1572
        %v1574 = vpop.f32.mrb[0].mxu0
        %1575 = vmatprep.mubr.f32.mxu0 0.0
        %1576 = vmatmul.mubr.f32.gmra.mrb[0].mxu0 %v1116
        %v1577 = vpop.f32.mrb[0].mxu0
        %v1578 = vadd.f32 0.0, %v1577
        %v1579 = vpop.f32.mrb[0].mxu0
        %1580 = vmatprep.mubr.f32.mxu0 0.0
        %1581 = vmatmul.mubr.f32.gmra.mrb[0].mxu0 %v1118
        %v1582 = vpop.f32.mrb[0].mxu0
        %v1583 = vadd.f32 0.0, %v1582
        %v1584 = vpop.f32.mrb[0].mxu0
        %1585 = vmatprep.mubr.f32.mxu0 0.0
        %1586 = vmatmul.mubr.f32.gmra.mrb[0].mxu0 %v1120
        %v1587 = vpop.f32.mrb[0].mxu0
        %v1588 = vadd.f32 0.0, %v1587
        %v1589 = vpop.f32.mrb[0].mxu0
        %1590 = vmatprep.mubr.f32.mxu0 0.0
        %1591 = vmatmul.mubr.f32.gmra.mrb[0].mxu0 %v1122
        %v1592 = vpop.f32.mrb[0].mxu0
        %v1593 = vadd.f32 0.0, %v1592
        %v1594 = vpop.f32.mrb[0].mxu0
        %1595 = vmatprep.mubr.f32.mxu0 0.0
        %1596 = vmatmul.mubr.f32.gmra.mrb[0].mxu0 %v1124
        %v1597 = vpop.f32.mrb[0].mxu0
        %v1598 = vadd.f32 0.0, %v1597
        %v1599 = vpop.f32.mrb[0].mxu0
        %1600 = vmatprep.mubr.f32.mxu0 0.0
        %1601 = vmatmul.mubr.f32.gmra.mrb[0].mxu0 %v1126
        %v1602 = vpop.f32.mrb[0].mxu0
        %v1603 = vadd.f32 0.0, %v1602
        %v1604 = vpop.f32.mrb[0].mxu0
        %1605 = vmatprep.mubr.f32.mxu0 0.0
        %1606 = vmatmul.mubr.f32.gmra.mrb[0].mxu0 %v1128
        %v1607 = vpop.f32.mrb[0].mxu0
        %v1608 = vadd.f32 0.0, %v1607
        %v1609 = vpop.f32.mrb[0].mxu0
        %1610 = vmatprep.mubr.f32.mxu0 0.0
        %1611 = vmatmul.mubr.f32.gmra.mrb[0].mxu0 %v1130
        %v1612 = vpop.f32.mrb[0].mxu0
        %v1613 = vadd.f32 0.0, %v1612
        %v1614 = vpop.f32.mrb[0].mxu0
        %1615 = vmatprep.mubr.f32.mxu0 0.0
        %1616 = vmatmul.mubr.f32.gmra.mrb[0].mxu0 %v1132
        %v1617 = vpop.f32.mrb[0].mxu0
        %v1618 = vadd.f32 0.0, %v1617
        %v1619 = vpop.f32.mrb[0].mxu0
        %1620 = vmatprep.mubr.f32.mxu0 0.0
        %1621 = vmatmul.mubr.f32.gmra.mrb[0].mxu0 %v1134
        %v1622 = vpop.f32.mrb[0].mxu0
        %v1623 = vadd.f32 0.0, %v1622
        %v1624 = vpop.f32.mrb[0].mxu0
        %1625 = vmatprep.mubr.f32.mxu0 0.0
        %1626 = vmatmul.mubr.f32.gmra.mrb[0].mxu0 %v1404
        %v1627 = vpop.f32.mrb[0].mxu0
        %v1628 = vadd.f32 0.0, %v1627
        %v1629 = vpop.f32.mrb[0].mxu0
        %1630 = vmatprep.mubr.f32.mxu0 0.0
        %1631 = vmatmul.mubr.f32.gmra.mrb[0].mxu0 %v1406
        %v1632 = vpop.f32.mrb[0].mxu0
        %v1633 = vadd.f32 0.0, %v1632
        %v1634 = vpop.f32.mrb[0].mxu0
        %1635 = vdwg.mxu0
        %v1636 = vadd.f32 %v1364, %v1478
        %v1637 = vadd.f32 %v1365, %v1483
        %v1638 = vadd.f32 %v1366, %v1488
        %v1639 = vadd.f32 %v1367, %v1493
        %v1640 = vadd.f32 %v1368, %v1498
        %v1641 = vadd.f32 %v1369, %v1503
        %v1642 = vadd.f32 %v1370, %v1508
        %v1643 = vadd.f32 %v1371, %v1513
        %v1644 = vadd.f32 %v1372, %v1518
        %v1645 = vadd.f32 %v1373, %v1523
        %v1646 = vadd.f32 %v1374, %v1528
        %v1647 = vadd.f32 %v1375, %v1533
        %v1648 = vadd.f32 %v1376, %v1538
        %v1649 = vadd.f32 %v1377, %v1543
        %v1650 = vadd.f32 %v1378, %v1548
        %v1651 = vadd.f32 %v1379, %v1553
        %v1652 = vadd.f32 %v1380, %v1558
        %v1653 = vadd.f32 %v1381, %v1563
        %v1654 = vadd.f32 %v1382, %v1568
        %v1655 = vadd.f32 %v1383, %v1573
        %v1656 = vadd.f32 %v1384, %v1578
        %v1657 = vadd.f32 %v1385, %v1583
        %v1658 = vadd.f32 %v1386, %v1588
        %v1659 = vadd.f32 %v1387, %v1593
        %v1660 = vadd.f32 %v1388, %v1598
        %v1661 = vadd.f32 %v1389, %v1603
        %v1662 = vadd.f32 %v1390, %v1608
        %v1663 = vadd.f32 %v1391, %v1613
        %v1664 = vadd.f32 %v1392, %v1618
        %v1665 = vadd.f32 %v1393, %v1623
        %v1666 = vadd.f32 %v1394, %v1628
        %v1667 = vadd.f32 %v1395, %v1633
        %s1668 = scalar_lea.vmem [#allocation5], 16
        %v1669 = vld [vmem:[%s1668] sm:$0xf]
        %vm1670 = vcmask 1044480
        %v1671 = vrot.slane %v281, 3
        %v1672 = vrot.slane %v282, 3
        %v1673 = vsel %vm1670, %v1671, %v1672
        %v1674 = vrot.slane %v283, 3
        %v1675 = vsel %vm1670, %v1672, %v1674
        %v1676 = vrot.slane %v284, 3
        %v1677 = vsel %vm1670, %v1674, %v1676
        %v1678 = vrot.slane %v285, 3
        %v1679 = vsel %vm1670, %v1676, %v1678
        %v1680 = vrot.slane %v286, 3
        %v1681 = vsel %vm1670, %v1678, %v1680
        %v1682 = vrot.slane %v287, 3
        %v1683 = vsel %vm1670, %v1680, %v1682
        %v1684 = vrot.slane %v288, 3
        %v1685 = vsel %vm1670, %v1682, %v1684
        %v1686 = vrot.slane %v289, 3
        %v1687 = vsel %vm1670, %v1684, %v1686
        %v1688 = vrot.slane %v290, 3
        %v1689 = vsel %vm1670, %v1686, %v1688
        %v1690 = vrot.slane %v291, 3
        %v1691 = vsel %vm1670, %v1688, %v1690
        %v1692 = vrot.slane %v292, 3
        %v1693 = vsel %vm1670, %v1690, %v1692
        %v1694 = vrot.slane %v293, 3
        %v1695 = vsel %vm1670, %v1692, %v1694
        %v1696 = vrot.slane %v294, 3
        %v1697 = vsel %vm1670, %v1694, %v1696
        %v1698 = vrot.slane %v295, 3
        %v1699 = vsel %vm1670, %v1696, %v1698
        %v1700 = vrot.slane %v296, 3
        %v1701 = vsel %vm1670, %v1698, %v1700
        %v1702 = vrot.slane %v297, 3
        %v1703 = vsel %vm1670, %v1700, %v1702
        %v1704 = vrot.slane %v298, 3
        %v1705 = vsel %vm1670, %v1702, %v1704
        %v1706 = vrot.slane %v299, 3
        %v1707 = vsel %vm1670, %v1704, %v1706
        %v1708 = vrot.slane %v300, 3
        %v1709 = vsel %vm1670, %v1706, %v1708
        %v1710 = vrot.slane %v301, 3
        %v1711 = vsel %vm1670, %v1708, %v1710
        %v1712 = vrot.slane %v302, 3
        %v1713 = vsel %vm1670, %v1710, %v1712
        %v1714 = vrot.slane %v303, 3
        %v1715 = vsel %vm1670, %v1712, %v1714
        %v1716 = vrot.slane %v304, 3
        %v1717 = vsel %vm1670, %v1714, %v1716
        %v1718 = vrot.slane %v305, 3
        %v1719 = vsel %vm1670, %v1716, %v1718
        %v1720 = vrot.slane %v306, 3
        %v1721 = vsel %vm1670, %v1718, %v1720
        %v1722 = vrot.slane %v307, 3
        %v1723 = vsel %vm1670, %v1720, %v1722
        %v1724 = vrot.slane %v308, 3
        %v1725 = vsel %vm1670, %v1722, %v1724
        %v1726 = vrot.slane %v309, 3
        %v1727 = vsel %vm1670, %v1724, %v1726
        %v1728 = vrot.slane %v310, 3
        %v1729 = vsel %vm1670, %v1726, %v1728
        %v1730 = vrot.slane %v311, 3
        %v1731 = vsel %vm1670, %v1728, %v1730
        %v1732 = vrot.slane %v312, 3
        %v1733 = vsel %vm1670, %v1730, %v1732
        %v1734 = vrot.slane %v313, 3
        %v1735 = vsel %vm1670, %v1732, %v1734
        %v1736 = vsel %vm418, %v1673, 0
        %v1738 = vsel %vm418, %v1675, 0
        %v1740 = vsel %vm418, %v1677, 0
        %v1742 = vsel %vm418, %v1679, 0
        %v1744 = vsel %vm418, %v1681, 0
        %v1746 = vsel %vm418, %v1683, 0
        %v1748 = vsel %vm418, %v1685, 0
        %v1750 = vsel %vm418, %v1687, 0
        %v1752 = vsel %vm418, %v1689, 0
        %v1754 = vsel %vm418, %v1691, 0
        %v1756 = vsel %vm418, %v1693, 0
        %v1758 = vsel %vm418, %v1695, 0
        %v1760 = vsel %vm418, %v1697, 0
        %v1762 = vsel %vm418, %v1699, 0
        %v1764 = vsel %vm418, %v1701, 0
        %v1766 = vsel %vm418, %v1703, 0
        %v1768 = vsel %vm418, %v1705, 0
        %v1770 = vsel %vm418, %v1707, 0
        %v1772 = vsel %vm418, %v1709, 0
        %v1774 = vsel %vm418, %v1711, 0
        %v1776 = vsel %vm418, %v1713, 0
        %v1778 = vsel %vm418, %v1715, 0
        %v1780 = vsel %vm418, %v1717, 0
        %v1782 = vsel %vm418, %v1719, 0
        %v1784 = vsel %vm418, %v1721, 0
        %v1786 = vsel %vm418, %v1723, 0
        %v1788 = vsel %vm418, %v1725, 0
        %v1790 = vsel %vm418, %v1727, 0
        %v1792 = vsel %vm418, %v1729, 0
        %v1794 = vsel %vm418, %v1731, 0
        %v1796 = vsel %vm418, %v1733, 0
        %v1798 = vsel %vm418, %v1735, 0
        %v1801 = vsel %vm483, %v1669, 0
        %1803 = vmatprep.subr.mxu0 0.0
        %1804 = vmatpush1.msra.mxu0 %v1801
        %1805 = vmatprep.subr.mxu0 0.0
        %1806 = vmatpush1.msra.mxu0 0.0
        %1807 = vmatprep.subr.mxu0 0.0
        %1808 = vmatpush1.msra.mxu0 0.0
        %1809 = vmatprep.subr.mxu0 0.0
        %1810 = vmatpush1.msra.mxu0 0.0
        %1811 = vmatprep.subr.mxu0 0.0
        %1812 = vmatpush1.msra.mxu0 0.0
        %1813 = vmatprep.subr.mxu0 0.0
        %1814 = vmatpush1.msra.mxu0 0.0
        %1815 = vmatprep.subr.mxu0 0.0
        %1816 = vmatpush1.msra.mxu0 0.0
        %1817 = vmatprep.subr.mxu0 0.0
        %1818 = vmatpush1.msra.mxu0 0.0
        %1819 = vmatprep.subr.mxu0 0.0
        %1820 = vmatpush1.msra.mxu0 0.0
        %1821 = vmatprep.subr.mxu0 0.0
        %1822 = vmatpush1.msra.mxu0 0.0
        %1823 = vmatprep.subr.mxu0 0.0
        %1824 = vmatpush1.msra.mxu0 0.0
        %1825 = vmatprep.subr.mxu0 0.0
        %1826 = vmatpush1.msra.mxu0 0.0
        %1827 = vmatprep.subr.mxu0 0.0
        %1828 = vmatpush1.msra.mxu0 0.0
        %1829 = vmatprep.subr.mxu0 0.0
        %1830 = vmatpush1.msra.mxu0 0.0
        %1831 = vmatprep.subr.mxu0 0.0
        %1832 = vmatpush1.msra.mxu0 0.0
        %1833 = vmatprep.subr.mxu0 0.0
        %1834 = vmatpush1.msra.mxu0 0.0
        %1835 = vmatprep.subr.mxu0 0.0
        %1836 = vmatpush1.msra.mxu0 0.0
        %1837 = vmatprep.subr.mxu0 0.0
        %1838 = vmatpush1.msra.mxu0 0.0
        %1839 = vmatprep.subr.mxu0 0.0
        %1840 = vmatpush1.msra.mxu0 0.0
        %1841 = vmatprep.subr.mxu0 0.0
        %1842 = vmatpush1.msra.mxu0 0.0
        %1843 = vmatprep.subr.mxu0 0.0
        %1844 = vmatpush1.msra.mxu0 0.0
        %1845 = vmatprep.subr.mxu0 0.0
        %1846 = vmatpush1.msra.mxu0 0.0
        %1847 = vmatprep.subr.mxu0 0.0
        %1848 = vmatpush1.msra.mxu0 0.0
        %1849 = vmatprep.subr.mxu0 0.0
        %1850 = vmatpush1.msra.mxu0 0.0
        %1851 = vmatprep.subr.mxu0 0.0
        %1852 = vmatpush1.msra.mxu0 0.0
        %1853 = vmatprep.subr.mxu0 0.0
        %1854 = vmatpush1.msra.mxu0 0.0
        %1855 = vmatprep.subr.mxu0 0.0
        %1856 = vmatpush1.msra.mxu0 0.0
        %1857 = vmatprep.subr.mxu0 0.0
        %1858 = vmatpush1.msra.mxu0 0.0
        %1859 = vmatprep.subr.mxu0 0.0
        %1860 = vmatpush1.msra.mxu0 0.0
        %1861 = vmatprep.subr.mxu0 0.0
        %1862 = vmatpush1.msra.mxu0 0.0
        %1863 = vmatprep.subr.mxu0 0.0
        %1864 = vmatpush1.msra.mxu0 0.0
        %1865 = vmatprep.subr.mxu0 0.0
        %1866 = vmatpush1.msra.mxu0 0.0
        %1867 = vmatprep.mubr.f32.mxu0 0.0
        %1868 = vmatmul.mubr.f32.gmra.mrb[0].mxu0 %v1736
        %v1869 = vpop.f32.mrb[0].mxu0
        %v1870 = vadd.f32 0.0, %v1869
        %v1871 = vpop.f32.mrb[0].mxu0
        %1872 = vmatprep.mubr.f32.mxu0 0.0
        %1873 = vmatmul.mubr.f32.gmra.mrb[0].mxu0 %v1738
        %v1874 = vpop.f32.mrb[0].mxu0
        %v1875 = vadd.f32 0.0, %v1874
        %v1876 = vpop.f32.mrb[0].mxu0
        %1877 = vmatprep.mubr.f32.mxu0 0.0
        %1878 = vmatmul.mubr.f32.gmra.mrb[0].mxu0 %v1740
        %v1879 = vpop.f32.mrb[0].mxu0
        %v1880 = vadd.f32 0.0, %v1879
        %v1881 = vpop.f32.mrb[0].mxu0
        %1882 = vmatprep.mubr.f32.mxu0 0.0
        %1883 = vmatmul.mubr.f32.gmra.mrb[0].mxu0 %v1742
        %v1884 = vpop.f32.mrb[0].mxu0
        %v1885 = vadd.f32 0.0, %v1884
        %v1886 = vpop.f32.mrb[0].mxu0
        %1887 = vmatprep.mubr.f32.mxu0 0.0
        %1888 = vmatmul.mubr.f32.gmra.mrb[0].mxu0 %v1744
        %v1889 = vpop.f32.mrb[0].mxu0
        %v1890 = vadd.f32 0.0, %v1889
        %v1891 = vpop.f32.mrb[0].mxu0
        %1892 = vmatprep.mubr.f32.mxu0 0.0
        %1893 = vmatmul.mubr.f32.gmra.mrb[0].mxu0 %v1746
        %v1894 = vpop.f32.mrb[0].mxu0
        %v1895 = vadd.f32 0.0, %v1894
        %v1896 = vpop.f32.mrb[0].mxu0
        %1897 = vmatprep.mubr.f32.mxu0 0.0
        %1898 = vmatmul.mubr.f32.gmra.mrb[0].mxu0 %v1748
        %v1899 = vpop.f32.mrb[0].mxu0
        %v1900 = vadd.f32 0.0, %v1899
        %v1901 = vpop.f32.mrb[0].mxu0
        %1902 = vmatprep.mubr.f32.mxu0 0.0
        %1903 = vmatmul.mubr.f32.gmra.mrb[0].mxu0 %v1750
        %v1904 = vpop.f32.mrb[0].mxu0
        %v1905 = vadd.f32 0.0, %v1904
        %v1906 = vpop.f32.mrb[0].mxu0
        %1907 = vmatprep.mubr.f32.mxu0 0.0
        %1908 = vmatmul.mubr.f32.gmra.mrb[0].mxu0 %v1752
        %v1909 = vpop.f32.mrb[0].mxu0
        %v1910 = vadd.f32 0.0, %v1909
        %v1911 = vpop.f32.mrb[0].mxu0
        %1912 = vmatprep.mubr.f32.mxu0 0.0
        %1913 = vmatmul.mubr.f32.gmra.mrb[0].mxu0 %v1754
        %v1914 = vpop.f32.mrb[0].mxu0
        %v1915 = vadd.f32 0.0, %v1914
        %v1916 = vpop.f32.mrb[0].mxu0
        %1917 = vmatprep.mubr.f32.mxu0 0.0
        %1918 = vmatmul.mubr.f32.gmra.mrb[0].mxu0 %v1756
        %v1919 = vpop.f32.mrb[0].mxu0
        %v1920 = vadd.f32 0.0, %v1919
        %v1921 = vpop.f32.mrb[0].mxu0
        %1922 = vmatprep.mubr.f32.mxu0 0.0
        %1923 = vmatmul.mubr.f32.gmra.mrb[0].mxu0 %v1758
        %v1924 = vpop.f32.mrb[0].mxu0
        %v1925 = vadd.f32 0.0, %v1924
        %v1926 = vpop.f32.mrb[0].mxu0
        %1927 = vmatprep.mubr.f32.mxu0 0.0
        %1928 = vmatmul.mubr.f32.gmra.mrb[0].mxu0 %v1760
        %v1929 = vpop.f32.mrb[0].mxu0
        %v1930 = vadd.f32 0.0, %v1929
        %v1931 = vpop.f32.mrb[0].mxu0
        %1932 = vmatprep.mubr.f32.mxu0 0.0
        %1933 = vmatmul.mubr.f32.gmra.mrb[0].mxu0 %v1762
        %v1934 = vpop.f32.mrb[0].mxu0
        %v1935 = vadd.f32 0.0, %v1934
        %v1936 = vpop.f32.mrb[0].mxu0
        %1937 = vmatprep.mubr.f32.mxu0 0.0
        %1938 = vmatmul.mubr.f32.gmra.mrb[0].mxu0 %v1764
        %v1939 = vpop.f32.mrb[0].mxu0
        %v1940 = vadd.f32 0.0, %v1939
        %v1941 = vpop.f32.mrb[0].mxu0
        %1942 = vmatprep.mubr.f32.mxu0 0.0
        %1943 = vmatmul.mubr.f32.gmra.mrb[0].mxu0 %v1766
        %v1944 = vpop.f32.mrb[0].mxu0
        %v1945 = vadd.f32 0.0, %v1944
        %v1946 = vpop.f32.mrb[0].mxu0
        %1947 = vmatprep.mubr.f32.mxu0 0.0
        %1948 = vmatmul.mubr.f32.gmra.mrb[0].mxu0 %v1768
        %v1949 = vpop.f32.mrb[0].mxu0
        %v1950 = vadd.f32 0.0, %v1949
        %v1951 = vpop.f32.mrb[0].mxu0
        %1952 = vmatprep.mubr.f32.mxu0 0.0
        %1953 = vmatmul.mubr.f32.gmra.mrb[0].mxu0 %v1770
        %v1954 = vpop.f32.mrb[0].mxu0
        %v1955 = vadd.f32 0.0, %v1954
        %v1956 = vpop.f32.mrb[0].mxu0
        %1957 = vmatprep.mubr.f32.mxu0 0.0
        %1958 = vmatmul.mubr.f32.gmra.mrb[0].mxu0 %v1772
        %v1959 = vpop.f32.mrb[0].mxu0
        %v1960 = vadd.f32 0.0, %v1959
        %v1961 = vpop.f32.mrb[0].mxu0
        %1962 = vmatprep.mubr.f32.mxu0 0.0
        %1963 = vmatmul.mubr.f32.gmra.mrb[0].mxu0 %v1774
        %v1964 = vpop.f32.mrb[0].mxu0
        %v1965 = vadd.f32 0.0, %v1964
        %v1966 = vpop.f32.mrb[0].mxu0
        %1967 = vmatprep.mubr.f32.mxu0 0.0
        %1968 = vmatmul.mubr.f32.gmra.mrb[0].mxu0 %v1776
        %v1969 = vpop.f32.mrb[0].mxu0
        %v1970 = vadd.f32 0.0, %v1969
        %v1971 = vpop.f32.mrb[0].mxu0
        %1972 = vmatprep.mubr.f32.mxu0 0.0
        %1973 = vmatmul.mubr.f32.gmra.mrb[0].mxu0 %v1778
        %v1974 = vpop.f32.mrb[0].mxu0
        %v1975 = vadd.f32 0.0, %v1974
        %v1976 = vpop.f32.mrb[0].mxu0
        %1977 = vmatprep.mubr.f32.mxu0 0.0
        %1978 = vmatmul.mubr.f32.gmra.mrb[0].mxu0 %v1780
        %v1979 = vpop.f32.mrb[0].mxu0
        %v1980 = vadd.f32 0.0, %v1979
        %v1981 = vpop.f32.mrb[0].mxu0
        %1982 = vmatprep.mubr.f32.mxu0 0.0
        %1983 = vmatmul.mubr.f32.gmra.mrb[0].mxu0 %v1782
        %v1984 = vpop.f32.mrb[0].mxu0
        %v1985 = vadd.f32 0.0, %v1984
        %v1986 = vpop.f32.mrb[0].mxu0
        %1987 = vmatprep.mubr.f32.mxu0 0.0
        %1988 = vmatmul.mubr.f32.gmra.mrb[0].mxu0 %v1784
        %v1989 = vpop.f32.mrb[0].mxu0
        %v1990 = vadd.f32 0.0, %v1989
        %v1991 = vpop.f32.mrb[0].mxu0
        %1992 = vmatprep.mubr.f32.mxu0 0.0
        %1993 = vmatmul.mubr.f32.gmra.mrb[0].mxu0 %v1786
        %v1994 = vpop.f32.mrb[0].mxu0
        %v1995 = vadd.f32 0.0, %v1994
        %v1996 = vpop.f32.mrb[0].mxu0
        %1997 = vmatprep.mubr.f32.mxu0 0.0
        %1998 = vmatmul.mubr.f32.gmra.mrb[0].mxu0 %v1788
        %v1999 = vpop.f32.mrb[0].mxu0
        %v2000 = vadd.f32 0.0, %v1999
        %v2001 = vpop.f32.mrb[0].mxu0
        %2002 = vmatprep.mubr.f32.mxu0 0.0
        %2003 = vmatmul.mubr.f32.gmra.mrb[0].mxu0 %v1790
        %v2004 = vpop.f32.mrb[0].mxu0
        %v2005 = vadd.f32 0.0, %v2004
        %v2006 = vpop.f32.mrb[0].mxu0
        %2007 = vmatprep.mubr.f32.mxu0 0.0
        %2008 = vmatmul.mubr.f32.gmra.mrb[0].mxu0 %v1792
        %v2009 = vpop.f32.mrb[0].mxu0
        %v2010 = vadd.f32 0.0, %v2009
        %v2011 = vpop.f32.mrb[0].mxu0
        %2012 = vmatprep.mubr.f32.mxu0 0.0
        %2013 = vmatmul.mubr.f32.gmra.mrb[0].mxu0 %v1794
        %v2014 = vpop.f32.mrb[0].mxu0
        %v2015 = vadd.f32 0.0, %v2014
        %v2016 = vpop.f32.mrb[0].mxu0
        %2017 = vmatprep.mubr.f32.mxu0 0.0
        %2018 = vmatmul.mubr.f32.gmra.mrb[0].mxu0 %v1796
        %v2019 = vpop.f32.mrb[0].mxu0
        %v2020 = vadd.f32 0.0, %v2019
        %v2021 = vpop.f32.mrb[0].mxu0
        %2022 = vmatprep.mubr.f32.mxu0 0.0
        %2023 = vmatmul.mubr.f32.gmra.mrb[0].mxu0 %v1798
        %v2024 = vpop.f32.mrb[0].mxu0
        %v2025 = vadd.f32 0.0, %v2024
        %v2026 = vpop.f32.mrb[0].mxu0
        %2027 = vdwg.mxu0
        %v2028 = vadd.f32 %v1636, %v1870
        %v2029 = vadd.f32 %v1637, %v1875
        %v2030 = vadd.f32 %v1638, %v1880
        %v2031 = vadd.f32 %v1639, %v1885
        %v2032 = vadd.f32 %v1640, %v1890
        %v2033 = vadd.f32 %v1641, %v1895
        %v2034 = vadd.f32 %v1642, %v1900
        %v2035 = vadd.f32 %v1643, %v1905
        %v2036 = vadd.f32 %v1644, %v1910
        %v2037 = vadd.f32 %v1645, %v1915
        %v2038 = vadd.f32 %v1646, %v1920
        %v2039 = vadd.f32 %v1647, %v1925
        %v2040 = vadd.f32 %v1648, %v1930
        %v2041 = vadd.f32 %v1649, %v1935
        %v2042 = vadd.f32 %v1650, %v1940
        %v2043 = vadd.f32 %v1651, %v1945
        %v2044 = vadd.f32 %v1652, %v1950
        %v2045 = vadd.f32 %v1653, %v1955
        %v2046 = vadd.f32 %v1654, %v1960
        %v2047 = vadd.f32 %v1655, %v1965
        %v2048 = vadd.f32 %v1656, %v1970
        %v2049 = vadd.f32 %v1657, %v1975
        %v2050 = vadd.f32 %v1658, %v1980
        %v2051 = vadd.f32 %v1659, %v1985
        %v2052 = vadd.f32 %v1660, %v1990
        %v2053 = vadd.f32 %v1661, %v1995
        %v2054 = vadd.f32 %v1662, %v2000
        %v2055 = vadd.f32 %v1663, %v2005
        %v2056 = vadd.f32 %v1664, %v2010
        %v2057 = vadd.f32 %v1665, %v2015
        %v2058 = vadd.f32 %v1666, %v2020
        %v2059 = vadd.f32 %v1667, %v2025
        %s2060 = scalar_lea.vmem [#allocation5], 20
        %v2061 = vld [vmem:[%s2060] sm:$0xf]
        %v2062 = vrot.slane %v281, 4
        %v2063 = vrot.slane %v282, 4
        %v2064 = vsel %vm483, %v2062, %v2063
        %v2065 = vrot.slane %v283, 4
        %v2066 = vsel %vm483, %v2063, %v2065
        %v2067 = vrot.slane %v284, 4
        %v2068 = vsel %vm483, %v2065, %v2067
        %v2069 = vrot.slane %v285, 4
        %v2070 = vsel %vm483, %v2067, %v2069
        %v2071 = vrot.slane %v286, 4
        %v2072 = vsel %vm483, %v2069, %v2071
        %v2073 = vrot.slane %v287, 4
        %v2074 = vsel %vm483, %v2071, %v2073
        %v2075 = vrot.slane %v288, 4
        %v2076 = vsel %vm483, %v2073, %v2075
        %v2077 = vrot.slane %v289, 4
        %v2078 = vsel %vm483, %v2075, %v2077
        %v2079 = vrot.slane %v290, 4
        %v2080 = vsel %vm483, %v2077, %v2079
        %v2081 = vrot.slane %v291, 4
        %v2082 = vsel %vm483, %v2079, %v2081
        %v2083 = vrot.slane %v292, 4
        %v2084 = vsel %vm483, %v2081, %v2083
        %v2085 = vrot.slane %v293, 4
        %v2086 = vsel %vm483, %v2083, %v2085
        %v2087 = vrot.slane %v294, 4
        %v2088 = vsel %vm483, %v2085, %v2087
        %v2089 = vrot.slane %v295, 4
        %v2090 = vsel %vm483, %v2087, %v2089
        %v2091 = vrot.slane %v296, 4
        %v2092 = vsel %vm483, %v2089, %v2091
        %v2093 = vrot.slane %v297, 4
        %v2094 = vsel %vm483, %v2091, %v2093
        %v2095 = vrot.slane %v298, 4
        %v2096 = vsel %vm483, %v2093, %v2095
        %v2097 = vrot.slane %v299, 4
        %v2098 = vsel %vm483, %v2095, %v2097
        %v2099 = vrot.slane %v300, 4
        %v2100 = vsel %vm483, %v2097, %v2099
        %v2101 = vrot.slane %v301, 4
        %v2102 = vsel %vm483, %v2099, %v2101
        %v2103 = vrot.slane %v302, 4
        %v2104 = vsel %vm483, %v2101, %v2103
        %v2105 = vrot.slane %v303, 4
        %v2106 = vsel %vm483, %v2103, %v2105
        %v2107 = vrot.slane %v304, 4
        %v2108 = vsel %vm483, %v2105, %v2107
        %v2109 = vrot.slane %v305, 4
        %v2110 = vsel %vm483, %v2107, %v2109
        %v2111 = vrot.slane %v306, 4
        %v2112 = vsel %vm483, %v2109, %v2111
        %v2113 = vrot.slane %v307, 4
        %v2114 = vsel %vm483, %v2111, %v2113
        %v2115 = vrot.slane %v308, 4
        %v2116 = vsel %vm483, %v2113, %v2115
        %v2117 = vrot.slane %v309, 4
        %v2118 = vsel %vm483, %v2115, %v2117
        %v2119 = vrot.slane %v310, 4
        %v2120 = vsel %vm483, %v2117, %v2119
        %v2121 = vrot.slane %v311, 4
        %v2122 = vsel %vm483, %v2119, %v2121
        %v2123 = vrot.slane %v312, 4
        %v2124 = vsel %vm483, %v2121, %v2123
        %v2125 = vrot.slane %v313, 4
        %v2126 = vsel %vm483, %v2123, %v2125
        %v2127 = vsel %vm418, %v2064, 0
        %v2129 = vsel %vm418, %v2066, 0
        %v2131 = vsel %vm418, %v2068, 0
        %v2133 = vsel %vm418, %v2070, 0
        %v2135 = vsel %vm418, %v2072, 0
        %v2137 = vsel %vm418, %v2074, 0
        %v2139 = vsel %vm418, %v2076, 0
        %v2141 = vsel %vm418, %v2078, 0
        %v2143 = vsel %vm418, %v2080, 0
        %v2145 = vsel %vm418, %v2082, 0
        %v2147 = vsel %vm418, %v2084, 0
        %v2149 = vsel %vm418, %v2086, 0
        %v2151 = vsel %vm418, %v2088, 0
        %v2153 = vsel %vm418, %v2090, 0
        %v2155 = vsel %vm418, %v2092, 0
        %v2157 = vsel %vm418, %v2094, 0
        %v2159 = vsel %vm418, %v2096, 0
        %v2161 = vsel %vm418, %v2098, 0
        %v2163 = vsel %vm418, %v2100, 0
        %v2165 = vsel %vm418, %v2102, 0
        %v2167 = vsel %vm418, %v2104, 0
        %v2169 = vsel %vm418, %v2106, 0
        %v2171 = vsel %vm418, %v2108, 0
        %v2173 = vsel %vm418, %v2110, 0
        %v2175 = vsel %vm418, %v2112, 0
        %v2177 = vsel %vm418, %v2114, 0
        %v2179 = vsel %vm418, %v2116, 0
        %v2181 = vsel %vm418, %v2118, 0
        %v2183 = vsel %vm418, %v2120, 0
        %v2185 = vsel %vm418, %v2122, 0
        %v2187 = vsel %vm418, %v2124, 0
        %v2189 = vsel %vm418, %v2126, 0
        %v2192 = vsel %vm483, %v2061, 0
        %2194 = vmatprep.subr.mxu0 0.0
        %2195 = vmatpush1.msra.mxu0 %v2192
        %2196 = vmatprep.subr.mxu0 0.0
        %2197 = vmatpush1.msra.mxu0 0.0
        %2198 = vmatprep.subr.mxu0 0.0
        %2199 = vmatpush1.msra.mxu0 0.0
        %2200 = vmatprep.subr.mxu0 0.0
        %2201 = vmatpush1.msra.mxu0 0.0
        %2202 = vmatprep.subr.mxu0 0.0
        %2203 = vmatpush1.msra.mxu0 0.0
        %2204 = vmatprep.subr.mxu0 0.0
        %2205 = vmatpush1.msra.mxu0 0.0
        %2206 = vmatprep.subr.mxu0 0.0
        %2207 = vmatpush1.msra.mxu0 0.0
        %2208 = vmatprep.subr.mxu0 0.0
        %2209 = vmatpush1.msra.mxu0 0.0
        %2210 = vmatprep.subr.mxu0 0.0
        %2211 = vmatpush1.msra.mxu0 0.0
        %2212 = vmatprep.subr.mxu0 0.0
        %2213 = vmatpush1.msra.mxu0 0.0
        %2214 = vmatprep.subr.mxu0 0.0
        %2215 = vmatpush1.msra.mxu0 0.0
        %2216 = vmatprep.subr.mxu0 0.0
        %2217 = vmatpush1.msra.mxu0 0.0
        %2218 = vmatprep.subr.mxu0 0.0
        %2219 = vmatpush1.msra.mxu0 0.0
        %2220 = vmatprep.subr.mxu0 0.0
        %2221 = vmatpush1.msra.mxu0 0.0
        %2222 = vmatprep.subr.mxu0 0.0
        %2223 = vmatpush1.msra.mxu0 0.0
        %2224 = vmatprep.subr.mxu0 0.0
        %2225 = vmatpush1.msra.mxu0 0.0
        %2226 = vmatprep.subr.mxu0 0.0
        %2227 = vmatpush1.msra.mxu0 0.0
        %2228 = vmatprep.subr.mxu0 0.0
        %2229 = vmatpush1.msra.mxu0 0.0
        %2230 = vmatprep.subr.mxu0 0.0
        %2231 = vmatpush1.msra.mxu0 0.0
        %2232 = vmatprep.subr.mxu0 0.0
        %2233 = vmatpush1.msra.mxu0 0.0
        %2234 = vmatprep.subr.mxu0 0.0
        %2235 = vmatpush1.msra.mxu0 0.0
        %2236 = vmatprep.subr.mxu0 0.0
        %2237 = vmatpush1.msra.mxu0 0.0
        %2238 = vmatprep.subr.mxu0 0.0
        %2239 = vmatpush1.msra.mxu0 0.0
        %2240 = vmatprep.subr.mxu0 0.0
        %2241 = vmatpush1.msra.mxu0 0.0
        %2242 = vmatprep.subr.mxu0 0.0
        %2243 = vmatpush1.msra.mxu0 0.0
        %2244 = vmatprep.subr.mxu0 0.0
        %2245 = vmatpush1.msra.mxu0 0.0
        %2246 = vmatprep.subr.mxu0 0.0
        %2247 = vmatpush1.msra.mxu0 0.0
        %2248 = vmatprep.subr.mxu0 0.0
        %2249 = vmatpush1.msra.mxu0 0.0
        %2250 = vmatprep.subr.mxu0 0.0
        %2251 = vmatpush1.msra.mxu0 0.0
        %2252 = vmatprep.subr.mxu0 0.0
        %2253 = vmatpush1.msra.mxu0 0.0
        %2254 = vmatprep.subr.mxu0 0.0
        %2255 = vmatpush1.msra.mxu0 0.0
        %2256 = vmatprep.subr.mxu0 0.0
        %2257 = vmatpush1.msra.mxu0 0.0
        %2258 = vmatprep.mubr.f32.mxu0 0.0
        %2259 = vmatmul.mubr.f32.gmra.mrb[0].mxu0 %v2127
        %v2260 = vpop.f32.mrb[0].mxu0
        %v2261 = vadd.f32 0.0, %v2260
        %v2262 = vpop.f32.mrb[0].mxu0
        %2263 = vmatprep.mubr.f32.mxu0 0.0
        %2264 = vmatmul.mubr.f32.gmra.mrb[0].mxu0 %v2129
        %v2265 = vpop.f32.mrb[0].mxu0
        %v2266 = vadd.f32 0.0, %v2265
        %v2267 = vpop.f32.mrb[0].mxu0
        %2268 = vmatprep.mubr.f32.mxu0 0.0
        %2269 = vmatmul.mubr.f32.gmra.mrb[0].mxu0 %v2131
        %v2270 = vpop.f32.mrb[0].mxu0
        %v2271 = vadd.f32 0.0, %v2270
        %v2272 = vpop.f32.mrb[0].mxu0
        %2273 = vmatprep.mubr.f32.mxu0 0.0
        %2274 = vmatmul.mubr.f32.gmra.mrb[0].mxu0 %v2133
        %v2275 = vpop.f32.mrb[0].mxu0
        %v2276 = vadd.f32 0.0, %v2275
        %v2277 = vpop.f32.mrb[0].mxu0
        %2278 = vmatprep.mubr.f32.mxu0 0.0
        %2279 = vmatmul.mubr.f32.gmra.mrb[0].mxu0 %v2135
        %v2280 = vpop.f32.mrb[0].mxu0
        %v2281 = vadd.f32 0.0, %v2280
        %v2282 = vpop.f32.mrb[0].mxu0
        %2283 = vmatprep.mubr.f32.mxu0 0.0
        %2284 = vmatmul.mubr.f32.gmra.mrb[0].mxu0 %v2137
        %v2285 = vpop.f32.mrb[0].mxu0
        %v2286 = vadd.f32 0.0, %v2285
        %v2287 = vpop.f32.mrb[0].mxu0
        %2288 = vmatprep.mubr.f32.mxu0 0.0
        %2289 = vmatmul.mubr.f32.gmra.mrb[0].mxu0 %v2139
        %v2290 = vpop.f32.mrb[0].mxu0
        %v2291 = vadd.f32 0.0, %v2290
        %v2292 = vpop.f32.mrb[0].mxu0
        %2293 = vmatprep.mubr.f32.mxu0 0.0
        %2294 = vmatmul.mubr.f32.gmra.mrb[0].mxu0 %v2141
        %v2295 = vpop.f32.mrb[0].mxu0
        %v2296 = vadd.f32 0.0, %v2295
        %v2297 = vpop.f32.mrb[0].mxu0
        %2298 = vmatprep.mubr.f32.mxu0 0.0
        %2299 = vmatmul.mubr.f32.gmra.mrb[0].mxu0 %v2143
        %v2300 = vpop.f32.mrb[0].mxu0
        %v2301 = vadd.f32 0.0, %v2300
        %v2302 = vpop.f32.mrb[0].mxu0
        %2303 = vmatprep.mubr.f32.mxu0 0.0
        %2304 = vmatmul.mubr.f32.gmra.mrb[0].mxu0 %v2145
        %v2305 = vpop.f32.mrb[0].mxu0
        %v2306 = vadd.f32 0.0, %v2305
        %v2307 = vpop.f32.mrb[0].mxu0
        %2308 = vmatprep.mubr.f32.mxu0 0.0
        %2309 = vmatmul.mubr.f32.gmra.mrb[0].mxu0 %v2147
        %v2310 = vpop.f32.mrb[0].mxu0
        %v2311 = vadd.f32 0.0, %v2310
        %v2312 = vpop.f32.mrb[0].mxu0
        %2313 = vmatprep.mubr.f32.mxu0 0.0
        %2314 = vmatmul.mubr.f32.gmra.mrb[0].mxu0 %v2149
        %v2315 = vpop.f32.mrb[0].mxu0
        %v2316 = vadd.f32 0.0, %v2315
        %v2317 = vpop.f32.mrb[0].mxu0
        %2318 = vmatprep.mubr.f32.mxu0 0.0
        %2319 = vmatmul.mubr.f32.gmra.mrb[0].mxu0 %v2151
        %v2320 = vpop.f32.mrb[0].mxu0
        %v2321 = vadd.f32 0.0, %v2320
        %v2322 = vpop.f32.mrb[0].mxu0
        %2323 = vmatprep.mubr.f32.mxu0 0.0
        %2324 = vmatmul.mubr.f32.gmra.mrb[0].mxu0 %v2153
        %v2325 = vpop.f32.mrb[0].mxu0
        %v2326 = vadd.f32 0.0, %v2325
        %v2327 = vpop.f32.mrb[0].mxu0
        %2328 = vmatprep.mubr.f32.mxu0 0.0
        %2329 = vmatmul.mubr.f32.gmra.mrb[0].mxu0 %v2155
        %v2330 = vpop.f32.mrb[0].mxu0
        %v2331 = vadd.f32 0.0, %v2330
        %v2332 = vpop.f32.mrb[0].mxu0
        %2333 = vmatprep.mubr.f32.mxu0 0.0
        %2334 = vmatmul.mubr.f32.gmra.mrb[0].mxu0 %v2157
        %v2335 = vpop.f32.mrb[0].mxu0
        %v2336 = vadd.f32 0.0, %v2335
        %v2337 = vpop.f32.mrb[0].mxu0
        %2338 = vmatprep.mubr.f32.mxu0 0.0
        %2339 = vmatmul.mubr.f32.gmra.mrb[0].mxu0 %v2159
        %v2340 = vpop.f32.mrb[0].mxu0
        %v2341 = vadd.f32 0.0, %v2340
        %v2342 = vpop.f32.mrb[0].mxu0
        %2343 = vmatprep.mubr.f32.mxu0 0.0
        %2344 = vmatmul.mubr.f32.gmra.mrb[0].mxu0 %v2161
        %v2345 = vpop.f32.mrb[0].mxu0
        %v2346 = vadd.f32 0.0, %v2345
        %v2347 = vpop.f32.mrb[0].mxu0
        %2348 = vmatprep.mubr.f32.mxu0 0.0
        %2349 = vmatmul.mubr.f32.gmra.mrb[0].mxu0 %v2163
        %v2350 = vpop.f32.mrb[0].mxu0
        %v2351 = vadd.f32 0.0, %v2350
        %v2352 = vpop.f32.mrb[0].mxu0
        %2353 = vmatprep.mubr.f32.mxu0 0.0
        %2354 = vmatmul.mubr.f32.gmra.mrb[0].mxu0 %v2165
        %v2355 = vpop.f32.mrb[0].mxu0
        %v2356 = vadd.f32 0.0, %v2355
        %v2357 = vpop.f32.mrb[0].mxu0
        %2358 = vmatprep.mubr.f32.mxu0 0.0
        %2359 = vmatmul.mubr.f32.gmra.mrb[0].mxu0 %v2167
        %v2360 = vpop.f32.mrb[0].mxu0
        %v2361 = vadd.f32 0.0, %v2360
        %v2362 = vpop.f32.mrb[0].mxu0
        %2363 = vmatprep.mubr.f32.mxu0 0.0
        %2364 = vmatmul.mubr.f32.gmra.mrb[0].mxu0 %v2169
        %v2365 = vpop.f32.mrb[0].mxu0
        %v2366 = vadd.f32 0.0, %v2365
        %v2367 = vpop.f32.mrb[0].mxu0
        %2368 = vmatprep.mubr.f32.mxu0 0.0
        %2369 = vmatmul.mubr.f32.gmra.mrb[0].mxu0 %v2171
        %v2370 = vpop.f32.mrb[0].mxu0
        %v2371 = vadd.f32 0.0, %v2370
        %v2372 = vpop.f32.mrb[0].mxu0
        %2373 = vmatprep.mubr.f32.mxu0 0.0
        %2374 = vmatmul.mubr.f32.gmra.mrb[0].mxu0 %v2173
        %v2375 = vpop.f32.mrb[0].mxu0
        %v2376 = vadd.f32 0.0, %v2375
        %v2377 = vpop.f32.mrb[0].mxu0
        %2378 = vmatprep.mubr.f32.mxu0 0.0
        %2379 = vmatmul.mubr.f32.gmra.mrb[0].mxu0 %v2175
        %v2380 = vpop.f32.mrb[0].mxu0
        %v2381 = vadd.f32 0.0, %v2380
        %v2382 = vpop.f32.mrb[0].mxu0
        %2383 = vmatprep.mubr.f32.mxu0 0.0
        %2384 = vmatmul.mubr.f32.gmra.mrb[0].mxu0 %v2177
        %v2385 = vpop.f32.mrb[0].mxu0
        %v2386 = vadd.f32 0.0, %v2385
        %v2387 = vpop.f32.mrb[0].mxu0
        %2388 = vmatprep.mubr.f32.mxu0 0.0
        %2389 = vmatmul.mubr.f32.gmra.mrb[0].mxu0 %v2179
        %v2390 = vpop.f32.mrb[0].mxu0
        %v2391 = vadd.f32 0.0, %v2390
        %v2392 = vpop.f32.mrb[0].mxu0
        %2393 = vmatprep.mubr.f32.mxu0 0.0
        %2394 = vmatmul.mubr.f32.gmra.mrb[0].mxu0 %v2181
        %v2395 = vpop.f32.mrb[0].mxu0
        %v2396 = vadd.f32 0.0, %v2395
        %v2397 = vpop.f32.mrb[0].mxu0
        %2398 = vmatprep.mubr.f32.mxu0 0.0
        %2399 = vmatmul.mubr.f32.gmra.mrb[0].mxu0 %v2183
        %v2400 = vpop.f32.mrb[0].mxu0
        %v2401 = vadd.f32 0.0, %v2400
        %v2402 = vpop.f32.mrb[0].mxu0
        %2403 = vmatprep.mubr.f32.mxu0 0.0
        %2404 = vmatmul.mubr.f32.gmra.mrb[0].mxu0 %v2185
        %v2405 = vpop.f32.mrb[0].mxu0
        %v2406 = vadd.f32 0.0, %v2405
        %v2407 = vpop.f32.mrb[0].mxu0
        %2408 = vmatprep.mubr.f32.mxu0 0.0
        %2409 = vmatmul.mubr.f32.gmra.mrb[0].mxu0 %v2187
        %v2410 = vpop.f32.mrb[0].mxu0
        %v2411 = vadd.f32 0.0, %v2410
        %v2412 = vpop.f32.mrb[0].mxu0
        %2413 = vmatprep.mubr.f32.mxu0 0.0
        %2414 = vmatmul.mubr.f32.gmra.mrb[0].mxu0 %v2189
        %v2415 = vpop.f32.mrb[0].mxu0
        %v2416 = vadd.f32 0.0, %v2415
        %v2417 = vpop.f32.mrb[0].mxu0
        %2418 = vdwg.mxu0
        %v2419 = vadd.f32 %v2028, %v2261
        %v2420 = vadd.f32 %v2029, %v2266
        %v2421 = vadd.f32 %v2030, %v2271
        %v2422 = vadd.f32 %v2031, %v2276
        %v2423 = vadd.f32 %v2032, %v2281
        %v2424 = vadd.f32 %v2033, %v2286
        %v2425 = vadd.f32 %v2034, %v2291
        %v2426 = vadd.f32 %v2035, %v2296
        %v2427 = vadd.f32 %v2036, %v2301
        %v2428 = vadd.f32 %v2037, %v2306
        %v2429 = vadd.f32 %v2038, %v2311
        %v2430 = vadd.f32 %v2039, %v2316
        %v2431 = vadd.f32 %v2040, %v2321
        %v2432 = vadd.f32 %v2041, %v2326
        %v2433 = vadd.f32 %v2042, %v2331
        %v2434 = vadd.f32 %v2043, %v2336
        %v2435 = vadd.f32 %v2044, %v2341
        %v2436 = vadd.f32 %v2045, %v2346
        %v2437 = vadd.f32 %v2046, %v2351
        %v2438 = vadd.f32 %v2047, %v2356
        %v2439 = vadd.f32 %v2048, %v2361
        %v2440 = vadd.f32 %v2049, %v2366
        %v2441 = vadd.f32 %v2050, %v2371
        %v2442 = vadd.f32 %v2051, %v2376
        %v2443 = vadd.f32 %v2052, %v2381
        %v2444 = vadd.f32 %v2053, %v2386
        %v2445 = vadd.f32 %v2054, %v2391
        %v2446 = vadd.f32 %v2055, %v2396
        %v2447 = vadd.f32 %v2056, %v2401
        %v2448 = vadd.f32 %v2057, %v2406
        %v2449 = vadd.f32 %v2058, %v2411
        %v2450 = vadd.f32 %v2059, %v2416
        %s2451 = scalar_lea.vmem [#allocation5], 24
        %v2452 = vld [vmem:[%s2451] sm:$0xf]
        %v2455 = vrot.slane %v314, 4
        %v2456 = vsel %vm483, %v2125, %v2455
        %v2457 = vrot.slane %v315, 4
        %v2458 = vsel %vm483, %v2455, %v2457
        %v2459 = vsel %vm418, %v2456, 0
        %v2461 = vsel %vm418, %v2458, 0
        %v2464 = vsel %vm483, %v2452, 0
        %2466 = vmatprep.subr.mxu0 0.0
        %2467 = vmatpush1.msra.mxu0 %v2464
        %2468 = vmatprep.subr.mxu0 0.0
        %2469 = vmatpush1.msra.mxu0 0.0
        %2470 = vmatprep.subr.mxu0 0.0
        %2471 = vmatpush1.msra.mxu0 0.0
        %2472 = vmatprep.subr.mxu0 0.0
        %2473 = vmatpush1.msra.mxu0 0.0
        %2474 = vmatprep.subr.mxu0 0.0
        %2475 = vmatpush1.msra.mxu0 0.0
        %2476 = vmatprep.subr.mxu0 0.0
        %2477 = vmatpush1.msra.mxu0 0.0
        %2478 = vmatprep.subr.mxu0 0.0
        %2479 = vmatpush1.msra.mxu0 0.0
        %2480 = vmatprep.subr.mxu0 0.0
        %2481 = vmatpush1.msra.mxu0 0.0
        %2482 = vmatprep.subr.mxu0 0.0
        %2483 = vmatpush1.msra.mxu0 0.0
        %2484 = vmatprep.subr.mxu0 0.0
        %2485 = vmatpush1.msra.mxu0 0.0
        %2486 = vmatprep.subr.mxu0 0.0
        %2487 = vmatpush1.msra.mxu0 0.0
        %2488 = vmatprep.subr.mxu0 0.0
        %2489 = vmatpush1.msra.mxu0 0.0
        %2490 = vmatprep.subr.mxu0 0.0
        %2491 = vmatpush1.msra.mxu0 0.0
        %2492 = vmatprep.subr.mxu0 0.0
        %2493 = vmatpush1.msra.mxu0 0.0
        %2494 = vmatprep.subr.mxu0 0.0
        %2495 = vmatpush1.msra.mxu0 0.0
        %2496 = vmatprep.subr.mxu0 0.0
        %2497 = vmatpush1.msra.mxu0 0.0
        %2498 = vmatprep.subr.mxu0 0.0
        %2499 = vmatpush1.msra.mxu0 0.0
        %2500 = vmatprep.subr.mxu0 0.0
        %2501 = vmatpush1.msra.mxu0 0.0
        %2502 = vmatprep.subr.mxu0 0.0
        %2503 = vmatpush1.msra.mxu0 0.0
        %2504 = vmatprep.subr.mxu0 0.0
        %2505 = vmatpush1.msra.mxu0 0.0
        %2506 = vmatprep.subr.mxu0 0.0
        %2507 = vmatpush1.msra.mxu0 0.0
        %2508 = vmatprep.subr.mxu0 0.0
        %2509 = vmatpush1.msra.mxu0 0.0
        %2510 = vmatprep.subr.mxu0 0.0
        %2511 = vmatpush1.msra.mxu0 0.0
        %2512 = vmatprep.subr.mxu0 0.0
        %2513 = vmatpush1.msra.mxu0 0.0
        %2514 = vmatprep.subr.mxu0 0.0
        %2515 = vmatpush1.msra.mxu0 0.0
        %2516 = vmatprep.subr.mxu0 0.0
        %2517 = vmatpush1.msra.mxu0 0.0
        %2518 = vmatprep.subr.mxu0 0.0
        %2519 = vmatpush1.msra.mxu0 0.0
        %2520 = vmatprep.subr.mxu0 0.0
        %2521 = vmatpush1.msra.mxu0 0.0
        %2522 = vmatprep.subr.mxu0 0.0
        %2523 = vmatpush1.msra.mxu0 0.0
        %2524 = vmatprep.subr.mxu0 0.0
        %2525 = vmatpush1.msra.mxu0 0.0
        %2526 = vmatprep.subr.mxu0 0.0
        %2527 = vmatpush1.msra.mxu0 0.0
        %2528 = vmatprep.subr.mxu0 0.0
        %2529 = vmatpush1.msra.mxu0 0.0
        %2530 = vmatprep.mubr.f32.mxu0 0.0
        %2531 = vmatmul.mubr.f32.gmra.mrb[0].mxu0 %v2131
        %v2532 = vpop.f32.mrb[0].mxu0
        %v2533 = vadd.f32 0.0, %v2532
        %v2534 = vpop.f32.mrb[0].mxu0
        %2535 = vmatprep.mubr.f32.mxu0 0.0
        %2536 = vmatmul.mubr.f32.gmra.mrb[0].mxu0 %v2133
        %v2537 = vpop.f32.mrb[0].mxu0
        %v2538 = vadd.f32 0.0, %v2537
        %v2539 = vpop.f32.mrb[0].mxu0
        %2540 = vmatprep.mubr.f32.mxu0 0.0
        %2541 = vmatmul.mubr.f32.gmra.mrb[0].mxu0 %v2135
        %v2542 = vpop.f32.mrb[0].mxu0
        %v2543 = vadd.f32 0.0, %v2542
        %v2544 = vpop.f32.mrb[0].mxu0
        %2545 = vmatprep.mubr.f32.mxu0 0.0
        %2546 = vmatmul.mubr.f32.gmra.mrb[0].mxu0 %v2137
        %v2547 = vpop.f32.mrb[0].mxu0
        %v2548 = vadd.f32 0.0, %v2547
        %v2549 = vpop.f32.mrb[0].mxu0
        %2550 = vmatprep.mubr.f32.mxu0 0.0
        %2551 = vmatmul.mubr.f32.gmra.mrb[0].mxu0 %v2139
        %v2552 = vpop.f32.mrb[0].mxu0
        %v2553 = vadd.f32 0.0, %v2552
        %v2554 = vpop.f32.mrb[0].mxu0
        %2555 = vmatprep.mubr.f32.mxu0 0.0
        %2556 = vmatmul.mubr.f32.gmra.mrb[0].mxu0 %v2141
        %v2557 = vpop.f32.mrb[0].mxu0
        %v2558 = vadd.f32 0.0, %v2557
        %v2559 = vpop.f32.mrb[0].mxu0
        %2560 = vmatprep.mubr.f32.mxu0 0.0
        %2561 = vmatmul.mubr.f32.gmra.mrb[0].mxu0 %v2143
        %v2562 = vpop.f32.mrb[0].mxu0
        %v2563 = vadd.f32 0.0, %v2562
        %v2564 = vpop.f32.mrb[0].mxu0
        %2565 = vmatprep.mubr.f32.mxu0 0.0
        %2566 = vmatmul.mubr.f32.gmra.mrb[0].mxu0 %v2145
        %v2567 = vpop.f32.mrb[0].mxu0
        %v2568 = vadd.f32 0.0, %v2567
        %v2569 = vpop.f32.mrb[0].mxu0
        %2570 = vmatprep.mubr.f32.mxu0 0.0
        %2571 = vmatmul.mubr.f32.gmra.mrb[0].mxu0 %v2147
        %v2572 = vpop.f32.mrb[0].mxu0
        %v2573 = vadd.f32 0.0, %v2572
        %v2574 = vpop.f32.mrb[0].mxu0
        %2575 = vmatprep.mubr.f32.mxu0 0.0
        %2576 = vmatmul.mubr.f32.gmra.mrb[0].mxu0 %v2149
        %v2577 = vpop.f32.mrb[0].mxu0
        %v2578 = vadd.f32 0.0, %v2577
        %v2579 = vpop.f32.mrb[0].mxu0
        %2580 = vmatprep.mubr.f32.mxu0 0.0
        %2581 = vmatmul.mubr.f32.gmra.mrb[0].mxu0 %v2151
        %v2582 = vpop.f32.mrb[0].mxu0
        %v2583 = vadd.f32 0.0, %v2582
        %v2584 = vpop.f32.mrb[0].mxu0
        %2585 = vmatprep.mubr.f32.mxu0 0.0
        %2586 = vmatmul.mubr.f32.gmra.mrb[0].mxu0 %v2153
        %v2587 = vpop.f32.mrb[0].mxu0
        %v2588 = vadd.f32 0.0, %v2587
        %v2589 = vpop.f32.mrb[0].mxu0
        %2590 = vmatprep.mubr.f32.mxu0 0.0
        %2591 = vmatmul.mubr.f32.gmra.mrb[0].mxu0 %v2155
        %v2592 = vpop.f32.mrb[0].mxu0
        %v2593 = vadd.f32 0.0, %v2592
        %v2594 = vpop.f32.mrb[0].mxu0
        %2595 = vmatprep.mubr.f32.mxu0 0.0
        %2596 = vmatmul.mubr.f32.gmra.mrb[0].mxu0 %v2157
        %v2597 = vpop.f32.mrb[0].mxu0
        %v2598 = vadd.f32 0.0, %v2597
        %v2599 = vpop.f32.mrb[0].mxu0
        %2600 = vmatprep.mubr.f32.mxu0 0.0
        %2601 = vmatmul.mubr.f32.gmra.mrb[0].mxu0 %v2159
        %v2602 = vpop.f32.mrb[0].mxu0
        %v2603 = vadd.f32 0.0, %v2602
        %v2604 = vpop.f32.mrb[0].mxu0
        %2605 = vmatprep.mubr.f32.mxu0 0.0
        %2606 = vmatmul.mubr.f32.gmra.mrb[0].mxu0 %v2161
        %v2607 = vpop.f32.mrb[0].mxu0
        %v2608 = vadd.f32 0.0, %v2607
        %v2609 = vpop.f32.mrb[0].mxu0
        %2610 = vmatprep.mubr.f32.mxu0 0.0
        %2611 = vmatmul.mubr.f32.gmra.mrb[0].mxu0 %v2163
        %v2612 = vpop.f32.mrb[0].mxu0
        %v2613 = vadd.f32 0.0, %v2612
        %v2614 = vpop.f32.mrb[0].mxu0
        %2615 = vmatprep.mubr.f32.mxu0 0.0
        %2616 = vmatmul.mubr.f32.gmra.mrb[0].mxu0 %v2165
        %v2617 = vpop.f32.mrb[0].mxu0
        %v2618 = vadd.f32 0.0, %v2617
        %v2619 = vpop.f32.mrb[0].mxu0
        %2620 = vmatprep.mubr.f32.mxu0 0.0
        %2621 = vmatmul.mubr.f32.gmra.mrb[0].mxu0 %v2167
        %v2622 = vpop.f32.mrb[0].mxu0
        %v2623 = vadd.f32 0.0, %v2622
        %v2624 = vpop.f32.mrb[0].mxu0
        %2625 = vmatprep.mubr.f32.mxu0 0.0
        %2626 = vmatmul.mubr.f32.gmra.mrb[0].mxu0 %v2169
        %v2627 = vpop.f32.mrb[0].mxu0
        %v2628 = vadd.f32 0.0, %v2627
        %v2629 = vpop.f32.mrb[0].mxu0
        %2630 = vmatprep.mubr.f32.mxu0 0.0
        %2631 = vmatmul.mubr.f32.gmra.mrb[0].mxu0 %v2171
        %v2632 = vpop.f32.mrb[0].mxu0
        %v2633 = vadd.f32 0.0, %v2632
        %v2634 = vpop.f32.mrb[0].mxu0
        %2635 = vmatprep.mubr.f32.mxu0 0.0
        %2636 = vmatmul.mubr.f32.gmra.mrb[0].mxu0 %v2173
        %v2637 = vpop.f32.mrb[0].mxu0
        %v2638 = vadd.f32 0.0, %v2637
        %v2639 = vpop.f32.mrb[0].mxu0
        %2640 = vmatprep.mubr.f32.mxu0 0.0
        %2641 = vmatmul.mubr.f32.gmra.mrb[0].mxu0 %v2175
        %v2642 = vpop.f32.mrb[0].mxu0
        %v2643 = vadd.f32 0.0, %v2642
        %v2644 = vpop.f32.mrb[0].mxu0
        %2645 = vmatprep.mubr.f32.mxu0 0.0
        %2646 = vmatmul.mubr.f32.gmra.mrb[0].mxu0 %v2177
        %v2647 = vpop.f32.mrb[0].mxu0
        %v2648 = vadd.f32 0.0, %v2647
        %v2649 = vpop.f32.mrb[0].mxu0
        %2650 = vmatprep.mubr.f32.mxu0 0.0
        %2651 = vmatmul.mubr.f32.gmra.mrb[0].mxu0 %v2179
        %v2652 = vpop.f32.mrb[0].mxu0
        %v2653 = vadd.f32 0.0, %v2652
        %v2654 = vpop.f32.mrb[0].mxu0
        %2655 = vmatprep.mubr.f32.mxu0 0.0
        %2656 = vmatmul.mubr.f32.gmra.mrb[0].mxu0 %v2181
        %v2657 = vpop.f32.mrb[0].mxu0
        %v2658 = vadd.f32 0.0, %v2657
        %v2659 = vpop.f32.mrb[0].mxu0
        %2660 = vmatprep.mubr.f32.mxu0 0.0
        %2661 = vmatmul.mubr.f32.gmra.mrb[0].mxu0 %v2183
        %v2662 = vpop.f32.mrb[0].mxu0
        %v2663 = vadd.f32 0.0, %v2662
        %v2664 = vpop.f32.mrb[0].mxu0
        %2665 = vmatprep.mubr.f32.mxu0 0.0
        %2666 = vmatmul.mubr.f32.gmra.mrb[0].mxu0 %v2185
        %v2667 = vpop.f32.mrb[0].mxu0
        %v2668 = vadd.f32 0.0, %v2667
        %v2669 = vpop.f32.mrb[0].mxu0
        %2670 = vmatprep.mubr.f32.mxu0 0.0
        %2671 = vmatmul.mubr.f32.gmra.mrb[0].mxu0 %v2187
        %v2672 = vpop.f32.mrb[0].mxu0
        %v2673 = vadd.f32 0.0, %v2672
        %v2674 = vpop.f32.mrb[0].mxu0
        %2675 = vmatprep.mubr.f32.mxu0 0.0
        %2676 = vmatmul.mubr.f32.gmra.mrb[0].mxu0 %v2189
        %v2677 = vpop.f32.mrb[0].mxu0
        %v2678 = vadd.f32 0.0, %v2677
        %v2679 = vpop.f32.mrb[0].mxu0
        %2680 = vmatprep.mubr.f32.mxu0 0.0
        %2681 = vmatmul.mubr.f32.gmra.mrb[0].mxu0 %v2459
        %v2682 = vpop.f32.mrb[0].mxu0
        %v2683 = vadd.f32 0.0, %v2682
        %v2684 = vpop.f32.mrb[0].mxu0
        %2685 = vmatprep.mubr.f32.mxu0 0.0
        %2686 = vmatmul.mubr.f32.gmra.mrb[0].mxu0 %v2461
        %v2687 = vpop.f32.mrb[0].mxu0
        %v2688 = vadd.f32 0.0, %v2687
        %v2689 = vpop.f32.mrb[0].mxu0
        %2690 = vdwg.mxu0
        %v2691 = vadd.f32 %v2419, %v2533
        %v2692 = vadd.f32 %v2420, %v2538
        %v2693 = vadd.f32 %v2421, %v2543
        %v2694 = vadd.f32 %v2422, %v2548
        %v2695 = vadd.f32 %v2423, %v2553
        %v2696 = vadd.f32 %v2424, %v2558
        %v2697 = vadd.f32 %v2425, %v2563
        %v2698 = vadd.f32 %v2426, %v2568
        %v2699 = vadd.f32 %v2427, %v2573
        %v2700 = vadd.f32 %v2428, %v2578
        %v2701 = vadd.f32 %v2429, %v2583
        %v2702 = vadd.f32 %v2430, %v2588
        %v2703 = vadd.f32 %v2431, %v2593
        %v2704 = vadd.f32 %v2432, %v2598
        %v2705 = vadd.f32 %v2433, %v2603
        %v2706 = vadd.f32 %v2434, %v2608
        %v2707 = vadd.f32 %v2435, %v2613
        %v2708 = vadd.f32 %v2436, %v2618
        %v2709 = vadd.f32 %v2437, %v2623
        %v2710 = vadd.f32 %v2438, %v2628
        %v2711 = vadd.f32 %v2439, %v2633
        %v2712 = vadd.f32 %v2440, %v2638
        %v2713 = vadd.f32 %v2441, %v2643
        %v2714 = vadd.f32 %v2442, %v2648
        %v2715 = vadd.f32 %v2443, %v2653
        %v2716 = vadd.f32 %v2444, %v2658
        %v2717 = vadd.f32 %v2445, %v2663
        %v2718 = vadd.f32 %v2446, %v2668
        %v2719 = vadd.f32 %v2447, %v2673
        %v2720 = vadd.f32 %v2448, %v2678
        %v2721 = vadd.f32 %v2449, %v2683
        %v2722 = vadd.f32 %v2450, %v2688
        %s2723 = scalar_lea.vmem [#allocation5], 28
        %v2724 = vld [vmem:[%s2723] sm:$0xf]
        %vm2725 = vcmask 1042432
        %v2726 = vrot.slane %v283, 5
        %v2727 = vrot.slane %v284, 5
        %v2728 = vsel %vm2725, %v2726, %v2727
        %v2729 = vrot.slane %v285, 5
        %v2730 = vsel %vm2725, %v2727, %v2729
        %v2731 = vrot.slane %v286, 5
        %v2732 = vsel %vm2725, %v2729, %v2731
        %v2733 = vrot.slane %v287, 5
        %v2734 = vsel %vm2725, %v2731, %v2733
        %v2735 = vrot.slane %v288, 5
        %v2736 = vsel %vm2725, %v2733, %v2735
        %v2737 = vrot.slane %v289, 5
        %v2738 = vsel %vm2725, %v2735, %v2737
        %v2739 = vrot.slane %v290, 5
        %v2740 = vsel %vm2725, %v2737, %v2739
        %v2741 = vrot.slane %v291, 5
        %v2742 = vsel %vm2725, %v2739, %v2741
        %v2743 = vrot.slane %v292, 5
        %v2744 = vsel %vm2725, %v2741, %v2743
        %v2745 = vrot.slane %v293, 5
        %v2746 = vsel %vm2725, %v2743, %v2745
        %v2747 = vrot.slane %v294, 5
        %v2748 = vsel %vm2725, %v2745, %v2747
        %v2749 = vrot.slane %v295, 5
        %v2750 = vsel %vm2725, %v2747, %v2749
        %v2751 = vrot.slane %v296, 5
        %v2752 = vsel %vm2725, %v2749, %v2751
        %v2753 = vrot.slane %v297, 5
        %v2754 = vsel %vm2725, %v2751, %v2753
        %v2755 = vrot.slane %v298, 5
        %v2756 = vsel %vm2725, %v2753, %v2755
        %v2757 = vrot.slane %v299, 5
        %v2758 = vsel %vm2725, %v2755, %v2757
        %v2759 = vrot.slane %v300, 5
        %v2760 = vsel %vm2725, %v2757, %v2759
        %v2761 = vrot.slane %v301, 5
        %v2762 = vsel %vm2725, %v2759, %v2761
        %v2763 = vrot.slane %v302, 5
        %v2764 = vsel %vm2725, %v2761, %v2763
        %v2765 = vrot.slane %v303, 5
        %v2766 = vsel %vm2725, %v2763, %v2765
        %v2767 = vrot.slane %v304, 5
        %v2768 = vsel %vm2725, %v2765, %v2767
        %v2769 = vrot.slane %v305, 5
        %v2770 = vsel %vm2725, %v2767, %v2769
        %v2771 = vrot.slane %v306, 5
        %v2772 = vsel %vm2725, %v2769, %v2771
        %v2773 = vrot.slane %v307, 5
        %v2774 = vsel %vm2725, %v2771, %v2773
        %v2775 = vrot.slane %v308, 5
        %v2776 = vsel %vm2725, %v2773, %v2775
        %v2777 = vrot.slane %v309, 5
        %v2778 = vsel %vm2725, %v2775, %v2777
        %v2779 = vrot.slane %v310, 5
        %v2780 = vsel %vm2725, %v2777, %v2779
        %v2781 = vrot.slane %v311, 5
        %v2782 = vsel %vm2725, %v2779, %v2781
        %v2783 = vrot.slane %v312, 5
        %v2784 = vsel %vm2725, %v2781, %v2783
        %v2785 = vrot.slane %v313, 5
        %v2786 = vsel %vm2725, %v2783, %v2785
        %v2787 = vrot.slane %v314, 5
        %v2788 = vsel %vm2725, %v2785, %v2787
        %v2789 = vrot.slane %v315, 5
        %v2790 = vsel %vm2725, %v2787, %v2789
        %v2791 = vsel %vm418, %v2728, 0
        %v2793 = vsel %vm418, %v2730, 0
        %v2795 = vsel %vm418, %v2732, 0
        %v2797 = vsel %vm418, %v2734, 0
        %v2799 = vsel %vm418, %v2736, 0
        %v2801 = vsel %vm418, %v2738, 0
        %v2803 = vsel %vm418, %v2740, 0
        %v2805 = vsel %vm418, %v2742, 0
        %v2807 = vsel %vm418, %v2744, 0
        %v2809 = vsel %vm418, %v2746, 0
        %v2811 = vsel %vm418, %v2748, 0
        %v2813 = vsel %vm418, %v2750, 0
        %v2815 = vsel %vm418, %v2752, 0
        %v2817 = vsel %vm418, %v2754, 0
        %v2819 = vsel %vm418, %v2756, 0
        %v2821 = vsel %vm418, %v2758, 0
        %v2823 = vsel %vm418, %v2760, 0
        %v2825 = vsel %vm418, %v2762, 0
        %v2827 = vsel %vm418, %v2764, 0
        %v2829 = vsel %vm418, %v2766, 0
        %v2831 = vsel %vm418, %v2768, 0
        %v2833 = vsel %vm418, %v2770, 0
        %v2835 = vsel %vm418, %v2772, 0
        %v2837 = vsel %vm418, %v2774, 0
        %v2839 = vsel %vm418, %v2776, 0
        %v2841 = vsel %vm418, %v2778, 0
        %v2843 = vsel %vm418, %v2780, 0
        %v2845 = vsel %vm418, %v2782, 0
        %v2847 = vsel %vm418, %v2784, 0
        %v2849 = vsel %vm418, %v2786, 0
        %v2851 = vsel %vm418, %v2788, 0
        %v2853 = vsel %vm418, %v2790, 0
        %v2856 = vsel %vm483, %v2724, 0
        %2858 = vmatprep.subr.mxu0 0.0
        %2859 = vmatpush1.msra.mxu0 %v2856
        %2860 = vmatprep.subr.mxu0 0.0
        %2861 = vmatpush1.msra.mxu0 0.0
        %2862 = vmatprep.subr.mxu0 0.0
        %2863 = vmatpush1.msra.mxu0 0.0
        %2864 = vmatprep.subr.mxu0 0.0
        %2865 = vmatpush1.msra.mxu0 0.0
        %2866 = vmatprep.subr.mxu0 0.0
        %2867 = vmatpush1.msra.mxu0 0.0
        %2868 = vmatprep.subr.mxu0 0.0
        %2869 = vmatpush1.msra.mxu0 0.0
        %2870 = vmatprep.subr.mxu0 0.0
        %2871 = vmatpush1.msra.mxu0 0.0
        %2872 = vmatprep.subr.mxu0 0.0
        %2873 = vmatpush1.msra.mxu0 0.0
        %2874 = vmatprep.subr.mxu0 0.0
        %2875 = vmatpush1.msra.mxu0 0.0
        %2876 = vmatprep.subr.mxu0 0.0
        %2877 = vmatpush1.msra.mxu0 0.0
        %2878 = vmatprep.subr.mxu0 0.0
        %2879 = vmatpush1.msra.mxu0 0.0
        %2880 = vmatprep.subr.mxu0 0.0
        %2881 = vmatpush1.msra.mxu0 0.0
        %2882 = vmatprep.subr.mxu0 0.0
        %2883 = vmatpush1.msra.mxu0 0.0
        %2884 = vmatprep.subr.mxu0 0.0
        %2885 = vmatpush1.msra.mxu0 0.0
        %2886 = vmatprep.subr.mxu0 0.0
        %2887 = vmatpush1.msra.mxu0 0.0
        %2888 = vmatprep.subr.mxu0 0.0
        %2889 = vmatpush1.msra.mxu0 0.0
        %2890 = vmatprep.subr.mxu0 0.0
        %2891 = vmatpush1.msra.mxu0 0.0
        %2892 = vmatprep.subr.mxu0 0.0
        %2893 = vmatpush1.msra.mxu0 0.0
        %2894 = vmatprep.subr.mxu0 0.0
        %2895 = vmatpush1.msra.mxu0 0.0
        %2896 = vmatprep.subr.mxu0 0.0
        %2897 = vmatpush1.msra.mxu0 0.0
        %2898 = vmatprep.subr.mxu0 0.0
        %2899 = vmatpush1.msra.mxu0 0.0
        %2900 = vmatprep.subr.mxu0 0.0
        %2901 = vmatpush1.msra.mxu0 0.0
        %2902 = vmatprep.subr.mxu0 0.0
        %2903 = vmatpush1.msra.mxu0 0.0
        %2904 = vmatprep.subr.mxu0 0.0
        %2905 = vmatpush1.msra.mxu0 0.0
        %2906 = vmatprep.subr.mxu0 0.0
        %2907 = vmatpush1.msra.mxu0 0.0
        %2908 = vmatprep.subr.mxu0 0.0
        %2909 = vmatpush1.msra.mxu0 0.0
        %2910 = vmatprep.subr.mxu0 0.0
        %2911 = vmatpush1.msra.mxu0 0.0
        %2912 = vmatprep.subr.mxu0 0.0
        %2913 = vmatpush1.msra.mxu0 0.0
        %2914 = vmatprep.subr.mxu0 0.0
        %2915 = vmatpush1.msra.mxu0 0.0
        %2916 = vmatprep.subr.mxu0 0.0
        %2917 = vmatpush1.msra.mxu0 0.0
        %2918 = vmatprep.subr.mxu0 0.0
        %2919 = vmatpush1.msra.mxu0 0.0
        %2920 = vmatprep.subr.mxu0 0.0
        %2921 = vmatpush1.msra.mxu0 0.0
        %2922 = vmatprep.mubr.f32.mxu0 0.0
        %2923 = vmatmul.mubr.f32.gmra.mrb[0].mxu0 %v2791
        %v2924 = vpop.f32.mrb[0].mxu0
        %v2925 = vadd.f32 0.0, %v2924
        %v2926 = vpop.f32.mrb[0].mxu0
        %2927 = vmatprep.mubr.f32.mxu0 0.0
        %2928 = vmatmul.mubr.f32.gmra.mrb[0].mxu0 %v2793
        %v2929 = vpop.f32.mrb[0].mxu0
        %v2930 = vadd.f32 0.0, %v2929
        %v2931 = vpop.f32.mrb[0].mxu0
        %2932 = vmatprep.mubr.f32.mxu0 0.0
        %2933 = vmatmul.mubr.f32.gmra.mrb[0].mxu0 %v2795
        %v2934 = vpop.f32.mrb[0].mxu0
        %v2935 = vadd.f32 0.0, %v2934
        %v2936 = vpop.f32.mrb[0].mxu0
        %2937 = vmatprep.mubr.f32.mxu0 0.0
        %2938 = vmatmul.mubr.f32.gmra.mrb[0].mxu0 %v2797
        %v2939 = vpop.f32.mrb[0].mxu0
        %v2940 = vadd.f32 0.0, %v2939
        %v2941 = vpop.f32.mrb[0].mxu0
        %2942 = vmatprep.mubr.f32.mxu0 0.0
        %2943 = vmatmul.mubr.f32.gmra.mrb[0].mxu0 %v2799
        %v2944 = vpop.f32.mrb[0].mxu0
        %v2945 = vadd.f32 0.0, %v2944
        %v2946 = vpop.f32.mrb[0].mxu0
        %2947 = vmatprep.mubr.f32.mxu0 0.0
        %2948 = vmatmul.mubr.f32.gmra.mrb[0].mxu0 %v2801
        %v2949 = vpop.f32.mrb[0].mxu0
        %v2950 = vadd.f32 0.0, %v2949
        %v2951 = vpop.f32.mrb[0].mxu0
        %2952 = vmatprep.mubr.f32.mxu0 0.0
        %2953 = vmatmul.mubr.f32.gmra.mrb[0].mxu0 %v2803
        %v2954 = vpop.f32.mrb[0].mxu0
        %v2955 = vadd.f32 0.0, %v2954
        %v2956 = vpop.f32.mrb[0].mxu0
        %2957 = vmatprep.mubr.f32.mxu0 0.0
        %2958 = vmatmul.mubr.f32.gmra.mrb[0].mxu0 %v2805
        %v2959 = vpop.f32.mrb[0].mxu0
        %v2960 = vadd.f32 0.0, %v2959
        %v2961 = vpop.f32.mrb[0].mxu0
        %2962 = vmatprep.mubr.f32.mxu0 0.0
        %2963 = vmatmul.mubr.f32.gmra.mrb[0].mxu0 %v2807
        %v2964 = vpop.f32.mrb[0].mxu0
        %v2965 = vadd.f32 0.0, %v2964
        %v2966 = vpop.f32.mrb[0].mxu0
        %2967 = vmatprep.mubr.f32.mxu0 0.0
        %2968 = vmatmul.mubr.f32.gmra.mrb[0].mxu0 %v2809
        %v2969 = vpop.f32.mrb[0].mxu0
        %v2970 = vadd.f32 0.0, %v2969
        %v2971 = vpop.f32.mrb[0].mxu0
        %2972 = vmatprep.mubr.f32.mxu0 0.0
        %2973 = vmatmul.mubr.f32.gmra.mrb[0].mxu0 %v2811
        %v2974 = vpop.f32.mrb[0].mxu0
        %v2975 = vadd.f32 0.0, %v2974
        %v2976 = vpop.f32.mrb[0].mxu0
        %2977 = vmatprep.mubr.f32.mxu0 0.0
        %2978 = vmatmul.mubr.f32.gmra.mrb[0].mxu0 %v2813
        %v2979 = vpop.f32.mrb[0].mxu0
        %v2980 = vadd.f32 0.0, %v2979
        %v2981 = vpop.f32.mrb[0].mxu0
        %2982 = vmatprep.mubr.f32.mxu0 0.0
        %2983 = vmatmul.mubr.f32.gmra.mrb[0].mxu0 %v2815
        %v2984 = vpop.f32.mrb[0].mxu0
        %v2985 = vadd.f32 0.0, %v2984
        %v2986 = vpop.f32.mrb[0].mxu0
        %2987 = vmatprep.mubr.f32.mxu0 0.0
        %2988 = vmatmul.mubr.f32.gmra.mrb[0].mxu0 %v2817
        %v2989 = vpop.f32.mrb[0].mxu0
        %v2990 = vadd.f32 0.0, %v2989
        %v2991 = vpop.f32.mrb[0].mxu0
        %2992 = vmatprep.mubr.f32.mxu0 0.0
        %2993 = vmatmul.mubr.f32.gmra.mrb[0].mxu0 %v2819
        %v2994 = vpop.f32.mrb[0].mxu0
        %v2995 = vadd.f32 0.0, %v2994
        %v2996 = vpop.f32.mrb[0].mxu0
        %2997 = vmatprep.mubr.f32.mxu0 0.0
        %2998 = vmatmul.mubr.f32.gmra.mrb[0].mxu0 %v2821
        %v2999 = vpop.f32.mrb[0].mxu0
        %v3000 = vadd.f32 0.0, %v2999
        %v3001 = vpop.f32.mrb[0].mxu0
        %3002 = vmatprep.mubr.f32.mxu0 0.0
        %3003 = vmatmul.mubr.f32.gmra.mrb[0].mxu0 %v2823
        %v3004 = vpop.f32.mrb[0].mxu0
        %v3005 = vadd.f32 0.0, %v3004
        %v3006 = vpop.f32.mrb[0].mxu0
        %3007 = vmatprep.mubr.f32.mxu0 0.0
        %3008 = vmatmul.mubr.f32.gmra.mrb[0].mxu0 %v2825
        %v3009 = vpop.f32.mrb[0].mxu0
        %v3010 = vadd.f32 0.0, %v3009
        %v3011 = vpop.f32.mrb[0].mxu0
        %3012 = vmatprep.mubr.f32.mxu0 0.0
        %3013 = vmatmul.mubr.f32.gmra.mrb[0].mxu0 %v2827
        %v3014 = vpop.f32.mrb[0].mxu0
        %v3015 = vadd.f32 0.0, %v3014
        %v3016 = vpop.f32.mrb[0].mxu0
        %3017 = vmatprep.mubr.f32.mxu0 0.0
        %3018 = vmatmul.mubr.f32.gmra.mrb[0].mxu0 %v2829
        %v3019 = vpop.f32.mrb[0].mxu0
        %v3020 = vadd.f32 0.0, %v3019
        %v3021 = vpop.f32.mrb[0].mxu0
        %3022 = vmatprep.mubr.f32.mxu0 0.0
        %3023 = vmatmul.mubr.f32.gmra.mrb[0].mxu0 %v2831
        %v3024 = vpop.f32.mrb[0].mxu0
        %v3025 = vadd.f32 0.0, %v3024
        %v3026 = vpop.f32.mrb[0].mxu0
        %3027 = vmatprep.mubr.f32.mxu0 0.0
        %3028 = vmatmul.mubr.f32.gmra.mrb[0].mxu0 %v2833
        %v3029 = vpop.f32.mrb[0].mxu0
        %v3030 = vadd.f32 0.0, %v3029
        %v3031 = vpop.f32.mrb[0].mxu0
        %3032 = vmatprep.mubr.f32.mxu0 0.0
        %3033 = vmatmul.mubr.f32.gmra.mrb[0].mxu0 %v2835
        %v3034 = vpop.f32.mrb[0].mxu0
        %v3035 = vadd.f32 0.0, %v3034
        %v3036 = vpop.f32.mrb[0].mxu0
        %3037 = vmatprep.mubr.f32.mxu0 0.0
        %3038 = vmatmul.mubr.f32.gmra.mrb[0].mxu0 %v2837
        %v3039 = vpop.f32.mrb[0].mxu0
        %v3040 = vadd.f32 0.0, %v3039
        %v3041 = vpop.f32.mrb[0].mxu0
        %3042 = vmatprep.mubr.f32.mxu0 0.0
        %3043 = vmatmul.mubr.f32.gmra.mrb[0].mxu0 %v2839
        %v3044 = vpop.f32.mrb[0].mxu0
        %v3045 = vadd.f32 0.0, %v3044
        %v3046 = vpop.f32.mrb[0].mxu0
        %3047 = vmatprep.mubr.f32.mxu0 0.0
        %3048 = vmatmul.mubr.f32.gmra.mrb[0].mxu0 %v2841
        %v3049 = vpop.f32.mrb[0].mxu0
        %v3050 = vadd.f32 0.0, %v3049
        %v3051 = vpop.f32.mrb[0].mxu0
        %3052 = vmatprep.mubr.f32.mxu0 0.0
        %3053 = vmatmul.mubr.f32.gmra.mrb[0].mxu0 %v2843
        %v3054 = vpop.f32.mrb[0].mxu0
        %v3055 = vadd.f32 0.0, %v3054
        %v3056 = vpop.f32.mrb[0].mxu0
        %3057 = vmatprep.mubr.f32.mxu0 0.0
        %3058 = vmatmul.mubr.f32.gmra.mrb[0].mxu0 %v2845
        %v3059 = vpop.f32.mrb[0].mxu0
        %v3060 = vadd.f32 0.0, %v3059
        %v3061 = vpop.f32.mrb[0].mxu0
        %3062 = vmatprep.mubr.f32.mxu0 0.0
        %3063 = vmatmul.mubr.f32.gmra.mrb[0].mxu0 %v2847
        %v3064 = vpop.f32.mrb[0].mxu0
        %v3065 = vadd.f32 0.0, %v3064
        %v3066 = vpop.f32.mrb[0].mxu0
        %3067 = vmatprep.mubr.f32.mxu0 0.0
        %3068 = vmatmul.mubr.f32.gmra.mrb[0].mxu0 %v2849
        %v3069 = vpop.f32.mrb[0].mxu0
        %v3070 = vadd.f32 0.0, %v3069
        %v3071 = vpop.f32.mrb[0].mxu0
        %3072 = vmatprep.mubr.f32.mxu0 0.0
        %3073 = vmatmul.mubr.f32.gmra.mrb[0].mxu0 %v2851
        %v3074 = vpop.f32.mrb[0].mxu0
        %v3075 = vadd.f32 0.0, %v3074
        %v3076 = vpop.f32.mrb[0].mxu0
        %3077 = vmatprep.mubr.f32.mxu0 0.0
        %3078 = vmatmul.mubr.f32.gmra.mrb[0].mxu0 %v2853
        %v3079 = vpop.f32.mrb[0].mxu0
        %v3080 = vadd.f32 0.0, %v3079
        %v3081 = vpop.f32.mrb[0].mxu0
        %3082 = vdwg.mxu0
        %v3083 = vadd.f32 %v2691, %v2925
        %v3084 = vadd.f32 %v2692, %v2930
        %v3085 = vadd.f32 %v2693, %v2935
        %v3086 = vadd.f32 %v2694, %v2940
        %v3087 = vadd.f32 %v2695, %v2945
        %v3088 = vadd.f32 %v2696, %v2950
        %v3089 = vadd.f32 %v2697, %v2955
        %v3090 = vadd.f32 %v2698, %v2960
        %v3091 = vadd.f32 %v2699, %v2965
        %v3092 = vadd.f32 %v2700, %v2970
        %v3093 = vadd.f32 %v2701, %v2975
        %v3094 = vadd.f32 %v2702, %v2980
        %v3095 = vadd.f32 %v2703, %v2985
        %v3096 = vadd.f32 %v2704, %v2990
        %v3097 = vadd.f32 %v2705, %v2995
        %v3098 = vadd.f32 %v2706, %v3000
        %v3099 = vadd.f32 %v2707, %v3005
        %v3100 = vadd.f32 %v2708, %v3010
        %v3101 = vadd.f32 %v2709, %v3015
        %v3102 = vadd.f32 %v2710, %v3020
        %v3103 = vadd.f32 %v2711, %v3025
        %v3104 = vadd.f32 %v2712, %v3030
        %v3105 = vadd.f32 %v2713, %v3035
        %v3106 = vadd.f32 %v2714, %v3040
        %v3107 = vadd.f32 %v2715, %v3045
        %v3108 = vadd.f32 %v2716, %v3050
        %v3109 = vadd.f32 %v2717, %v3055
        %v3110 = vadd.f32 %v2718, %v3060
        %v3111 = vadd.f32 %v2719, %v3065
        %v3112 = vadd.f32 %v2720, %v3070
        %v3113 = vadd.f32 %v2721, %v3075
        %v3114 = vadd.f32 %v2722, %v3080
        %s3115 = scalar_lea.vmem [#allocation5], 32
        %v3116 = vld [vmem:[%s3115] sm:$0xf]
        %vm3117 = vcmask 1041408
        %v3118 = vrot.slane %v283, 6
        %v3119 = vrot.slane %v284, 6
        %v3120 = vsel %vm3117, %v3118, %v3119
        %v3121 = vrot.slane %v285, 6
        %v3122 = vsel %vm3117, %v3119, %v3121
        %v3123 = vrot.slane %v286, 6
        %v3124 = vsel %vm3117, %v3121, %v3123
        %v3125 = vrot.slane %v287, 6
        %v3126 = vsel %vm3117, %v3123, %v3125
        %v3127 = vrot.slane %v288, 6
        %v3128 = vsel %vm3117, %v3125, %v3127
        %v3129 = vrot.slane %v289, 6
        %v3130 = vsel %vm3117, %v3127, %v3129
        %v3131 = vrot.slane %v290, 6
        %v3132 = vsel %vm3117, %v3129, %v3131
        %v3133 = vrot.slane %v291, 6
        %v3134 = vsel %vm3117, %v3131, %v3133
        %v3135 = vrot.slane %v292, 6
        %v3136 = vsel %vm3117, %v3133, %v3135
        %v3137 = vrot.slane %v293, 6
        %v3138 = vsel %vm3117, %v3135, %v3137
        %v3139 = vrot.slane %v294, 6
        %v3140 = vsel %vm3117, %v3137, %v3139
        %v3141 = vrot.slane %v295, 6
        %v3142 = vsel %vm3117, %v3139, %v3141
        %v3143 = vrot.slane %v296, 6
        %v3144 = vsel %vm3117, %v3141, %v3143
        %v3145 = vrot.slane %v297, 6
        %v3146 = vsel %vm3117, %v3143, %v3145
        %v3147 = vrot.slane %v298, 6
        %v3148 = vsel %vm3117, %v3145, %v3147
        %v3149 = vrot.slane %v299, 6
        %v3150 = vsel %vm3117, %v3147, %v3149
        %v3151 = vrot.slane %v300, 6
        %v3152 = vsel %vm3117, %v3149, %v3151
        %v3153 = vrot.slane %v301, 6
        %v3154 = vsel %vm3117, %v3151, %v3153
        %v3155 = vrot.slane %v302, 6
        %v3156 = vsel %vm3117, %v3153, %v3155
        %v3157 = vrot.slane %v303, 6
        %v3158 = vsel %vm3117, %v3155, %v3157
        %v3159 = vrot.slane %v304, 6
        %v3160 = vsel %vm3117, %v3157, %v3159
        %v3161 = vrot.slane %v305, 6
        %v3162 = vsel %vm3117, %v3159, %v3161
        %v3163 = vrot.slane %v306, 6
        %v3164 = vsel %vm3117, %v3161, %v3163
        %v3165 = vrot.slane %v307, 6
        %v3166 = vsel %vm3117, %v3163, %v3165
        %v3167 = vrot.slane %v308, 6
        %v3168 = vsel %vm3117, %v3165, %v3167
        %v3169 = vrot.slane %v309, 6
        %v3170 = vsel %vm3117, %v3167, %v3169
        %v3171 = vrot.slane %v310, 6
        %v3172 = vsel %vm3117, %v3169, %v3171
        %v3173 = vrot.slane %v311, 6
        %v3174 = vsel %vm3117, %v3171, %v3173
        %v3175 = vrot.slane %v312, 6
        %v3176 = vsel %vm3117, %v3173, %v3175
        %v3177 = vrot.slane %v313, 6
        %v3178 = vsel %vm3117, %v3175, %v3177
        %v3179 = vrot.slane %v314, 6
        %v3180 = vsel %vm3117, %v3177, %v3179
        %v3181 = vrot.slane %v315, 6
        %v3182 = vsel %vm3117, %v3179, %v3181
        %v3183 = vsel %vm418, %v3120, 0
        %v3185 = vsel %vm418, %v3122, 0
        %v3187 = vsel %vm418, %v3124, 0
        %v3189 = vsel %vm418, %v3126, 0
        %v3191 = vsel %vm418, %v3128, 0
        %v3193 = vsel %vm418, %v3130, 0
        %v3195 = vsel %vm418, %v3132, 0
        %v3197 = vsel %vm418, %v3134, 0
        %v3199 = vsel %vm418, %v3136, 0
        %v3201 = vsel %vm418, %v3138, 0
        %v3203 = vsel %vm418, %v3140, 0
        %v3205 = vsel %vm418, %v3142, 0
        %v3207 = vsel %vm418, %v3144, 0
        %v3209 = vsel %vm418, %v3146, 0
        %v3211 = vsel %vm418, %v3148, 0
        %v3213 = vsel %vm418, %v3150, 0
        %v3215 = vsel %vm418, %v3152, 0
        %v3217 = vsel %vm418, %v3154, 0
        %v3219 = vsel %vm418, %v3156, 0
        %v3221 = vsel %vm418, %v3158, 0
        %v3223 = vsel %vm418, %v3160, 0
        %v3225 = vsel %vm418, %v3162, 0
        %v3227 = vsel %vm418, %v3164, 0
        %v3229 = vsel %vm418, %v3166, 0
        %v3231 = vsel %vm418, %v3168, 0
        %v3233 = vsel %vm418, %v3170, 0
        %v3235 = vsel %vm418, %v3172, 0
        %v3237 = vsel %vm418, %v3174, 0
        %v3239 = vsel %vm418, %v3176, 0
        %v3241 = vsel %vm418, %v3178, 0
        %v3243 = vsel %vm418, %v3180, 0
        %v3245 = vsel %vm418, %v3182, 0
        %v3248 = vsel %vm483, %v3116, 0
        %3250 = vmatprep.subr.mxu0 0.0
        %3251 = vmatpush1.msra.mxu0 %v3248
        %3252 = vmatprep.subr.mxu0 0.0
        %3253 = vmatpush1.msra.mxu0 0.0
        %3254 = vmatprep.subr.mxu0 0.0
        %3255 = vmatpush1.msra.mxu0 0.0
        %3256 = vmatprep.subr.mxu0 0.0
        %3257 = vmatpush1.msra.mxu0 0.0
        %3258 = vmatprep.subr.mxu0 0.0
        %3259 = vmatpush1.msra.mxu0 0.0
        %3260 = vmatprep.subr.mxu0 0.0
        %3261 = vmatpush1.msra.mxu0 0.0
        %3262 = vmatprep.subr.mxu0 0.0
        %3263 = vmatpush1.msra.mxu0 0.0
        %3264 = vmatprep.subr.mxu0 0.0
        %3265 = vmatpush1.msra.mxu0 0.0
        %3266 = vmatprep.subr.mxu0 0.0
        %3267 = vmatpush1.msra.mxu0 0.0
        %3268 = vmatprep.subr.mxu0 0.0
        %3269 = vmatpush1.msra.mxu0 0.0
        %3270 = vmatprep.subr.mxu0 0.0
        %3271 = vmatpush1.msra.mxu0 0.0
        %3272 = vmatprep.subr.mxu0 0.0
        %3273 = vmatpush1.msra.mxu0 0.0
        %3274 = vmatprep.subr.mxu0 0.0
        %3275 = vmatpush1.msra.mxu0 0.0
        %3276 = vmatprep.subr.mxu0 0.0
        %3277 = vmatpush1.msra.mxu0 0.0
        %3278 = vmatprep.subr.mxu0 0.0
        %3279 = vmatpush1.msra.mxu0 0.0
        %3280 = vmatprep.subr.mxu0 0.0
        %3281 = vmatpush1.msra.mxu0 0.0
        %3282 = vmatprep.subr.mxu0 0.0
        %3283 = vmatpush1.msra.mxu0 0.0
        %3284 = vmatprep.subr.mxu0 0.0
        %3285 = vmatpush1.msra.mxu0 0.0
        %3286 = vmatprep.subr.mxu0 0.0
        %3287 = vmatpush1.msra.mxu0 0.0
        %3288 = vmatprep.subr.mxu0 0.0
        %3289 = vmatpush1.msra.mxu0 0.0
        %3290 = vmatprep.subr.mxu0 0.0
        %3291 = vmatpush1.msra.mxu0 0.0
        %3292 = vmatprep.subr.mxu0 0.0
        %3293 = vmatpush1.msra.mxu0 0.0
        %3294 = vmatprep.subr.mxu0 0.0
        %3295 = vmatpush1.msra.mxu0 0.0
        %3296 = vmatprep.subr.mxu0 0.0
        %3297 = vmatpush1.msra.mxu0 0.0
        %3298 = vmatprep.subr.mxu0 0.0
        %3299 = vmatpush1.msra.mxu0 0.0
        %3300 = vmatprep.subr.mxu0 0.0
        %3301 = vmatpush1.msra.mxu0 0.0
        %3302 = vmatprep.subr.mxu0 0.0
        %3303 = vmatpush1.msra.mxu0 0.0
        %3304 = vmatprep.subr.mxu0 0.0
        %3305 = vmatpush1.msra.mxu0 0.0
        %3306 = vmatprep.subr.mxu0 0.0
        %3307 = vmatpush1.msra.mxu0 0.0
        %3308 = vmatprep.subr.mxu0 0.0
        %3309 = vmatpush1.msra.mxu0 0.0
        %3310 = vmatprep.subr.mxu0 0.0
        %3311 = vmatpush1.msra.mxu0 0.0
        %3312 = vmatprep.subr.mxu0 0.0
        %3313 = vmatpush1.msra.mxu0 0.0
        %3314 = vmatprep.mubr.f32.mxu0 0.0
        %3315 = vmatmul.mubr.f32.gmra.mrb[0].mxu0 %v3183
        %v3316 = vpop.f32.mrb[0].mxu0
        %v3317 = vadd.f32 0.0, %v3316
        %v3318 = vpop.f32.mrb[0].mxu0
        %3319 = vmatprep.mubr.f32.mxu0 0.0
        %3320 = vmatmul.mubr.f32.gmra.mrb[0].mxu0 %v3185
        %v3321 = vpop.f32.mrb[0].mxu0
        %v3322 = vadd.f32 0.0, %v3321
        %v3323 = vpop.f32.mrb[0].mxu0
        %3324 = vmatprep.mubr.f32.mxu0 0.0
        %3325 = vmatmul.mubr.f32.gmra.mrb[0].mxu0 %v3187
        %v3326 = vpop.f32.mrb[0].mxu0
        %v3327 = vadd.f32 0.0, %v3326
        %v3328 = vpop.f32.mrb[0].mxu0
        %3329 = vmatprep.mubr.f32.mxu0 0.0
        %3330 = vmatmul.mubr.f32.gmra.mrb[0].mxu0 %v3189
        %v3331 = vpop.f32.mrb[0].mxu0
        %v3332 = vadd.f32 0.0, %v3331
        %v3333 = vpop.f32.mrb[0].mxu0
        %3334 = vmatprep.mubr.f32.mxu0 0.0
        %3335 = vmatmul.mubr.f32.gmra.mrb[0].mxu0 %v3191
        %v3336 = vpop.f32.mrb[0].mxu0
        %v3337 = vadd.f32 0.0, %v3336
        %v3338 = vpop.f32.mrb[0].mxu0
        %3339 = vmatprep.mubr.f32.mxu0 0.0
        %3340 = vmatmul.mubr.f32.gmra.mrb[0].mxu0 %v3193
        %v3341 = vpop.f32.mrb[0].mxu0
        %v3342 = vadd.f32 0.0, %v3341
        %v3343 = vpop.f32.mrb[0].mxu0
        %3344 = vmatprep.mubr.f32.mxu0 0.0
        %3345 = vmatmul.mubr.f32.gmra.mrb[0].mxu0 %v3195
        %v3346 = vpop.f32.mrb[0].mxu0
        %v3347 = vadd.f32 0.0, %v3346
        %v3348 = vpop.f32.mrb[0].mxu0
        %3349 = vmatprep.mubr.f32.mxu0 0.0
        %3350 = vmatmul.mubr.f32.gmra.mrb[0].mxu0 %v3197
        %v3351 = vpop.f32.mrb[0].mxu0
        %v3352 = vadd.f32 0.0, %v3351
        %v3353 = vpop.f32.mrb[0].mxu0
        %3354 = vmatprep.mubr.f32.mxu0 0.0
        %3355 = vmatmul.mubr.f32.gmra.mrb[0].mxu0 %v3199
        %v3356 = vpop.f32.mrb[0].mxu0
        %v3357 = vadd.f32 0.0, %v3356
        %v3358 = vpop.f32.mrb[0].mxu0
        %3359 = vmatprep.mubr.f32.mxu0 0.0
        %3360 = vmatmul.mubr.f32.gmra.mrb[0].mxu0 %v3201
        %v3361 = vpop.f32.mrb[0].mxu0
        %v3362 = vadd.f32 0.0, %v3361
        %v3363 = vpop.f32.mrb[0].mxu0
        %3364 = vmatprep.mubr.f32.mxu0 0.0
        %3365 = vmatmul.mubr.f32.gmra.mrb[0].mxu0 %v3203
        %v3366 = vpop.f32.mrb[0].mxu0
        %v3367 = vadd.f32 0.0, %v3366
        %v3368 = vpop.f32.mrb[0].mxu0
        %3369 = vmatprep.mubr.f32.mxu0 0.0
        %3370 = vmatmul.mubr.f32.gmra.mrb[0].mxu0 %v3205
        %v3371 = vpop.f32.mrb[0].mxu0
        %v3372 = vadd.f32 0.0, %v3371
        %v3373 = vpop.f32.mrb[0].mxu0
        %3374 = vmatprep.mubr.f32.mxu0 0.0
        %3375 = vmatmul.mubr.f32.gmra.mrb[0].mxu0 %v3207
        %v3376 = vpop.f32.mrb[0].mxu0
        %v3377 = vadd.f32 0.0, %v3376
        %v3378 = vpop.f32.mrb[0].mxu0
        %3379 = vmatprep.mubr.f32.mxu0 0.0
        %3380 = vmatmul.mubr.f32.gmra.mrb[0].mxu0 %v3209
        %v3381 = vpop.f32.mrb[0].mxu0
        %v3382 = vadd.f32 0.0, %v3381
        %v3383 = vpop.f32.mrb[0].mxu0
        %3384 = vmatprep.mubr.f32.mxu0 0.0
        %3385 = vmatmul.mubr.f32.gmra.mrb[0].mxu0 %v3211
        %v3386 = vpop.f32.mrb[0].mxu0
        %v3387 = vadd.f32 0.0, %v3386
        %v3388 = vpop.f32.mrb[0].mxu0
        %3389 = vmatprep.mubr.f32.mxu0 0.0
        %3390 = vmatmul.mubr.f32.gmra.mrb[0].mxu0 %v3213
        %v3391 = vpop.f32.mrb[0].mxu0
        %v3392 = vadd.f32 0.0, %v3391
        %v3393 = vpop.f32.mrb[0].mxu0
        %3394 = vmatprep.mubr.f32.mxu0 0.0
        %3395 = vmatmul.mubr.f32.gmra.mrb[0].mxu0 %v3215
        %v3396 = vpop.f32.mrb[0].mxu0
        %v3397 = vadd.f32 0.0, %v3396
        %v3398 = vpop.f32.mrb[0].mxu0
        %3399 = vmatprep.mubr.f32.mxu0 0.0
        %3400 = vmatmul.mubr.f32.gmra.mrb[0].mxu0 %v3217
        %v3401 = vpop.f32.mrb[0].mxu0
        %v3402 = vadd.f32 0.0, %v3401
        %v3403 = vpop.f32.mrb[0].mxu0
        %3404 = vmatprep.mubr.f32.mxu0 0.0
        %3405 = vmatmul.mubr.f32.gmra.mrb[0].mxu0 %v3219
        %v3406 = vpop.f32.mrb[0].mxu0
        %v3407 = vadd.f32 0.0, %v3406
        %v3408 = vpop.f32.mrb[0].mxu0
        %3409 = vmatprep.mubr.f32.mxu0 0.0
        %3410 = vmatmul.mubr.f32.gmra.mrb[0].mxu0 %v3221
        %v3411 = vpop.f32.mrb[0].mxu0
        %v3412 = vadd.f32 0.0, %v3411
        %v3413 = vpop.f32.mrb[0].mxu0
        %3414 = vmatprep.mubr.f32.mxu0 0.0
        %3415 = vmatmul.mubr.f32.gmra.mrb[0].mxu0 %v3223
        %v3416 = vpop.f32.mrb[0].mxu0
        %v3417 = vadd.f32 0.0, %v3416
        %v3418 = vpop.f32.mrb[0].mxu0
        %3419 = vmatprep.mubr.f32.mxu0 0.0
        %3420 = vmatmul.mubr.f32.gmra.mrb[0].mxu0 %v3225
        %v3421 = vpop.f32.mrb[0].mxu0
        %v3422 = vadd.f32 0.0, %v3421
        %v3423 = vpop.f32.mrb[0].mxu0
        %3424 = vmatprep.mubr.f32.mxu0 0.0
        %3425 = vmatmul.mubr.f32.gmra.mrb[0].mxu0 %v3227
        %v3426 = vpop.f32.mrb[0].mxu0
        %v3427 = vadd.f32 0.0, %v3426
        %v3428 = vpop.f32.mrb[0].mxu0
        %3429 = vmatprep.mubr.f32.mxu0 0.0
        %3430 = vmatmul.mubr.f32.gmra.mrb[0].mxu0 %v3229
        %v3431 = vpop.f32.mrb[0].mxu0
        %v3432 = vadd.f32 0.0, %v3431
        %v3433 = vpop.f32.mrb[0].mxu0
        %3434 = vmatprep.mubr.f32.mxu0 0.0
        %3435 = vmatmul.mubr.f32.gmra.mrb[0].mxu0 %v3231
        %v3436 = vpop.f32.mrb[0].mxu0
        %v3437 = vadd.f32 0.0, %v3436
        %v3438 = vpop.f32.mrb[0].mxu0
        %3439 = vmatprep.mubr.f32.mxu0 0.0
        %3440 = vmatmul.mubr.f32.gmra.mrb[0].mxu0 %v3233
        %v3441 = vpop.f32.mrb[0].mxu0
        %v3442 = vadd.f32 0.0, %v3441
        %v3443 = vpop.f32.mrb[0].mxu0
        %3444 = vmatprep.mubr.f32.mxu0 0.0
        %3445 = vmatmul.mubr.f32.gmra.mrb[0].mxu0 %v3235
        %v3446 = vpop.f32.mrb[0].mxu0
        %v3447 = vadd.f32 0.0, %v3446
        %v3448 = vpop.f32.mrb[0].mxu0
        %3449 = vmatprep.mubr.f32.mxu0 0.0
        %3450 = vmatmul.mubr.f32.gmra.mrb[0].mxu0 %v3237
        %v3451 = vpop.f32.mrb[0].mxu0
        %v3452 = vadd.f32 0.0, %v3451
        %v3453 = vpop.f32.mrb[0].mxu0
        %3454 = vmatprep.mubr.f32.mxu0 0.0
        %3455 = vmatmul.mubr.f32.gmra.mrb[0].mxu0 %v3239
        %v3456 = vpop.f32.mrb[0].mxu0
        %v3457 = vadd.f32 0.0, %v3456
        %v3458 = vpop.f32.mrb[0].mxu0
        %3459 = vmatprep.mubr.f32.mxu0 0.0
        %3460 = vmatmul.mubr.f32.gmra.mrb[0].mxu0 %v3241
        %v3461 = vpop.f32.mrb[0].mxu0
        %v3462 = vadd.f32 0.0, %v3461
        %v3463 = vpop.f32.mrb[0].mxu0
        %3464 = vmatprep.mubr.f32.mxu0 0.0
        %3465 = vmatmul.mubr.f32.gmra.mrb[0].mxu0 %v3243
        %v3466 = vpop.f32.mrb[0].mxu0
        %v3467 = vadd.f32 0.0, %v3466
        %v3468 = vpop.f32.mrb[0].mxu0
        %3469 = vmatprep.mubr.f32.mxu0 0.0
        %3470 = vmatmul.mubr.f32.gmra.mrb[0].mxu0 %v3245
        %v3471 = vpop.f32.mrb[0].mxu0
        %v3472 = vadd.f32 0.0, %v3471
        %v3473 = vpop.f32.mrb[0].mxu0
        %3474 = vdwg.mxu0
        %v3475 = vadd.f32 %v3083, %v3317
        %v3476 = vadd.f32 %v3084, %v3322
        %v3477 = vadd.f32 %v3085, %v3327
        %v3478 = vadd.f32 %v3086, %v3332
        %v3479 = vadd.f32 %v3087, %v3337
        %v3480 = vadd.f32 %v3088, %v3342
        %v3481 = vadd.f32 %v3089, %v3347
        %v3482 = vadd.f32 %v3090, %v3352
        %v3483 = vadd.f32 %v3091, %v3357
        %v3484 = vadd.f32 %v3092, %v3362
        %v3485 = vadd.f32 %v3093, %v3367
        %v3486 = vadd.f32 %v3094, %v3372
        %v3487 = vadd.f32 %v3095, %v3377
        %v3488 = vadd.f32 %v3096, %v3382
        %v3489 = vadd.f32 %v3097, %v3387
        %v3490 = vadd.f32 %v3098, %v3392
        %v3491 = vadd.f32 %v3099, %v3397
        %v3492 = vadd.f32 %v3100, %v3402
        %v3493 = vadd.f32 %v3101, %v3407
        %v3494 = vadd.f32 %v3102, %v3412
        %v3495 = vadd.f32 %v3103, %v3417
        %v3496 = vadd.f32 %v3104, %v3422
        %v3497 = vadd.f32 %v3105, %v3427
        %v3498 = vadd.f32 %v3106, %v3432
        %v3499 = vadd.f32 %v3107, %v3437
        %v3500 = vadd.f32 %v3108, %v3442
        %v3501 = vadd.f32 %v3109, %v3447
        %v3502 = vadd.f32 %v3110, %v3452
        %v3503 = vadd.f32 %v3111, %v3457
        %v3504 = vadd.f32 %v3112, %v3462
        %v3505 = vadd.f32 %v3113, %v3467
        %v3506 = vadd.f32 %v3114, %v3472
        %3507 = vst [vmem:[%s271] sm:$0xff] %v3475
        %3508 = vst [vmem:[%s271 + $0x8] sm:$0xff] %v3476
        %3509 = vst [vmem:[%s271 + $0x10] sm:$0xff] %v3477
        %3510 = vst [vmem:[%s271 + $0x18] sm:$0xff] %v3478
        %3511 = vst [vmem:[%s271 + $0x20] sm:$0xff] %v3479
        %3512 = vst [vmem:[%s271 + $0x28] sm:$0xff] %v3480
        %3513 = vst [vmem:[%s271 + $0x30] sm:$0xff] %v3481
        %3514 = vst [vmem:[%s271 + $0x38] sm:$0xff] %v3482
        %3515 = vst [vmem:[%s271 + $0x40] sm:$0xff] %v3483
        %3516 = vst [vmem:[%s271 + $0x48] sm:$0xff] %v3484
        %3517 = vst [vmem:[%s271 + $0x50] sm:$0xff] %v3485
        %3518 = vst [vmem:[%s271 + $0x58] sm:$0xff] %v3486
        %3519 = vst [vmem:[%s271 + $0x60] sm:$0xff] %v3487
        %3520 = vst [vmem:[%s271 + $0x68] sm:$0xff] %v3488
        %3521 = vst [vmem:[%s271 + $0x70] sm:$0xff] %v3489
        %3522 = vst [vmem:[%s271 + $0x78] sm:$0xff] %v3490
        %3523 = vst [vmem:[%s271 + $0x80] sm:$0xff] %v3491
        %3524 = vst [vmem:[%s271 + $0x88] sm:$0xff] %v3492
        %3525 = vst [vmem:[%s271 + $0x90] sm:$0xff] %v3493
        %3526 = vst [vmem:[%s271 + $0x98] sm:$0xff] %v3494
        %3527 = vst [vmem:[%s271 + $0xa0] sm:$0xff] %v3495
        %3528 = vst [vmem:[%s271 + $0xa8] sm:$0xff] %v3496
        %3529 = vst [vmem:[%s271 + $0xb0] sm:$0xff] %v3497
        %3530 = vst [vmem:[%s271 + $0xb8] sm:$0xff] %v3498
        %3531 = vst [vmem:[%s271 + $0xc0] sm:$0xff] %v3499
        %3532 = vst [vmem:[%s271 + $0xc8] sm:$0xff] %v3500
        %3533 = vst [vmem:[%s271 + $0xd0] sm:$0xff] %v3501
        %3534 = vst [vmem:[%s271 + $0xd8] sm:$0xff] %v3502
        %3535 = vst [vmem:[%s271 + $0xe0] sm:$0xff] %v3503
        %3536 = vst [vmem:[%s271 + $0xe8] sm:$0xff] %v3504
        %3537 = vst [vmem:[%s271 + $0xf0] sm:$0xff] %v3505
        %3538 = vst [vmem:[%s271 + $0xf8] sm:$0xff] %v3506
        %v3539 = vld [vmem:[%s244] sm:$0xff]
        %v3540 = vld [vmem:[%s244 + $0x8] sm:$0xff]
        %v3541 = vld [vmem:[%s244 + $0x10] sm:$0xff]
        %v3542 = vld [vmem:[%s244 + $0x18] sm:$0xff]
        %v3543 = vld [vmem:[%s244 + $0x20] sm:$0xff]
        %v3544 = vld [vmem:[%s244 + $0x28] sm:$0xff]
        %v3545 = vld [vmem:[%s244 + $0x30] sm:$0xff]
        %v3546 = vld [vmem:[%s244 + $0x38] sm:$0xff]
        %v3547 = vld [vmem:[%s244 + $0x40] sm:$0xff]
        %v3548 = vld [vmem:[%s244 + $0x48] sm:$0xff]
        %v3549 = vld [vmem:[%s244 + $0x50] sm:$0xff]
        %v3550 = vld [vmem:[%s244 + $0x58] sm:$0xff]
        %v3551 = vld [vmem:[%s244 + $0x60] sm:$0xff]
        %v3552 = vld [vmem:[%s244 + $0x68] sm:$0xff]
        %v3553 = vld [vmem:[%s244 + $0x70] sm:$0xff]
        %v3554 = vld [vmem:[%s244 + $0x78] sm:$0xff]
        %v3555 = vld [vmem:[%s244 + $0x80] sm:$0xff]
        %v3556 = vld [vmem:[%s244 + $0x88] sm:$0xff]
        %v3557 = vld [vmem:[%s244 + $0x90] sm:$0xff]
        %v3558 = vld [vmem:[%s244 + $0x98] sm:$0xff]
        %v3559 = vld [vmem:[%s244 + $0xa0] sm:$0xff]
        %v3560 = vld [vmem:[%s244 + $0xa8] sm:$0xff]
        %v3561 = vld [vmem:[%s244 + $0xb0] sm:$0xff]
        %v3562 = vld [vmem:[%s244 + $0xb8] sm:$0xff]
        %v3563 = vld [vmem:[%s244 + $0xc0] sm:$0xff]
        %v3564 = vld [vmem:[%s244 + $0xc8] sm:$0xff]
        %v3565 = vld [vmem:[%s244 + $0xd0] sm:$0xff]
        %v3566 = vld [vmem:[%s244 + $0xd8] sm:$0xff]
        %v3567 = vld [vmem:[%s244 + $0xe0] sm:$0xff]
        %v3568 = vld [vmem:[%s244 + $0xe8] sm:$0xff]
        %v3569 = vld [vmem:[%s244 + $0xf0] sm:$0xff]
        %v3570 = vld [vmem:[%s244 + $0xf8] sm:$0xff]
        %3572 = vset.pattern.permute.xlu0 0
        %3573 = vperm.xlu0 %3572, %v3539
        %v3574 = vpop.permute.xlu0 %3573
        %3577 = vset.pattern.permute.xlu0 0
        %3578 = vperm.xlu0 %3577, %v3540
        %v3579 = vpop.permute.xlu0 %3578
        %3582 = vset.pattern.permute.xlu0 0
        %3583 = vperm.xlu0 %3582, %v3541
        %v3584 = vpop.permute.xlu0 %3583
        %3587 = vset.pattern.permute.xlu0 0
        %3588 = vperm.xlu0 %3587, %v3542
        %v3589 = vpop.permute.xlu0 %3588
        %3592 = vset.pattern.permute.xlu0 0
        %3593 = vperm.xlu0 %3592, %v3543
        %v3594 = vpop.permute.xlu0 %3593
        %3597 = vset.pattern.permute.xlu0 0
        %3598 = vperm.xlu0 %3597, %v3544
        %v3599 = vpop.permute.xlu0 %3598
        %3602 = vset.pattern.permute.xlu0 0
        %3603 = vperm.xlu0 %3602, %v3545
        %v3604 = vpop.permute.xlu0 %3603
        %3607 = vset.pattern.permute.xlu0 0
        %3608 = vperm.xlu0 %3607, %v3546
        %v3609 = vpop.permute.xlu0 %3608
        %3612 = vset.pattern.permute.xlu0 0
        %3613 = vperm.xlu0 %3612, %v3547
        %v3614 = vpop.permute.xlu0 %3613
        %3617 = vset.pattern.permute.xlu0 0
        %3618 = vperm.xlu0 %3617, %v3548
        %v3619 = vpop.permute.xlu0 %3618
        %3622 = vset.pattern.permute.xlu0 0
        %3623 = vperm.xlu0 %3622, %v3549
        %v3624 = vpop.permute.xlu0 %3623
        %3627 = vset.pattern.permute.xlu0 0
        %3628 = vperm.xlu0 %3627, %v3550
        %v3629 = vpop.permute.xlu0 %3628
        %3632 = vset.pattern.permute.xlu0 0
        %3633 = vperm.xlu0 %3632, %v3551
        %v3634 = vpop.permute.xlu0 %3633
        %3637 = vset.pattern.permute.xlu0 0
        %3638 = vperm.xlu0 %3637, %v3552
        %v3639 = vpop.permute.xlu0 %3638
        %3642 = vset.pattern.permute.xlu0 0
        %3643 = vperm.xlu0 %3642, %v3553
        %v3644 = vpop.permute.xlu0 %3643
        %3647 = vset.pattern.permute.xlu0 0
        %3648 = vperm.xlu0 %3647, %v3554
        %v3649 = vpop.permute.xlu0 %3648
        %3652 = vset.pattern.permute.xlu0 0
        %3653 = vperm.xlu0 %3652, %v3555
        %v3654 = vpop.permute.xlu0 %3653
        %3657 = vset.pattern.permute.xlu0 0
        %3658 = vperm.xlu0 %3657, %v3556
        %v3659 = vpop.permute.xlu0 %3658
        %3662 = vset.pattern.permute.xlu0 0
        %3663 = vperm.xlu0 %3662, %v3557
        %v3664 = vpop.permute.xlu0 %3663
        %3667 = vset.pattern.permute.xlu0 0
        %3668 = vperm.xlu0 %3667, %v3558
        %v3669 = vpop.permute.xlu0 %3668
        %3672 = vset.pattern.permute.xlu0 0
        %3673 = vperm.xlu0 %3672, %v3559
        %v3674 = vpop.permute.xlu0 %3673
        %3677 = vset.pattern.permute.xlu0 0
        %3678 = vperm.xlu0 %3677, %v3560
        %v3679 = vpop.permute.xlu0 %3678
        %3682 = vset.pattern.permute.xlu0 0
        %3683 = vperm.xlu0 %3682, %v3561
        %v3684 = vpop.permute.xlu0 %3683
        %3687 = vset.pattern.permute.xlu0 0
        %3688 = vperm.xlu0 %3687, %v3562
        %v3689 = vpop.permute.xlu0 %3688
        %3692 = vset.pattern.permute.xlu0 0
        %3693 = vperm.xlu0 %3692, %v3563
        %v3694 = vpop.permute.xlu0 %3693
        %3697 = vset.pattern.permute.xlu0 0
        %3698 = vperm.xlu0 %3697, %v3564
        %v3699 = vpop.permute.xlu0 %3698
        %3702 = vset.pattern.permute.xlu0 0
        %3703 = vperm.xlu0 %3702, %v3565
        %v3704 = vpop.permute.xlu0 %3703
        %3707 = vset.pattern.permute.xlu0 0
        %3708 = vperm.xlu0 %3707, %v3566
        %v3709 = vpop.permute.xlu0 %3708
        %3712 = vset.pattern.permute.xlu0 0
        %3713 = vperm.xlu0 %3712, %v3567
        %v3714 = vpop.permute.xlu0 %3713
        %3717 = vset.pattern.permute.xlu0 0
        %3718 = vperm.xlu0 %3717, %v3568
        %v3719 = vpop.permute.xlu0 %3718
        %3722 = vset.pattern.permute.xlu0 0
        %3723 = vperm.xlu0 %3722, %v3569
        %v3724 = vpop.permute.xlu0 %3723
        %3727 = vset.pattern.permute.xlu0 0
        %3728 = vperm.xlu0 %3727, %v3570
        %v3729 = vpop.permute.xlu0 %3728
        %v3731 = vmul.f32 %v3475, %v3574
        %v3732 = vmul.f32 %v3476, %v3579
        %v3733 = vmul.f32 %v3477, %v3584
        %v3734 = vmul.f32 %v3478, %v3589
        %v3735 = vmul.f32 %v3479, %v3594
        %v3736 = vmul.f32 %v3480, %v3599
        %v3737 = vmul.f32 %v3481, %v3604
        %v3738 = vmul.f32 %v3482, %v3609
        %v3739 = vmul.f32 %v3483, %v3614
        %v3740 = vmul.f32 %v3484, %v3619
        %v3741 = vmul.f32 %v3485, %v3624
        %v3742 = vmul.f32 %v3486, %v3629
        %v3743 = vmul.f32 %v3487, %v3634
        %v3744 = vmul.f32 %v3488, %v3639
        %v3745 = vmul.f32 %v3489, %v3644
        %v3746 = vmul.f32 %v3490, %v3649
        %v3747 = vmul.f32 %v3491, %v3654
        %v3748 = vmul.f32 %v3492, %v3659
        %v3749 = vmul.f32 %v3493, %v3664
        %v3750 = vmul.f32 %v3494, %v3669
        %v3751 = vmul.f32 %v3495, %v3674
        %v3752 = vmul.f32 %v3496, %v3679
        %v3753 = vmul.f32 %v3497, %v3684
        %v3754 = vmul.f32 %v3498, %v3689
        %v3755 = vmul.f32 %v3499, %v3694
        %v3756 = vmul.f32 %v3500, %v3699
        %v3757 = vmul.f32 %v3501, %v3704
        %v3758 = vmul.f32 %v3502, %v3709
        %v3759 = vmul.f32 %v3503, %v3714
        %v3760 = vmul.f32 %v3504, %v3719
        %v3761 = vmul.f32 %v3505, %v3724
        %v3762 = vmul.f32 %v3506, %v3729
        %v3763 = vadd.f32 %v3731, %v3732
        %v3764 = vadd.f32 %v3763, %v3733
        %v3765 = vadd.f32 %v3764, %v3734
        %v3766 = vadd.f32 %v3765, %v3735
        %v3767 = vadd.f32 %v3766, %v3736
        %v3768 = vadd.f32 %v3767, %v3737
        %v3769 = vadd.f32 %v3768, %v3738
        %v3770 = vadd.f32 %v3769, %v3739
        %v3771 = vadd.f32 %v3770, %v3740
        %v3772 = vadd.f32 %v3771, %v3741
        %v3773 = vadd.f32 %v3772, %v3742
        %v3774 = vadd.f32 %v3773, %v3743
        %v3775 = vadd.f32 %v3774, %v3744
        %v3776 = vadd.f32 %v3775, %v3745
        %v3777 = vadd.f32 %v3776, %v3746
        %v3778 = vadd.f32 %v3777, %v3747
        %v3779 = vadd.f32 %v3778, %v3748
        %v3780 = vadd.f32 %v3779, %v3749
        %v3781 = vadd.f32 %v3780, %v3750
        %v3782 = vadd.f32 %v3781, %v3751
        %v3783 = vadd.f32 %v3782, %v3752
        %v3784 = vadd.f32 %v3783, %v3753
        %v3785 = vadd.f32 %v3784, %v3754
        %v3786 = vadd.f32 %v3785, %v3755
        %v3787 = vadd.f32 %v3786, %v3756
        %v3788 = vadd.f32 %v3787, %v3757
        %v3789 = vadd.f32 %v3788, %v3758
        %v3790 = vadd.f32 %v3789, %v3759
        %v3791 = vadd.f32 %v3790, %v3760
        %v3792 = vadd.f32 %v3791, %v3761
        %v3793 = vadd.f32 %v3792, %v3762
        %v3794 = vrot.slane %v3793, 4
        %v3795 = vadd.f32 %v3793, %v3794
        %v3796 = vrot.slane %v3795, 2
        %v3797 = vadd.f32 %v3795, %v3796
        %v3798 = vrot.slane %v3797, 1
        %v3799 = vadd.f32 %v3797, %v3798
        %v3800 = vmul.f32 %v3731, %v3475
        %v3801 = vmul.f32 %v3732, %v3476
        %v3802 = vmul.f32 %v3733, %v3477
        %v3803 = vmul.f32 %v3734, %v3478
        %v3804 = vmul.f32 %v3735, %v3479
        %v3805 = vmul.f32 %v3736, %v3480
        %v3806 = vmul.f32 %v3737, %v3481
        %v3807 = vmul.f32 %v3738, %v3482
        %v3808 = vmul.f32 %v3739, %v3483
        %v3809 = vmul.f32 %v3740, %v3484
        %v3810 = vmul.f32 %v3741, %v3485
        %v3811 = vmul.f32 %v3742, %v3486
        %v3812 = vmul.f32 %v3743, %v3487
        %v3813 = vmul.f32 %v3744, %v3488
        %v3814 = vmul.f32 %v3745, %v3489
        %v3815 = vmul.f32 %v3746, %v3490
        %v3816 = vmul.f32 %v3747, %v3491
        %v3817 = vmul.f32 %v3748, %v3492
        %v3818 = vmul.f32 %v3749, %v3493
        %v3819 = vmul.f32 %v3750, %v3494
        %v3820 = vmul.f32 %v3751, %v3495
        %v3821 = vmul.f32 %v3752, %v3496
        %v3822 = vmul.f32 %v3753, %v3497
        %v3823 = vmul.f32 %v3754, %v3498
        %v3824 = vmul.f32 %v3755, %v3499
        %v3825 = vmul.f32 %v3756, %v3500
        %v3826 = vmul.f32 %v3757, %v3501
        %v3827 = vmul.f32 %v3758, %v3502
        %v3828 = vmul.f32 %v3759, %v3503
        %v3829 = vmul.f32 %v3760, %v3504
        %v3830 = vmul.f32 %v3761, %v3505
        %v3831 = vmul.f32 %v3762, %v3506
        %v3832 = vadd.f32 %v3800, %v3801
        %v3833 = vadd.f32 %v3832, %v3802
        %v3834 = vadd.f32 %v3833, %v3803
        %v3835 = vadd.f32 %v3834, %v3804
        %v3836 = vadd.f32 %v3835, %v3805
        %v3837 = vadd.f32 %v3836, %v3806
        %v3838 = vadd.f32 %v3837, %v3807
        %v3839 = vadd.f32 %v3838, %v3808
        %v3840 = vadd.f32 %v3839, %v3809
        %v3841 = vadd.f32 %v3840, %v3810
        %v3842 = vadd.f32 %v3841, %v3811
        %v3843 = vadd.f32 %v3842, %v3812
        %v3844 = vadd.f32 %v3843, %v3813
        %v3845 = vadd.f32 %v3844, %v3814
        %v3846 = vadd.f32 %v3845, %v3815
        %v3847 = vadd.f32 %v3846, %v3816
        %v3848 = vadd.f32 %v3847, %v3817
        %v3849 = vadd.f32 %v3848, %v3818
        %v3850 = vadd.f32 %v3849, %v3819
        %v3851 = vadd.f32 %v3850, %v3820
        %v3852 = vadd.f32 %v3851, %v3821
        %v3853 = vadd.f32 %v3852, %v3822
        %v3854 = vadd.f32 %v3853, %v3823
        %v3855 = vadd.f32 %v3854, %v3824
        %v3856 = vadd.f32 %v3855, %v3825
        %v3857 = vadd.f32 %v3856, %v3826
        %v3858 = vadd.f32 %v3857, %v3827
        %v3859 = vadd.f32 %v3858, %v3828
        %v3860 = vadd.f32 %v3859, %v3829
        %v3861 = vadd.f32 %v3860, %v3830
        %v3862 = vadd.f32 %v3861, %v3831
        %v3863 = vrot.slane %v3862, 4
        %v3864 = vadd.f32 %v3862, %v3863
        %v3865 = vrot.slane %v3864, 2
        %v3866 = vadd.f32 %v3864, %v3865
        %v3867 = vrot.slane %v3866, 1
        %v3868 = vadd.f32 %v3866, %v3867
        %vm3869 = vcmask 1040384
        %v3870 = vsel %vm3869, %v3799, %v3868
        %3871 = vst [vmem:[%s278] sm:$0x3] %v3870
        %s3872 = sand.u32 %s107, 1
        %s3873 = scalar_lea.sflag [#allocation4], %s3872
        %s3874 = sand.u32 %s107, 1
        %s3875 = smul.addr %s3874, 256
        %s3876 = scalar_lea.vmem [#allocation8], %s3875
        %s3877 = sand.u32 %s133, 1
        %s3878 = scalar_lea.sflag [#allocation10], %s3877
        %s3879 = sand.u32 %s133, 1
        %s3880 = smul.addr %s3879, 2
        %s3881 = scalar_lea.vmem [#allocation9], %s3880
        // Predicated region
        $region45: #{tpu_custom_call.1} parent=31 // pred_check
          %p3882 = pneg %p117
        $region46: #{tpu_custom_call.1} parent=31 // pred_check_branch
          %3884 = sbr.rel (%p3882) target = $region48
        $region47: #{tpu_custom_call.1} parent=31 // pred_region
          %s3886 = ssub.s32 4096, 4096
          %3887 = vsyncadd %s3873, %s3886
          %s3888 = smul.addr %s26, 32
          %s3889 = smul.addr %s3888, 128
          %s3890 = scalar_lea.hbm %s3, %s3889
          %s3891 = sshll.u32 %s3876, 4
          %s3892 = int_to_ptr.vmem [resolvable:$true] %s3891
          %3897 = dma.vmem_to_hbm [thread:$0]  %s3892, 4096, %s3890, %s3873, 128, 128, 8
        $region48: #{tpu_custom_call.1} parent=31 // pred_fallthru
          _
        // Predicated region
        $region49: #{tpu_custom_call.1} parent=31 // pred_check
          %p3898 = pneg %p143
        $region50: #{tpu_custom_call.1} parent=31 // pred_check_branch
          %3900 = sbr.rel (%p3898) target = $region52
        $region51: #{tpu_custom_call.1} parent=31 // pred_region
          %s3902 = ssub.s32 32, 32
          %3903 = vsyncadd %s3878, %s3902
          %s3904 = smul.addr %s26, 32
          %s3905 = scalar_lea.hbm %s4, %s3904
          %s3907 = sshll.u32 %s3881, 4
          %s3908 = int_to_ptr.vmem [resolvable:$true] %s3907
          %3910 = dma.vmem_to_hbm [thread:$0]  %s3908, 32, %s3905, %s3878
        $region52: #{tpu_custom_call.1} parent=31 // pred_fallthru
          _
      $region32: #{tpu_custom_call.1} parent=5 // pred_fallthru
        _
      %p3911 = scmp.le.s32.totalorder 2, %s21
      // Predicated region
      $region53: #{tpu_custom_call.1} parent=5 // pred_check
        %p3912 = pneg %p3911
      $region54: #{tpu_custom_call.1} parent=5 // pred_check_branch
        %3914 = sbr.rel (%p3912) target = $region56
      $region55: #{tpu_custom_call.1} parent=5 // pred_region
        %s3915 = ssub.s32 %s21, 2
        // Predicated region
        $region57: #{tpu_custom_call.1} parent=55 // pred_check
          %p3916 = pneg %p123
        $region58: #{tpu_custom_call.1} parent=55 // pred_check_branch
          %3918 = sbr.rel (%p3916) target = $region60
        $region59: #{tpu_custom_call.1} parent=55 // pred_region
          %s3919 = sand.u32 %s108, 1
          %s3920 = scalar_lea.sflag [#allocation4], %s3919
          %s3921 = sand.u32 %s108, 1
          %s3922 = smul.addr %s3921, 256
          %s3923 = scalar_lea.vmem [#allocation8], %s3922
          %3924 = dma.done %s3920, 4096
        $region60: #{tpu_custom_call.1} parent=55 // pred_fallthru
          _
        // Predicated region
        $region61: #{tpu_custom_call.1} parent=55 // pred_check
          %p3925 = pneg %p149
        $region62: #{tpu_custom_call.1} parent=55 // pred_check_branch
          %3927 = sbr.rel (%p3925) target = $region64
        $region63: #{tpu_custom_call.1} parent=55 // pred_region
          %s3928 = sand.u32 %s134, 1
          %s3929 = scalar_lea.sflag [#allocation10], %s3928
          %s3930 = sand.u32 %s134, 1
          %s3931 = smul.addr %s3930, 2
          %s3932 = scalar_lea.vmem [#allocation9], %s3931
          %3933 = dma.done %s3929, 32
        $region64: #{tpu_custom_call.1} parent=55 // pred_fallthru
          _
      $region56: #{tpu_custom_call.1} parent=5 // pred_fallthru
        _
    $region6: #{tpu_custom_call.1} parent=1 // loop_footer
      %s25 = sadd.s32 1, %s21
    $region7: #{tpu_custom_call.1} parent=1 // loop_footer_branch
      %20 = sbr.rel target = $region3
    $region8: #{tpu_custom_call.1} parent=1 // loop_exit
      _
    %3934 = vsyncpa [#allocation3], 1
    %s3935 = scalar_lea.sflag [#allocation3], 1
    %3936 = vsyncpa %s3935, 1
    %3937 = vsyncpa [#allocation6], 1
    %3938 = vsyncpa [#allocation4], 1
    %s3939 = scalar_lea.sflag [#allocation4], 1
    %3940 = vsyncpa %s3939, 1
    %3941 = vsyncpa [#allocation10], 1
    %s3942 = scalar_lea.sflag [#allocation10], 1
    %3943 = vsyncpa %s3942, 1

</llo_original>
